<compile_context>
chip_gen: v6e
topology: v6e:2x2x1
jax: 0.10.0
libtpu: 0.0.40
codegen_flags: <defaults>
</compile_context>

<pallas_src>
import math

import jax
import jax.numpy as jnp
from jax.experimental import pallas as pl
from jax.experimental.pallas import tpu as pltpu

# ---- small, module-consistent sizes -----------------------------------------
B, L = 2, 8               # batch, sequence length
H = 32                    # "bert_hidden_size" (synthetic small BERT)
NH, HD = 2, H // 2        # attention heads / head dim
FF = 4 * H                # FFN intermediate
NLAYERS = 2               # synthetic BERT encoder depth
VOCAB = 100
LSTM_H = 16               # nn.LSTM hidden_size (small stand-in for 256)
NUM_LABELS = 5
NPAD = 128                # lane-dense padded logits width
LN_EPS = 1e-12


# ---- in-kernel helpers -------------------------------------------------------
def _layernorm(x, g, b):
    mu = jnp.mean(x, axis=-1, keepdims=True)
    var = jnp.mean((x - mu) ** 2, axis=-1, keepdims=True)
    return (x - mu) * jax.lax.rsqrt(var + LN_EPS) * g + b


def _gelu(x):
    # tanh-approx GELU (keeps the transcendental on the EUP)
    return 0.5 * x * (1.0 + jnp.tanh(0.7978845608028654 * (x + 0.044715 * x * x * x)))


# ---- single fused kernel ------------------------------------------------------
def fused_forward_kernel(emb_ref, mask_ref, emb_ln_ref,
                         w_qkv_ref, b_qkv_ref, wo_ref, w1_ref, b1_ref, w2_ref, vecs_ref,
                         w_ih_ref, b_ih_ref, wc_ref, bc_ref,
                         o_ref):
    # ---- embedding LayerNorm ----
    eln = emb_ln_ref[...]                                   # [2, H] rows: gamma, beta
    x = _layernorm(emb_ref[...], eln[0:1, :], eln[1:2, :])  # [B, L, H]

    # additive attention mask (HF-style -10000), computed in-kernel
    add_mask = ((1.0 - mask_ref[...]) * -10000.0)[:, None, :]   # [B, 1, L]

    scale = 1.0 / math.sqrt(HD)

    # ---- BERT encoder layers (statically unrolled; weights are stacked per layer) ----
    for lyr in range(NLAYERS):
        w_qkv = w_qkv_ref[lyr]       # [H, 3H]
        b_qkv = b_qkv_ref[lyr]       # [1, 3H]
        wo = wo_ref[lyr]             # [H, H]
        w1 = w1_ref[lyr]             # [H, FF]
        b1 = b1_ref[lyr]             # [1, FF]
        w2 = w2_ref[lyr]             # [FF, H]
        vecs = vecs_ref[lyr]         # [6, H] rows: b_o, ln1g, ln1b, b2, ln2g, ln2b

        x2 = x.reshape(B * L, H)
        # fused QKV projection: one MXU matmul + one bias add
        qkv = (jnp.dot(x2, w_qkv, preferred_element_type=jnp.float32)
               + b_qkv).reshape(B, L, 3 * H)

        # per-head attention, output projection folded per head (no lane concat)
        attn = jnp.zeros((B * L, H), jnp.float32)
        for h in range(NH):
            q_h = qkv[:, :, h * HD:(h + 1) * HD]
            k_h = qkv[:, :, H + h * HD: H + (h + 1) * HD]
            v_h = qkv[:, :, 2 * H + h * HD: 2 * H + (h + 1) * HD]
            s = jnp.einsum('bqd,bkd->bqk', q_h, k_h,
                           preferred_element_type=jnp.float32) * scale + add_mask
            s = s - jnp.max(s, axis=-1, keepdims=True)
            p = jnp.exp(s)
            p = p * pl.reciprocal(jnp.sum(p, axis=-1, keepdims=True), approx=True)
            ctx_h = jnp.einsum('bqk,bkd->bqd', p, v_h,
                               preferred_element_type=jnp.float32)      # [B, L, HD]
            attn = attn + jnp.dot(ctx_h.reshape(B * L, HD),
                                  wo[h * HD:(h + 1) * HD, :],
                                  preferred_element_type=jnp.float32)
        attn = attn + vecs[0:1, :]                                       # + b_o
        x1 = _layernorm(x + attn.reshape(B, L, H), vecs[1:2, :], vecs[2:3, :])

        hmid = _gelu(jnp.dot(x1.reshape(B * L, H), w1,
                             preferred_element_type=jnp.float32) + b1)   # [B*L, FF]
        ffn = jnp.dot(hmid, w2, preferred_element_type=jnp.float32) + vecs[3:4, :]
        x = _layernorm(x1 + ffn.reshape(B, L, H), vecs[4:5, :], vecs[5:6, :])

    # ---- CLS -> BiLSTM (seq len 1, h0 = c0 = 0) -> dropout(identity) -> Linear ----
    cls = x[:, 0, :]                                                     # [B, H]
    # one fused matmul for forward+backward input-hidden gates: [B, 8*LSTM_H]
    gates = jnp.dot(cls, w_ih_ref[...], preferred_element_type=jnp.float32) + b_ih_ref[...]

    def direction(off):
        # PyTorch gate order i, f, g, o; forget gate is dead since c0 == 0
        i = jax.nn.sigmoid(gates[:, off + 0 * LSTM_H: off + 1 * LSTM_H])
        g = jnp.tanh(gates[:, off + 2 * LSTM_H: off + 3 * LSTM_H])
        o = jax.nn.sigmoid(gates[:, off + 3 * LSTM_H: off + 4 * LSTM_H])
        return o * jnp.tanh(i * g)

    h_f = direction(0)
    h_b = direction(4 * LSTM_H)

    # classifier: avoid a lane-axis concat by splitting the weight by rows
    wc = wc_ref[...]                                                     # [2*LSTM_H, NPAD]
    logits = (jnp.dot(h_f, wc[:LSTM_H, :], preferred_element_type=jnp.float32)
              + jnp.dot(h_b, wc[LSTM_H:, :], preferred_element_type=jnp.float32)
              + bc_ref[...])
    o_ref[...] = logits                                                  # lane-dense [B, NPAD]


# ---- pallas_call glue ----------------------------------------------------------
def _vmem():
    return pl.BlockSpec(memory_space=pltpu.MemorySpace.VMEM)


def sentence_classifier_forward(params, input_ids, attention_mask):
    # BERT embedding gather (glue, stays in XLA)
    emb = (params['word_emb'][input_ids]
           + params['pos_emb'][None, :L, :]
           + params['type_emb'][0][None, None, :]).astype(jnp.float32)

    args = (emb,
            attention_mask.astype(jnp.float32),
            params['emb_ln'],
            params['w_qkv'], params['b_qkv'], params['wo'],
            params['w1'], params['b1'], params['w2'], params['vecs'],
            params['w_ih'], params['b_ih'], params['wc'], params['bc'])

    logits_pad = pl.pallas_call(
        fused_forward_kernel,
        out_shape=jax.ShapeDtypeStruct((B, NPAD), jnp.float32),
        in_specs=[_vmem() for _ in args],
        out_specs=_vmem(),
    )(*args)
    return logits_pad[:, :NUM_LABELS]


# ---- deterministic parameter init ---------------------------------------------
def init_params(key):
    keys = iter(jax.random.split(key, 64))

    def nrm(shape, scale=0.02):
        return scale * jax.random.normal(next(keys), shape, dtype=jnp.float32)

    params = {
        'word_emb': nrm((VOCAB, H)),
        'pos_emb': nrm((L, H)),
        'type_emb': nrm((2, H)),
        'emb_ln': jnp.concatenate([jnp.ones((1, H), jnp.float32),
                                   jnp.zeros((1, H), jnp.float32)], axis=0),
    }

    w_qkv, wo, w1, w2, vecs = [], [], [], [], []
    for _ in range(NLAYERS):
        w_qkv.append(jnp.concatenate([nrm((H, H)), nrm((H, H)), nrm((H, H))], axis=1))
        wo.append(nrm((H, H)))
        w1.append(nrm((H, FF)))
        w2.append(nrm((FF, H)))
        vecs.append(jnp.stack([
            jnp.zeros((H,), jnp.float32),   # b_o
            jnp.ones((H,), jnp.float32),    # ln1 gamma
            jnp.zeros((H,), jnp.float32),   # ln1 beta
            jnp.zeros((H,), jnp.float32),   # b2
            jnp.ones((H,), jnp.float32),    # ln2 gamma
            jnp.zeros((H,), jnp.float32),   # ln2 beta
        ], axis=0))
    params['w_qkv'] = jnp.stack(w_qkv)                               # [NL, H, 3H]
    params['b_qkv'] = jnp.zeros((NLAYERS, 1, 3 * H), jnp.float32)
    params['wo'] = jnp.stack(wo)                                     # [NL, H, H]
    params['w1'] = jnp.stack(w1)                                     # [NL, H, FF]
    params['b1'] = jnp.zeros((NLAYERS, 1, FF), jnp.float32)
    params['w2'] = jnp.stack(w2)                                     # [NL, FF, H]
    params['vecs'] = jnp.stack(vecs)                                 # [NL, 6, H]

    # BiLSTM: PyTorch stores W_ih as [4*hs, in]; we keep the transpose [in, 4*hs]
    # and pack forward|backward along the lane axis -> one [H, 8*hs] matmul.
    bound = 1.0 / math.sqrt(LSTM_H)

    def uni(shape, b=bound):
        return jax.random.uniform(next(keys), shape, jnp.float32, -b, b)

    params['w_ih'] = jnp.concatenate([uni((H, 4 * LSTM_H)), uni((H, 4 * LSTM_H))], axis=1)
    b_f = uni((4 * LSTM_H,)) + uni((4 * LSTM_H,))        # b_ih + b_hh (forward)
    b_b = uni((4 * LSTM_H,)) + uni((4 * LSTM_H,))        # b_ih + b_hh (backward)
    params['b_ih'] = jnp.concatenate([b_f, b_b]).reshape(1, 8 * LSTM_H)

    # classifier nn.Linear(2*hs, num_labels), stored transposed and lane-padded to 128
    cbound = 1.0 / math.sqrt(2 * LSTM_H)
    wc = jax.random.uniform(next(keys), (2 * LSTM_H, NUM_LABELS), jnp.float32, -cbound, cbound)
    bc = jax.random.uniform(next(keys), (1, NUM_LABELS), jnp.float32, -cbound, cbound)
    params['wc'] = jnp.zeros((2 * LSTM_H, NPAD), jnp.float32).at[:, :NUM_LABELS].set(wc)
    params['bc'] = jnp.zeros((1, NPAD), jnp.float32).at[:, :NUM_LABELS].set(bc)
    return params


if __name__ == "__main__":
    key = jax.random.PRNGKey(0)
    k_ids, k_params = jax.random.split(key)

    input_ids = jax.random.randint(k_ids, (B, L), 0, VOCAB, dtype=jnp.int32)
    attention_mask = jnp.ones((B, L), dtype=jnp.int32).at[1, 6:].set(0)  # pad tail of ex. 1

    params = init_params(k_params)
    logits = sentence_classifier_forward(params, input_ids, attention_mask)
    logits = jax.block_until_ready(logits)
    assert logits.shape == (B, NUM_LABELS) and logits.dtype == jnp.float32
    assert bool(jnp.all(jnp.isfinite(logits)))
    print("KERNEL_OK")
</pallas_src>

<mosaic_0001>
module attributes {stable_mosaic.version = 11 : i64} {
  func.func @fused_forward_kernel(%arg0: memref<2x8x32xf32, #tpu.memory_space<vmem>>, %arg1: memref<2x8xf32, #tpu.memory_space<vmem>>, %arg2: memref<2x32xf32, #tpu.memory_space<vmem>>, %arg3: memref<2x32x96xf32, #tpu.memory_space<vmem>>, %arg4: memref<2x1x96xf32, #tpu.memory_space<vmem>>, %arg5: memref<2x32x32xf32, #tpu.memory_space<vmem>>, %arg6: memref<2x32x128xf32, #tpu.memory_space<vmem>>, %arg7: memref<2x1x128xf32, #tpu.memory_space<vmem>>, %arg8: memref<2x128x32xf32, #tpu.memory_space<vmem>>, %arg9: memref<2x6x32xf32, #tpu.memory_space<vmem>>, %arg10: memref<32x128xf32, #tpu.memory_space<vmem>>, %arg11: memref<1x128xf32, #tpu.memory_space<vmem>>, %arg12: memref<32x128xf32, #tpu.memory_space<vmem>>, %arg13: memref<1x128xf32, #tpu.memory_space<vmem>>, %arg14: memref<2x128xf32, #tpu.memory_space<vmem>>) attributes {dimension_semantics = [], scalar_prefetch = 0 : i64, scratch_operands = 0 : i64, tpu.core_type = #tpu.core_type<tc>} {
    %c0 = arith.constant 0 : index
    %c0_0 = arith.constant 0 : index
    %0 = vector.load %arg2[%c0, %c0_0] : memref<2x32xf32, #tpu.memory_space<vmem>>, vector<2x32xf32>
    %c0_1 = arith.constant 0 : index
    %c0_2 = arith.constant 0 : index
    %c0_3 = arith.constant 0 : index
    %1 = vector.load %arg0[%c0_1, %c0_2, %c0_3] : memref<2x8x32xf32, #tpu.memory_space<vmem>>, vector<2x8x32xf32>
    %2 = vector.extract_strided_slice %0 {offsets = [0, 0], sizes = [1, 32], strides = [1, 1]} : vector<2x32xf32> to vector<1x32xf32>
    %3 = vector.extract_strided_slice %0 {offsets = [1, 0], sizes = [1, 32], strides = [1, 1]} : vector<2x32xf32> to vector<1x32xf32>
    %cst = arith.constant dense<0.000000e+00> : vector<2x8xf32>
    %4 = vector.multi_reduction <add>, %1, %cst [2] : vector<2x8x32xf32> to vector<2x8xf32>
    %5 = vector.shape_cast %4 : vector<2x8xf32> to vector<2x8x1xf32>
    %cst_4 = arith.constant 3.200000e+01 : f32
    %6 = vector.broadcast %cst_4 : f32 to vector<2x8x1xf32>
    %7 = arith.divf %5, %6 : vector<2x8x1xf32>
    %8 = vector.broadcast %7 : vector<2x8x1xf32> to vector<2x8x32xf32>
    %9 = arith.subf %1, %8 : vector<2x8x32xf32>
    %10 = arith.mulf %9, %9 : vector<2x8x32xf32>
    %cst_5 = arith.constant dense<0.000000e+00> : vector<2x8xf32>
    %11 = vector.multi_reduction <add>, %10, %cst_5 [2] : vector<2x8x32xf32> to vector<2x8xf32>
    %12 = vector.shape_cast %11 : vector<2x8xf32> to vector<2x8x1xf32>
    %cst_6 = arith.constant 3.200000e+01 : f32
    %13 = vector.broadcast %cst_6 : f32 to vector<2x8x1xf32>
    %14 = arith.divf %12, %13 : vector<2x8x1xf32>
    %15 = vector.broadcast %7 : vector<2x8x1xf32> to vector<2x8x32xf32>
    %16 = arith.subf %1, %15 : vector<2x8x32xf32>
    %cst_7 = arith.constant 9.99999996E-13 : f32
    %17 = vector.broadcast %cst_7 : f32 to vector<2x8x1xf32>
    %18 = arith.addf %14, %17 : vector<2x8x1xf32>
    %19 = math.rsqrt %18 : vector<2x8x1xf32>
    %20 = vector.broadcast %19 : vector<2x8x1xf32> to vector<2x8x32xf32>
    %21 = arith.mulf %16, %20 : vector<2x8x32xf32>
    %22 = vector.shape_cast %2 : vector<1x32xf32> to vector<1x1x32xf32>
    %23 = vector.broadcast %22 : vector<1x1x32xf32> to vector<2x8x32xf32>
    %24 = arith.mulf %21, %23 : vector<2x8x32xf32>
    %25 = vector.shape_cast %3 : vector<1x32xf32> to vector<1x1x32xf32>
    %26 = vector.broadcast %25 : vector<1x1x32xf32> to vector<2x8x32xf32>
    %27 = arith.addf %24, %26 : vector<2x8x32xf32>
    %c0_8 = arith.constant 0 : index
    %c0_9 = arith.constant 0 : index
    %28 = vector.load %arg1[%c0_8, %c0_9] : memref<2x8xf32, #tpu.memory_space<vmem>>, vector<2x8xf32>
    %cst_10 = arith.constant 1.000000e+00 : f32
    %29 = vector.broadcast %cst_10 : f32 to vector<2x8xf32>
    %30 = arith.subf %29, %28 : vector<2x8xf32>
    %cst_11 = arith.constant -1.000000e+04 : f32
    %31 = vector.broadcast %cst_11 : f32 to vector<2x8xf32>
    %32 = arith.mulf %30, %31 : vector<2x8xf32>
    %33 = vector.shape_cast %32 : vector<2x8xf32> to vector<2x1x8xf32>
    %c0_12 = arith.constant 0 : index
    %c0_13 = arith.constant 0 : index
    %c0_14 = arith.constant 0 : index
    %34 = vector.load %arg3[%c0_12, %c0_13, %c0_14] : memref<2x32x96xf32, #tpu.memory_space<vmem>>, vector<1x32x96xf32>
    %35 = vector.shape_cast %34 : vector<1x32x96xf32> to vector<32x96xf32>
    %c0_15 = arith.constant 0 : index
    %c0_16 = arith.constant 0 : index
    %c0_17 = arith.constant 0 : index
    %36 = vector.load %arg4[%c0_15, %c0_16, %c0_17] : memref<2x1x96xf32, #tpu.memory_space<vmem>>, vector<1x1x96xf32>
    %37 = vector.shape_cast %36 : vector<1x1x96xf32> to vector<1x96xf32>
    %c0_18 = arith.constant 0 : index
    %c0_19 = arith.constant 0 : index
    %c0_20 = arith.constant 0 : index
    %38 = vector.load %arg5[%c0_18, %c0_19, %c0_20] : memref<2x32x32xf32, #tpu.memory_space<vmem>>, vector<1x32x32xf32>
    %39 = vector.shape_cast %38 : vector<1x32x32xf32> to vector<32x32xf32>
    %c0_21 = arith.constant 0 : index
    %c0_22 = arith.constant 0 : index
    %c0_23 = arith.constant 0 : index
    %40 = vector.load %arg6[%c0_21, %c0_22, %c0_23] : memref<2x32x128xf32, #tpu.memory_space<vmem>>, vector<1x32x128xf32>
    %41 = vector.shape_cast %40 : vector<1x32x128xf32> to vector<32x128xf32>
    %c0_24 = arith.constant 0 : index
    %c0_25 = arith.constant 0 : index
    %c0_26 = arith.constant 0 : index
    %42 = vector.load %arg7[%c0_24, %c0_25, %c0_26] : memref<2x1x128xf32, #tpu.memory_space<vmem>>, vector<1x1x128xf32>
    %43 = vector.shape_cast %42 : vector<1x1x128xf32> to vector<1x128xf32>
    %c0_27 = arith.constant 0 : index
    %c0_28 = arith.constant 0 : index
    %c0_29 = arith.constant 0 : index
    %44 = vector.load %arg8[%c0_27, %c0_28, %c0_29] : memref<2x128x32xf32, #tpu.memory_space<vmem>>, vector<1x128x32xf32>
    %45 = vector.shape_cast %44 : vector<1x128x32xf32> to vector<128x32xf32>
    %c0_30 = arith.constant 0 : index
    %c0_31 = arith.constant 0 : index
    %c0_32 = arith.constant 0 : index
    %46 = vector.load %arg9[%c0_30, %c0_31, %c0_32] : memref<2x6x32xf32, #tpu.memory_space<vmem>>, vector<1x6x32xf32>
    %47 = vector.shape_cast %46 : vector<1x6x32xf32> to vector<6x32xf32>
    %48 = vector.shape_cast %27 : vector<2x8x32xf32> to vector<16x32xf32>
    %cst_33 = arith.constant dense<0.000000e+00> : vector<16x96xf32>
    %49 = tpu.matmul %48, %35, %cst_33 {dimension_numbers = #tpu.dot_dimension_numbers<[1], [0], [0], [1], [0, 0, 1, 1], [], []>} : vector<16x32xf32>, vector<32x96xf32>, vector<16x96xf32> -> vector<16x96xf32>
    %50 = vector.broadcast %37 : vector<1x96xf32> to vector<16x96xf32>
    %51 = arith.addf %49, %50 : vector<16x96xf32>
    %52 = vector.shape_cast %51 : vector<16x96xf32> to vector<2x8x96xf32>
    %cst_34 = arith.constant 0.000000e+00 : f32
    %53 = vector.broadcast %cst_34 : f32 to vector<16x32xf32>
    %54 = vector.extract_strided_slice %52 {offsets = [0, 0, 0], sizes = [2, 8, 16], strides = [1, 1, 1]} : vector<2x8x96xf32> to vector<2x8x16xf32>
    %55 = vector.extract_strided_slice %52 {offsets = [0, 0, 32], sizes = [2, 8, 16], strides = [1, 1, 1]} : vector<2x8x96xf32> to vector<2x8x16xf32>
    %56 = vector.extract_strided_slice %52 {offsets = [0, 0, 64], sizes = [2, 8, 16], strides = [1, 1, 1]} : vector<2x8x96xf32> to vector<2x8x16xf32>
    "tpu.trace_start"() <{level = 10 : i32, message = "bqd,bkd->bqk"}> : () -> ()
    %cst_35 = arith.constant dense<0.000000e+00> : vector<2x8x8xf32>
    %57 = tpu.matmul %54, %55, %cst_35 {dimension_numbers = #tpu.dot_dimension_numbers<[2], [2], [1], [1], [0, 0, 0, 1, 1, 1], [0], [0]>} : vector<2x8x16xf32>, vector<2x8x16xf32>, vector<2x8x8xf32> -> vector<2x8x8xf32>
    "tpu.trace_stop"() : () -> ()
    %cst_36 = arith.constant 2.500000e-01 : f32
    %58 = vector.broadcast %cst_36 : f32 to vector<2x8x8xf32>
    %59 = arith.mulf %57, %58 : vector<2x8x8xf32>
    %60 = vector.broadcast %33 : vector<2x1x8xf32> to vector<2x8x8xf32>
    %61 = arith.addf %59, %60 : vector<2x8x8xf32>
    %cst_37 = arith.constant dense<0xFF800000> : vector<2x8xf32>
    %62 = vector.multi_reduction <maximumf>, %61, %cst_37 [2] : vector<2x8x8xf32> to vector<2x8xf32>
    %63 = vector.shape_cast %62 : vector<2x8xf32> to vector<2x8x1xf32>
    %64 = vector.broadcast %63 : vector<2x8x1xf32> to vector<2x8x8xf32>
    %65 = arith.subf %61, %64 : vector<2x8x8xf32>
    %66 = math.exp %65 : vector<2x8x8xf32>
    %cst_38 = arith.constant dense<0.000000e+00> : vector<2x8xf32>
    %67 = vector.multi_reduction <add>, %66, %cst_38 [2] : vector<2x8x8xf32> to vector<2x8xf32>
    %68 = vector.shape_cast %67 : vector<2x8xf32> to vector<2x8x1xf32>
    %69 = tpu.reciprocal %68 {approx = true} : vector<2x8x1xf32> -> vector<2x8x1xf32>
    %70 = vector.broadcast %69 : vector<2x8x1xf32> to vector<2x8x8xf32>
    %71 = arith.mulf %66, %70 : vector<2x8x8xf32>
    "tpu.trace_start"() <{level = 10 : i32, message = "bqk,bkd->bqd"}> : () -> ()
    %cst_39 = arith.constant dense<0.000000e+00> : vector<2x8x16xf32>
    %72 = tpu.matmul %71, %56, %cst_39 {dimension_numbers = #tpu.dot_dimension_numbers<[2], [1], [1], [2], [0, 0, 0, 1, 1, 2], [0], [0]>} : vector<2x8x8xf32>, vector<2x8x16xf32>, vector<2x8x16xf32> -> vector<2x8x16xf32>
    "tpu.trace_stop"() : () -> ()
    %73 = vector.shape_cast %72 : vector<2x8x16xf32> to vector<16x16xf32>
    %74 = vector.extract_strided_slice %39 {offsets = [0, 0], sizes = [16, 32], strides = [1, 1]} : vector<32x32xf32> to vector<16x32xf32>
    %cst_40 = arith.constant dense<0.000000e+00> : vector<16x32xf32>
    %75 = tpu.matmul %73, %74, %cst_40 {dimension_numbers = #tpu.dot_dimension_numbers<[1], [0], [0], [1], [0, 0, 1, 1], [], []>} : vector<16x16xf32>, vector<16x32xf32>, vector<16x32xf32> -> vector<16x32xf32>
    %76 = arith.addf %53, %75 : vector<16x32xf32>
    %77 = vector.extract_strided_slice %52 {offsets = [0, 0, 16], sizes = [2, 8, 16], strides = [1, 1, 1]} : vector<2x8x96xf32> to vector<2x8x16xf32>
    %78 = vector.extract_strided_slice %52 {offsets = [0, 0, 48], sizes = [2, 8, 16], strides = [1, 1, 1]} : vector<2x8x96xf32> to vector<2x8x16xf32>
    %79 = vector.extract_strided_slice %52 {offsets = [0, 0, 80], sizes = [2, 8, 16], strides = [1, 1, 1]} : vector<2x8x96xf32> to vector<2x8x16xf32>
    "tpu.trace_start"() <{level = 10 : i32, message = "bqd,bkd->bqk"}> : () -> ()
    %cst_41 = arith.constant dense<0.000000e+00> : vector<2x8x8xf32>
    %80 = tpu.matmul %77, %78, %cst_41 {dimension_numbers = #tpu.dot_dimension_numbers<[2], [2], [1], [1], [0, 0, 0, 1, 1, 1], [0], [0]>} : vector<2x8x16xf32>, vector<2x8x16xf32>, vector<2x8x8xf32> -> vector<2x8x8xf32>
    "tpu.trace_stop"() : () -> ()
    %cst_42 = arith.constant 2.500000e-01 : f32
    %81 = vector.broadcast %cst_42 : f32 to vector<2x8x8xf32>
    %82 = arith.mulf %80, %81 : vector<2x8x8xf32>
    %83 = vector.broadcast %33 : vector<2x1x8xf32> to vector<2x8x8xf32>
    %84 = arith.addf %82, %83 : vector<2x8x8xf32>
    %cst_43 = arith.constant dense<0xFF800000> : vector<2x8xf32>
    %85 = vector.multi_reduction <maximumf>, %84, %cst_43 [2] : vector<2x8x8xf32> to vector<2x8xf32>
    %86 = vector.shape_cast %85 : vector<2x8xf32> to vector<2x8x1xf32>
    %87 = vector.broadcast %86 : vector<2x8x1xf32> to vector<2x8x8xf32>
    %88 = arith.subf %84, %87 : vector<2x8x8xf32>
    %89 = math.exp %88 : vector<2x8x8xf32>
    %cst_44 = arith.constant dense<0.000000e+00> : vector<2x8xf32>
    %90 = vector.multi_reduction <add>, %89, %cst_44 [2] : vector<2x8x8xf32> to vector<2x8xf32>
    %91 = vector.shape_cast %90 : vector<2x8xf32> to vector<2x8x1xf32>
    %92 = tpu.reciprocal %91 {approx = true} : vector<2x8x1xf32> -> vector<2x8x1xf32>
    %93 = vector.broadcast %92 : vector<2x8x1xf32> to vector<2x8x8xf32>
    %94 = arith.mulf %89, %93 : vector<2x8x8xf32>
    "tpu.trace_start"() <{level = 10 : i32, message = "bqk,bkd->bqd"}> : () -> ()
    %cst_45 = arith.constant dense<0.000000e+00> : vector<2x8x16xf32>
    %95 = tpu.matmul %94, %79, %cst_45 {dimension_numbers = #tpu.dot_dimension_numbers<[2], [1], [1], [2], [0, 0, 0, 1, 1, 2], [0], [0]>} : vector<2x8x8xf32>, vector<2x8x16xf32>, vector<2x8x16xf32> -> vector<2x8x16xf32>
    "tpu.trace_stop"() : () -> ()
    %96 = vector.shape_cast %95 : vector<2x8x16xf32> to vector<16x16xf32>
    %97 = vector.extract_strided_slice %39 {offsets = [16, 0], sizes = [16, 32], strides = [1, 1]} : vector<32x32xf32> to vector<16x32xf32>
    %cst_46 = arith.constant dense<0.000000e+00> : vector<16x32xf32>
    %98 = tpu.matmul %96, %97, %cst_46 {dimension_numbers = #tpu.dot_dimension_numbers<[1], [0], [0], [1], [0, 0, 1, 1], [], []>} : vector<16x16xf32>, vector<16x32xf32>, vector<16x32xf32> -> vector<16x32xf32>
    %99 = arith.addf %76, %98 : vector<16x32xf32>
    %100 = vector.extract_strided_slice %47 {offsets = [0, 0], sizes = [1, 32], strides = [1, 1]} : vector<6x32xf32> to vector<1x32xf32>
    %101 = vector.broadcast %100 : vector<1x32xf32> to vector<16x32xf32>
    %102 = arith.addf %99, %101 : vector<16x32xf32>
    %103 = vector.shape_cast %102 : vector<16x32xf32> to vector<2x8x32xf32>
    %104 = arith.addf %27, %103 : vector<2x8x32xf32>
    %105 = vector.extract_strided_slice %47 {offsets = [1, 0], sizes = [1, 32], strides = [1, 1]} : vector<6x32xf32> to vector<1x32xf32>
    %106 = vector.extract_strided_slice %47 {offsets = [2, 0], sizes = [1, 32], strides = [1, 1]} : vector<6x32xf32> to vector<1x32xf32>
    %cst_47 = arith.constant dense<0.000000e+00> : vector<2x8xf32>
    %107 = vector.multi_reduction <add>, %104, %cst_47 [2] : vector<2x8x32xf32> to vector<2x8xf32>
    %108 = vector.shape_cast %107 : vector<2x8xf32> to vector<2x8x1xf32>
    %cst_48 = arith.constant 3.200000e+01 : f32
    %109 = vector.broadcast %cst_48 : f32 to vector<2x8x1xf32>
    %110 = arith.divf %108, %109 : vector<2x8x1xf32>
    %111 = vector.broadcast %110 : vector<2x8x1xf32> to vector<2x8x32xf32>
    %112 = arith.subf %104, %111 : vector<2x8x32xf32>
    %113 = arith.mulf %112, %112 : vector<2x8x32xf32>
    %cst_49 = arith.constant dense<0.000000e+00> : vector<2x8xf32>
    %114 = vector.multi_reduction <add>, %113, %cst_49 [2] : vector<2x8x32xf32> to vector<2x8xf32>
    %115 = vector.shape_cast %114 : vector<2x8xf32> to vector<2x8x1xf32>
    %cst_50 = arith.constant 3.200000e+01 : f32
    %116 = vector.broadcast %cst_50 : f32 to vector<2x8x1xf32>
    %117 = arith.divf %115, %116 : vector<2x8x1xf32>
    %118 = vector.broadcast %110 : vector<2x8x1xf32> to vector<2x8x32xf32>
    %119 = arith.subf %104, %118 : vector<2x8x32xf32>
    %cst_51 = arith.constant 9.99999996E-13 : f32
    %120 = vector.broadcast %cst_51 : f32 to vector<2x8x1xf32>
    %121 = arith.addf %117, %120 : vector<2x8x1xf32>
    %122 = math.rsqrt %121 : vector<2x8x1xf32>
    %123 = vector.broadcast %122 : vector<2x8x1xf32> to vector<2x8x32xf32>
    %124 = arith.mulf %119, %123 : vector<2x8x32xf32>
    %125 = vector.shape_cast %105 : vector<1x32xf32> to vector<1x1x32xf32>
    %126 = vector.broadcast %125 : vector<1x1x32xf32> to vector<2x8x32xf32>
    %127 = arith.mulf %124, %126 : vector<2x8x32xf32>
    %128 = vector.shape_cast %106 : vector<1x32xf32> to vector<1x1x32xf32>
    %129 = vector.broadcast %128 : vector<1x1x32xf32> to vector<2x8x32xf32>
    %130 = arith.addf %127, %129 : vector<2x8x32xf32>
    %131 = vector.shape_cast %130 : vector<2x8x32xf32> to vector<16x32xf32>
    %cst_52 = arith.constant dense<0.000000e+00> : vector<16x128xf32>
    %132 = tpu.matmul %131, %41, %cst_52 {dimension_numbers = #tpu.dot_dimension_numbers<[1], [0], [0], [1], [0, 0, 1, 1], [], []>} : vector<16x32xf32>, vector<32x128xf32>, vector<16x128xf32> -> vector<16x128xf32>
    %133 = vector.broadcast %43 : vector<1x128xf32> to vector<16x128xf32>
    %134 = arith.addf %132, %133 : vector<16x128xf32>
    %cst_53 = arith.constant 5.000000e-01 : f32
    %135 = vector.broadcast %cst_53 : f32 to vector<16x128xf32>
    %136 = arith.mulf %135, %134 : vector<16x128xf32>
    %cst_54 = arith.constant 4.471500e-02 : f32
    %137 = vector.broadcast %cst_54 : f32 to vector<16x128xf32>
    %138 = arith.mulf %137, %134 : vector<16x128xf32>
    %139 = arith.mulf %138, %134 : vector<16x128xf32>
    %140 = arith.mulf %139, %134 : vector<16x128xf32>
    %141 = arith.addf %134, %140 : vector<16x128xf32>
    %cst_55 = arith.constant 0.797884583 : f32
    %142 = vector.broadcast %cst_55 : f32 to vector<16x128xf32>
    %143 = arith.mulf %142, %141 : vector<16x128xf32>
    %144 = math.tanh %143 : vector<16x128xf32>
    %cst_56 = arith.constant 1.000000e+00 : f32
    %145 = vector.broadcast %cst_56 : f32 to vector<16x128xf32>
    %146 = arith.addf %145, %144 : vector<16x128xf32>
    %147 = arith.mulf %136, %146 : vector<16x128xf32>
    %cst_57 = arith.constant dense<0.000000e+00> : vector<16x32xf32>
    %148 = tpu.matmul %147, %45, %cst_57 {dimension_numbers = #tpu.dot_dimension_numbers<[1], [0], [0], [1], [0, 0, 1, 1], [], []>} : vector<16x128xf32>, vector<128x32xf32>, vector<16x32xf32> -> vector<16x32xf32>
    %149 = vector.extract_strided_slice %47 {offsets = [3, 0], sizes = [1, 32], strides = [1, 1]} : vector<6x32xf32> to vector<1x32xf32>
    %150 = vector.broadcast %149 : vector<1x32xf32> to vector<16x32xf32>
    %151 = arith.addf %148, %150 : vector<16x32xf32>
    %152 = vector.shape_cast %151 : vector<16x32xf32> to vector<2x8x32xf32>
    %153 = arith.addf %130, %152 : vector<2x8x32xf32>
    %154 = vector.extract_strided_slice %47 {offsets = [4, 0], sizes = [1, 32], strides = [1, 1]} : vector<6x32xf32> to vector<1x32xf32>
    %155 = vector.extract_strided_slice %47 {offsets = [5, 0], sizes = [1, 32], strides = [1, 1]} : vector<6x32xf32> to vector<1x32xf32>
    %cst_58 = arith.constant dense<0.000000e+00> : vector<2x8xf32>
    %156 = vector.multi_reduction <add>, %153, %cst_58 [2] : vector<2x8x32xf32> to vector<2x8xf32>
    %157 = vector.shape_cast %156 : vector<2x8xf32> to vector<2x8x1xf32>
    %cst_59 = arith.constant 3.200000e+01 : f32
    %158 = vector.broadcast %cst_59 : f32 to vector<2x8x1xf32>
    %159 = arith.divf %157, %158 : vector<2x8x1xf32>
    %160 = vector.broadcast %159 : vector<2x8x1xf32> to vector<2x8x32xf32>
    %161 = arith.subf %153, %160 : vector<2x8x32xf32>
    %162 = arith.mulf %161, %161 : vector<2x8x32xf32>
    %cst_60 = arith.constant dense<0.000000e+00> : vector<2x8xf32>
    %163 = vector.multi_reduction <add>, %162, %cst_60 [2] : vector<2x8x32xf32> to vector<2x8xf32>
    %164 = vector.shape_cast %163 : vector<2x8xf32> to vector<2x8x1xf32>
    %cst_61 = arith.constant 3.200000e+01 : f32
    %165 = vector.broadcast %cst_61 : f32 to vector<2x8x1xf32>
    %166 = arith.divf %164, %165 : vector<2x8x1xf32>
    %167 = vector.broadcast %159 : vector<2x8x1xf32> to vector<2x8x32xf32>
    %168 = arith.subf %153, %167 : vector<2x8x32xf32>
    %cst_62 = arith.constant 9.99999996E-13 : f32
    %169 = vector.broadcast %cst_62 : f32 to vector<2x8x1xf32>
    %170 = arith.addf %166, %169 : vector<2x8x1xf32>
    %171 = math.rsqrt %170 : vector<2x8x1xf32>
    %172 = vector.broadcast %171 : vector<2x8x1xf32> to vector<2x8x32xf32>
    %173 = arith.mulf %168, %172 : vector<2x8x32xf32>
    %174 = vector.shape_cast %154 : vector<1x32xf32> to vector<1x1x32xf32>
    %175 = vector.broadcast %174 : vector<1x1x32xf32> to vector<2x8x32xf32>
    %176 = arith.mulf %173, %175 : vector<2x8x32xf32>
    %177 = vector.shape_cast %155 : vector<1x32xf32> to vector<1x1x32xf32>
    %178 = vector.broadcast %177 : vector<1x1x32xf32> to vector<2x8x32xf32>
    %179 = arith.addf %176, %178 : vector<2x8x32xf32>
    %c1 = arith.constant 1 : index
    %c0_63 = arith.constant 0 : index
    %c0_64 = arith.constant 0 : index
    %180 = vector.load %arg3[%c1, %c0_63, %c0_64] : memref<2x32x96xf32, #tpu.memory_space<vmem>>, vector<1x32x96xf32>
    %181 = vector.shape_cast %180 : vector<1x32x96xf32> to vector<32x96xf32>
    %c1_65 = arith.constant 1 : index
    %c0_66 = arith.constant 0 : index
    %c0_67 = arith.constant 0 : index
    %182 = vector.load %arg4[%c1_65, %c0_66, %c0_67] : memref<2x1x96xf32, #tpu.memory_space<vmem>>, vector<1x1x96xf32>
    %183 = vector.shape_cast %182 : vector<1x1x96xf32> to vector<1x96xf32>
    %c1_68 = arith.constant 1 : index
    %c0_69 = arith.constant 0 : index
    %c0_70 = arith.constant 0 : index
    %184 = vector.load %arg5[%c1_68, %c0_69, %c0_70] : memref<2x32x32xf32, #tpu.memory_space<vmem>>, vector<1x32x32xf32>
    %185 = vector.shape_cast %184 : vector<1x32x32xf32> to vector<32x32xf32>
    %c1_71 = arith.constant 1 : index
    %c0_72 = arith.constant 0 : index
    %c0_73 = arith.constant 0 : index
    %186 = vector.load %arg6[%c1_71, %c0_72, %c0_73] : memref<2x32x128xf32, #tpu.memory_space<vmem>>, vector<1x32x128xf32>
    %187 = vector.shape_cast %186 : vector<1x32x128xf32> to vector<32x128xf32>
    %c1_74 = arith.constant 1 : index
    %c0_75 = arith.constant 0 : index
    %c0_76 = arith.constant 0 : index
    %188 = vector.load %arg7[%c1_74, %c0_75, %c0_76] : memref<2x1x128xf32, #tpu.memory_space<vmem>>, vector<1x1x128xf32>
    %189 = vector.shape_cast %188 : vector<1x1x128xf32> to vector<1x128xf32>
    %c1_77 = arith.constant 1 : index
    %c0_78 = arith.constant 0 : index
    %c0_79 = arith.constant 0 : index
    %190 = vector.load %arg8[%c1_77, %c0_78, %c0_79] : memref<2x128x32xf32, #tpu.memory_space<vmem>>, vector<1x128x32xf32>
    %191 = vector.shape_cast %190 : vector<1x128x32xf32> to vector<128x32xf32>
    %c1_80 = arith.constant 1 : index
    %c0_81 = arith.constant 0 : index
    %c0_82 = arith.constant 0 : index
    %192 = vector.load %arg9[%c1_80, %c0_81, %c0_82] : memref<2x6x32xf32, #tpu.memory_space<vmem>>, vector<1x6x32xf32>
    %193 = vector.shape_cast %192 : vector<1x6x32xf32> to vector<6x32xf32>
    %194 = vector.shape_cast %179 : vector<2x8x32xf32> to vector<16x32xf32>
    %cst_83 = arith.constant dense<0.000000e+00> : vector<16x96xf32>
    %195 = tpu.matmul %194, %181, %cst_83 {dimension_numbers = #tpu.dot_dimension_numbers<[1], [0], [0], [1], [0, 0, 1, 1], [], []>} : vector<16x32xf32>, vector<32x96xf32>, vector<16x96xf32> -> vector<16x96xf32>
    %196 = vector.broadcast %183 : vector<1x96xf32> to vector<16x96xf32>
    %197 = arith.addf %195, %196 : vector<16x96xf32>
    %198 = vector.shape_cast %197 : vector<16x96xf32> to vector<2x8x96xf32>
    %cst_84 = arith.constant 0.000000e+00 : f32
    %199 = vector.broadcast %cst_84 : f32 to vector<16x32xf32>
    %200 = vector.extract_strided_slice %198 {offsets = [0, 0, 0], sizes = [2, 8, 16], strides = [1, 1, 1]} : vector<2x8x96xf32> to vector<2x8x16xf32>
    %201 = vector.extract_strided_slice %198 {offsets = [0, 0, 32], sizes = [2, 8, 16], strides = [1, 1, 1]} : vector<2x8x96xf32> to vector<2x8x16xf32>
    %202 = vector.extract_strided_slice %198 {offsets = [0, 0, 64], sizes = [2, 8, 16], strides = [1, 1, 1]} : vector<2x8x96xf32> to vector<2x8x16xf32>
    "tpu.trace_start"() <{level = 10 : i32, message = "bqd,bkd->bqk"}> : () -> ()
    %cst_85 = arith.constant dense<0.000000e+00> : vector<2x8x8xf32>
    %203 = tpu.matmul %200, %201, %cst_85 {dimension_numbers = #tpu.dot_dimension_numbers<[2], [2], [1], [1], [0, 0, 0, 1, 1, 1], [0], [0]>} : vector<2x8x16xf32>, vector<2x8x16xf32>, vector<2x8x8xf32> -> vector<2x8x8xf32>
    "tpu.trace_stop"() : () -> ()
    %cst_86 = arith.constant 2.500000e-01 : f32
    %204 = vector.broadcast %cst_86 : f32 to vector<2x8x8xf32>
    %205 = arith.mulf %203, %204 : vector<2x8x8xf32>
    %206 = vector.broadcast %33 : vector<2x1x8xf32> to vector<2x8x8xf32>
    %207 = arith.addf %205, %206 : vector<2x8x8xf32>
    %cst_87 = arith.constant dense<0xFF800000> : vector<2x8xf32>
    %208 = vector.multi_reduction <maximumf>, %207, %cst_87 [2] : vector<2x8x8xf32> to vector<2x8xf32>
    %209 = vector.shape_cast %208 : vector<2x8xf32> to vector<2x8x1xf32>
    %210 = vector.broadcast %209 : vector<2x8x1xf32> to vector<2x8x8xf32>
    %211 = arith.subf %207, %210 : vector<2x8x8xf32>
    %212 = math.exp %211 : vector<2x8x8xf32>
    %cst_88 = arith.constant dense<0.000000e+00> : vector<2x8xf32>
    %213 = vector.multi_reduction <add>, %212, %cst_88 [2] : vector<2x8x8xf32> to vector<2x8xf32>
    %214 = vector.shape_cast %213 : vector<2x8xf32> to vector<2x8x1xf32>
    %215 = tpu.reciprocal %214 {approx = true} : vector<2x8x1xf32> -> vector<2x8x1xf32>
    %216 = vector.broadcast %215 : vector<2x8x1xf32> to vector<2x8x8xf32>
    %217 = arith.mulf %212, %216 : vector<2x8x8xf32>
    "tpu.trace_start"() <{level = 10 : i32, message = "bqk,bkd->bqd"}> : () -> ()
    %cst_89 = arith.constant dense<0.000000e+00> : vector<2x8x16xf32>
    %218 = tpu.matmul %217, %202, %cst_89 {dimension_numbers = #tpu.dot_dimension_numbers<[2], [1], [1], [2], [0, 0, 0, 1, 1, 2], [0], [0]>} : vector<2x8x8xf32>, vector<2x8x16xf32>, vector<2x8x16xf32> -> vector<2x8x16xf32>
    "tpu.trace_stop"() : () -> ()
    %219 = vector.shape_cast %218 : vector<2x8x16xf32> to vector<16x16xf32>
    %220 = vector.extract_strided_slice %185 {offsets = [0, 0], sizes = [16, 32], strides = [1, 1]} : vector<32x32xf32> to vector<16x32xf32>
    %cst_90 = arith.constant dense<0.000000e+00> : vector<16x32xf32>
    %221 = tpu.matmul %219, %220, %cst_90 {dimension_numbers = #tpu.dot_dimension_numbers<[1], [0], [0], [1], [0, 0, 1, 1], [], []>} : vector<16x16xf32>, vector<16x32xf32>, vector<16x32xf32> -> vector<16x32xf32>
    %222 = arith.addf %199, %221 : vector<16x32xf32>
    %223 = vector.extract_strided_slice %198 {offsets = [0, 0, 16], sizes = [2, 8, 16], strides = [1, 1, 1]} : vector<2x8x96xf32> to vector<2x8x16xf32>
    %224 = vector.extract_strided_slice %198 {offsets = [0, 0, 48], sizes = [2, 8, 16], strides = [1, 1, 1]} : vector<2x8x96xf32> to vector<2x8x16xf32>
    %225 = vector.extract_strided_slice %198 {offsets = [0, 0, 80], sizes = [2, 8, 16], strides = [1, 1, 1]} : vector<2x8x96xf32> to vector<2x8x16xf32>
    "tpu.trace_start"() <{level = 10 : i32, message = "bqd,bkd->bqk"}> : () -> ()
    %cst_91 = arith.constant dense<0.000000e+00> : vector<2x8x8xf32>
    %226 = tpu.matmul %223, %224, %cst_91 {dimension_numbers = #tpu.dot_dimension_numbers<[2], [2], [1], [1], [0, 0, 0, 1, 1, 1], [0], [0]>} : vector<2x8x16xf32>, vector<2x8x16xf32>, vector<2x8x8xf32> -> vector<2x8x8xf32>
    "tpu.trace_stop"() : () -> ()
    %cst_92 = arith.constant 2.500000e-01 : f32
    %227 = vector.broadcast %cst_92 : f32 to vector<2x8x8xf32>
    %228 = arith.mulf %226, %227 : vector<2x8x8xf32>
    %229 = vector.broadcast %33 : vector<2x1x8xf32> to vector<2x8x8xf32>
    %230 = arith.addf %228, %229 : vector<2x8x8xf32>
    %cst_93 = arith.constant dense<0xFF800000> : vector<2x8xf32>
    %231 = vector.multi_reduction <maximumf>, %230, %cst_93 [2] : vector<2x8x8xf32> to vector<2x8xf32>
    %232 = vector.shape_cast %231 : vector<2x8xf32> to vector<2x8x1xf32>
    %233 = vector.broadcast %232 : vector<2x8x1xf32> to vector<2x8x8xf32>
    %234 = arith.subf %230, %233 : vector<2x8x8xf32>
    %235 = math.exp %234 : vector<2x8x8xf32>
    %cst_94 = arith.constant dense<0.000000e+00> : vector<2x8xf32>
    %236 = vector.multi_reduction <add>, %235, %cst_94 [2] : vector<2x8x8xf32> to vector<2x8xf32>
    %237 = vector.shape_cast %236 : vector<2x8xf32> to vector<2x8x1xf32>
    %238 = tpu.reciprocal %237 {approx = true} : vector<2x8x1xf32> -> vector<2x8x1xf32>
    %239 = vector.broadcast %238 : vector<2x8x1xf32> to vector<2x8x8xf32>
    %240 = arith.mulf %235, %239 : vector<2x8x8xf32>
    "tpu.trace_start"() <{level = 10 : i32, message = "bqk,bkd->bqd"}> : () -> ()
    %cst_95 = arith.constant dense<0.000000e+00> : vector<2x8x16xf32>
    %241 = tpu.matmul %240, %225, %cst_95 {dimension_numbers = #tpu.dot_dimension_numbers<[2], [1], [1], [2], [0, 0, 0, 1, 1, 2], [0], [0]>} : vector<2x8x8xf32>, vector<2x8x16xf32>, vector<2x8x16xf32> -> vector<2x8x16xf32>
    "tpu.trace_stop"() : () -> ()
    %242 = vector.shape_cast %241 : vector<2x8x16xf32> to vector<16x16xf32>
    %243 = vector.extract_strided_slice %185 {offsets = [16, 0], sizes = [16, 32], strides = [1, 1]} : vector<32x32xf32> to vector<16x32xf32>
    %cst_96 = arith.constant dense<0.000000e+00> : vector<16x32xf32>
    %244 = tpu.matmul %242, %243, %cst_96 {dimension_numbers = #tpu.dot_dimension_numbers<[1], [0], [0], [1], [0, 0, 1, 1], [], []>} : vector<16x16xf32>, vector<16x32xf32>, vector<16x32xf32> -> vector<16x32xf32>
    %245 = arith.addf %222, %244 : vector<16x32xf32>
    %246 = vector.extract_strided_slice %193 {offsets = [0, 0], sizes = [1, 32], strides = [1, 1]} : vector<6x32xf32> to vector<1x32xf32>
    %247 = vector.broadcast %246 : vector<1x32xf32> to vector<16x32xf32>
    %248 = arith.addf %245, %247 : vector<16x32xf32>
    %249 = vector.shape_cast %248 : vector<16x32xf32> to vector<2x8x32xf32>
    %250 = arith.addf %179, %249 : vector<2x8x32xf32>
    %251 = vector.extract_strided_slice %193 {offsets = [1, 0], sizes = [1, 32], strides = [1, 1]} : vector<6x32xf32> to vector<1x32xf32>
    %252 = vector.extract_strided_slice %193 {offsets = [2, 0], sizes = [1, 32], strides = [1, 1]} : vector<6x32xf32> to vector<1x32xf32>
    %cst_97 = arith.constant dense<0.000000e+00> : vector<2x8xf32>
    %253 = vector.multi_reduction <add>, %250, %cst_97 [2] : vector<2x8x32xf32> to vector<2x8xf32>
    %254 = vector.shape_cast %253 : vector<2x8xf32> to vector<2x8x1xf32>
    %cst_98 = arith.constant 3.200000e+01 : f32
    %255 = vector.broadcast %cst_98 : f32 to vector<2x8x1xf32>
    %256 = arith.divf %254, %255 : vector<2x8x1xf32>
    %257 = vector.broadcast %256 : vector<2x8x1xf32> to vector<2x8x32xf32>
    %258 = arith.subf %250, %257 : vector<2x8x32xf32>
    %259 = arith.mulf %258, %258 : vector<2x8x32xf32>
    %cst_99 = arith.constant dense<0.000000e+00> : vector<2x8xf32>
    %260 = vector.multi_reduction <add>, %259, %cst_99 [2] : vector<2x8x32xf32> to vector<2x8xf32>
    %261 = vector.shape_cast %260 : vector<2x8xf32> to vector<2x8x1xf32>
    %cst_100 = arith.constant 3.200000e+01 : f32
    %262 = vector.broadcast %cst_100 : f32 to vector<2x8x1xf32>
    %263 = arith.divf %261, %262 : vector<2x8x1xf32>
    %264 = vector.broadcast %256 : vector<2x8x1xf32> to vector<2x8x32xf32>
    %265 = arith.subf %250, %264 : vector<2x8x32xf32>
    %cst_101 = arith.constant 9.99999996E-13 : f32
    %266 = vector.broadcast %cst_101 : f32 to vector<2x8x1xf32>
    %267 = arith.addf %263, %266 : vector<2x8x1xf32>
    %268 = math.rsqrt %267 : vector<2x8x1xf32>
    %269 = vector.broadcast %268 : vector<2x8x1xf32> to vector<2x8x32xf32>
    %270 = arith.mulf %265, %269 : vector<2x8x32xf32>
    %271 = vector.shape_cast %251 : vector<1x32xf32> to vector<1x1x32xf32>
    %272 = vector.broadcast %271 : vector<1x1x32xf32> to vector<2x8x32xf32>
    %273 = arith.mulf %270, %272 : vector<2x8x32xf32>
    %274 = vector.shape_cast %252 : vector<1x32xf32> to vector<1x1x32xf32>
    %275 = vector.broadcast %274 : vector<1x1x32xf32> to vector<2x8x32xf32>
    %276 = arith.addf %273, %275 : vector<2x8x32xf32>
    %277 = vector.shape_cast %276 : vector<2x8x32xf32> to vector<16x32xf32>
    %cst_102 = arith.constant dense<0.000000e+00> : vector<16x128xf32>
    %278 = tpu.matmul %277, %187, %cst_102 {dimension_numbers = #tpu.dot_dimension_numbers<[1], [0], [0], [1], [0, 0, 1, 1], [], []>} : vector<16x32xf32>, vector<32x128xf32>, vector<16x128xf32> -> vector<16x128xf32>
    %279 = vector.broadcast %189 : vector<1x128xf32> to vector<16x128xf32>
    %280 = arith.addf %278, %279 : vector<16x128xf32>
    %cst_103 = arith.constant 5.000000e-01 : f32
    %281 = vector.broadcast %cst_103 : f32 to vector<16x128xf32>
    %282 = arith.mulf %281, %280 : vector<16x128xf32>
    %cst_104 = arith.constant 4.471500e-02 : f32
    %283 = vector.broadcast %cst_104 : f32 to vector<16x128xf32>
    %284 = arith.mulf %283, %280 : vector<16x128xf32>
    %285 = arith.mulf %284, %280 : vector<16x128xf32>
    %286 = arith.mulf %285, %280 : vector<16x128xf32>
    %287 = arith.addf %280, %286 : vector<16x128xf32>
    %cst_105 = arith.constant 0.797884583 : f32
    %288 = vector.broadcast %cst_105 : f32 to vector<16x128xf32>
    %289 = arith.mulf %288, %287 : vector<16x128xf32>
    %290 = math.tanh %289 : vector<16x128xf32>
    %cst_106 = arith.constant 1.000000e+00 : f32
    %291 = vector.broadcast %cst_106 : f32 to vector<16x128xf32>
    %292 = arith.addf %291, %290 : vector<16x128xf32>
    %293 = arith.mulf %282, %292 : vector<16x128xf32>
    %cst_107 = arith.constant dense<0.000000e+00> : vector<16x32xf32>
    %294 = tpu.matmul %293, %191, %cst_107 {dimension_numbers = #tpu.dot_dimension_numbers<[1], [0], [0], [1], [0, 0, 1, 1], [], []>} : vector<16x128xf32>, vector<128x32xf32>, vector<16x32xf32> -> vector<16x32xf32>
    %295 = vector.extract_strided_slice %193 {offsets = [3, 0], sizes = [1, 32], strides = [1, 1]} : vector<6x32xf32> to vector<1x32xf32>
    %296 = vector.broadcast %295 : vector<1x32xf32> to vector<16x32xf32>
    %297 = arith.addf %294, %296 : vector<16x32xf32>
    %298 = vector.shape_cast %297 : vector<16x32xf32> to vector<2x8x32xf32>
    %299 = arith.addf %276, %298 : vector<2x8x32xf32>
    %300 = vector.extract_strided_slice %193 {offsets = [4, 0], sizes = [1, 32], strides = [1, 1]} : vector<6x32xf32> to vector<1x32xf32>
    %301 = vector.extract_strided_slice %193 {offsets = [5, 0], sizes = [1, 32], strides = [1, 1]} : vector<6x32xf32> to vector<1x32xf32>
    %cst_108 = arith.constant dense<0.000000e+00> : vector<2x8xf32>
    %302 = vector.multi_reduction <add>, %299, %cst_108 [2] : vector<2x8x32xf32> to vector<2x8xf32>
    %303 = vector.shape_cast %302 : vector<2x8xf32> to vector<2x8x1xf32>
    %cst_109 = arith.constant 3.200000e+01 : f32
    %304 = vector.broadcast %cst_109 : f32 to vector<2x8x1xf32>
    %305 = arith.divf %303, %304 : vector<2x8x1xf32>
    %306 = vector.broadcast %305 : vector<2x8x1xf32> to vector<2x8x32xf32>
    %307 = arith.subf %299, %306 : vector<2x8x32xf32>
    %308 = arith.mulf %307, %307 : vector<2x8x32xf32>
    %cst_110 = arith.constant dense<0.000000e+00> : vector<2x8xf32>
    %309 = vector.multi_reduction <add>, %308, %cst_110 [2] : vector<2x8x32xf32> to vector<2x8xf32>
    %310 = vector.shape_cast %309 : vector<2x8xf32> to vector<2x8x1xf32>
    %cst_111 = arith.constant 3.200000e+01 : f32
    %311 = vector.broadcast %cst_111 : f32 to vector<2x8x1xf32>
    %312 = arith.divf %310, %311 : vector<2x8x1xf32>
    %313 = vector.broadcast %305 : vector<2x8x1xf32> to vector<2x8x32xf32>
    %314 = arith.subf %299, %313 : vector<2x8x32xf32>
    %cst_112 = arith.constant 9.99999996E-13 : f32
    %315 = vector.broadcast %cst_112 : f32 to vector<2x8x1xf32>
    %316 = arith.addf %312, %315 : vector<2x8x1xf32>
    %317 = math.rsqrt %316 : vector<2x8x1xf32>
    %318 = vector.broadcast %317 : vector<2x8x1xf32> to vector<2x8x32xf32>
    %319 = arith.mulf %314, %318 : vector<2x8x32xf32>
    %320 = vector.shape_cast %300 : vector<1x32xf32> to vector<1x1x32xf32>
    %321 = vector.broadcast %320 : vector<1x1x32xf32> to vector<2x8x32xf32>
    %322 = arith.mulf %319, %321 : vector<2x8x32xf32>
    %323 = vector.shape_cast %301 : vector<1x32xf32> to vector<1x1x32xf32>
    %324 = vector.broadcast %323 : vector<1x1x32xf32> to vector<2x8x32xf32>
    %325 = arith.addf %322, %324 : vector<2x8x32xf32>
    %326 = vector.extract_strided_slice %325 {offsets = [0, 0, 0], sizes = [2, 1, 32], strides = [1, 1, 1]} : vector<2x8x32xf32> to vector<2x1x32xf32>
    %327 = vector.shape_cast %326 : vector<2x1x32xf32> to vector<2x32xf32>
    %c0_113 = arith.constant 0 : index
    %c0_114 = arith.constant 0 : index
    %328 = vector.load %arg10[%c0_113, %c0_114] : memref<32x128xf32, #tpu.memory_space<vmem>>, vector<32x128xf32>
    %cst_115 = arith.constant dense<0.000000e+00> : vector<2x128xf32>
    %329 = tpu.matmul %327, %328, %cst_115 {dimension_numbers = #tpu.dot_dimension_numbers<[1], [0], [0], [1], [0, 0, 1, 1], [], []>} : vector<2x32xf32>, vector<32x128xf32>, vector<2x128xf32> -> vector<2x128xf32>
    %c0_116 = arith.constant 0 : index
    %c0_117 = arith.constant 0 : index
    %330 = vector.load %arg11[%c0_116, %c0_117] : memref<1x128xf32, #tpu.memory_space<vmem>>, vector<1x128xf32>
    %331 = vector.broadcast %330 : vector<1x128xf32> to vector<2x128xf32>
    %332 = arith.addf %329, %331 : vector<2x128xf32>
    %333 = vector.extract_strided_slice %332 {offsets = [0, 0], sizes = [2, 16], strides = [1, 1]} : vector<2x128xf32> to vector<2x16xf32>
    %334 = arith.negf %333 : vector<2x16xf32>
    %335 = math.exp %334 : vector<2x16xf32>
    %cst_118 = arith.constant 1.000000e+00 : f32
    %336 = vector.broadcast %cst_118 : f32 to vector<2x16xf32>
    %337 = arith.addf %336, %335 : vector<2x16xf32>
    %338 = arith.divf %336, %337 : vector<2x16xf32>
    %339 = vector.extract_strided_slice %332 {offsets = [0, 32], sizes = [2, 16], strides = [1, 1]} : vector<2x128xf32> to vector<2x16xf32>
    %340 = math.tanh %339 : vector<2x16xf32>
    %341 = vector.extract_strided_slice %332 {offsets = [0, 48], sizes = [2, 16], strides = [1, 1]} : vector<2x128xf32> to vector<2x16xf32>
    %342 = arith.negf %341 : vector<2x16xf32>
    %343 = math.exp %342 : vector<2x16xf32>
    %cst_119 = arith.constant 1.000000e+00 : f32
    %344 = vector.broadcast %cst_119 : f32 to vector<2x16xf32>
    %345 = arith.addf %344, %343 : vector<2x16xf32>
    %346 = arith.divf %344, %345 : vector<2x16xf32>
    %347 = arith.mulf %338, %340 : vector<2x16xf32>
    %348 = math.tanh %347 : vector<2x16xf32>
    %349 = arith.mulf %346, %348 : vector<2x16xf32>
    %350 = vector.extract_strided_slice %332 {offsets = [0, 64], sizes = [2, 16], strides = [1, 1]} : vector<2x128xf32> to vector<2x16xf32>
    %351 = arith.negf %350 : vector<2x16xf32>
    %352 = math.exp %351 : vector<2x16xf32>
    %cst_120 = arith.constant 1.000000e+00 : f32
    %353 = vector.broadcast %cst_120 : f32 to vector<2x16xf32>
    %354 = arith.addf %353, %352 : vector<2x16xf32>
    %355 = arith.divf %353, %354 : vector<2x16xf32>
    %356 = vector.extract_strided_slice %332 {offsets = [0, 96], sizes = [2, 16], strides = [1, 1]} : vector<2x128xf32> to vector<2x16xf32>
    %357 = math.tanh %356 : vector<2x16xf32>
    %358 = vector.extract_strided_slice %332 {offsets = [0, 112], sizes = [2, 16], strides = [1, 1]} : vector<2x128xf32> to vector<2x16xf32>
    %359 = arith.negf %358 : vector<2x16xf32>
    %360 = math.exp %359 : vector<2x16xf32>
    %cst_121 = arith.constant 1.000000e+00 : f32
    %361 = vector.broadcast %cst_121 : f32 to vector<2x16xf32>
    %362 = arith.addf %361, %360 : vector<2x16xf32>
    %363 = arith.divf %361, %362 : vector<2x16xf32>
    %364 = arith.mulf %355, %357 : vector<2x16xf32>
    %365 = math.tanh %364 : vector<2x16xf32>
    %366 = arith.mulf %363, %365 : vector<2x16xf32>
    %c0_122 = arith.constant 0 : index
    %c0_123 = arith.constant 0 : index
    %367 = vector.load %arg12[%c0_122, %c0_123] : memref<32x128xf32, #tpu.memory_space<vmem>>, vector<32x128xf32>
    %368 = vector.extract_strided_slice %367 {offsets = [0, 0], sizes = [16, 128], strides = [1, 1]} : vector<32x128xf32> to vector<16x128xf32>
    %cst_124 = arith.constant dense<0.000000e+00> : vector<2x128xf32>
    %369 = tpu.matmul %349, %368, %cst_124 {dimension_numbers = #tpu.dot_dimension_numbers<[1], [0], [0], [1], [0, 0, 1, 1], [], []>} : vector<2x16xf32>, vector<16x128xf32>, vector<2x128xf32> -> vector<2x128xf32>
    %370 = vector.extract_strided_slice %367 {offsets = [16, 0], sizes = [16, 128], strides = [1, 1]} : vector<32x128xf32> to vector<16x128xf32>
    %cst_125 = arith.constant dense<0.000000e+00> : vector<2x128xf32>
    %371 = tpu.matmul %366, %370, %cst_125 {dimension_numbers = #tpu.dot_dimension_numbers<[1], [0], [0], [1], [0, 0, 1, 1], [], []>} : vector<2x16xf32>, vector<16x128xf32>, vector<2x128xf32> -> vector<2x128xf32>
    %372 = arith.addf %369, %371 : vector<2x128xf32>
    %c0_126 = arith.constant 0 : index
    %c0_127 = arith.constant 0 : index
    %373 = vector.load %arg13[%c0_126, %c0_127] : memref<1x128xf32, #tpu.memory_space<vmem>>, vector<1x128xf32>
    %374 = vector.broadcast %373 : vector<1x128xf32> to vector<2x128xf32>
    %375 = arith.addf %372, %374 : vector<2x128xf32>
    %c0_128 = arith.constant 0 : index
    %c0_129 = arith.constant 0 : index
    %376 = vector.load %arg14[%c0_128, %c0_129] : memref<2x128xf32, #tpu.memory_space<vmem>>, vector<2x128xf32>
    tpu.vector_store %arg14[%c0_128, %c0_129], %375 {strides = array<i32>} : memref<2x128xf32, #tpu.memory_space<vmem>>, vector<2x128xf32>,
    return
  }
}

</mosaic_0001>

<llo_original>
// kernel: tpu_custom_call.1
$region0: #{tpu_custom_call.1}
  #allocation0 [shape = 'u32[]', space=smem, size = 0x4, offset = 0x4, fixed_abs, tag = 'smem constant byte address 0x4 - core index']
  #allocation1 [shape = 'u32[144,128]{1,0:T(1,128)}', space=vmem, size = 0x12000, scoped, tag = 'internal scratch']
  %s0 = inlined_call_operand.vmem [shape: f32[2,8,32], index: 0, kind: input, shape index: {}]
  %s1 = inlined_call_operand.vmem [shape: f32[2,8], index: 1, kind: input, shape index: {}]
  %s2 = inlined_call_operand.vmem [shape: f32[2,32], index: 2, kind: input, shape index: {}]
  %s3 = inlined_call_operand.vmem [shape: f32[2,32,96], index: 3, kind: input, shape index: {}]
  %s4 = inlined_call_operand.vmem [shape: f32[2,1,96], index: 4, kind: input, shape index: {}]
  %s5 = inlined_call_operand.vmem [shape: f32[2,32,32], index: 5, kind: input, shape index: {}]
  %s6 = inlined_call_operand.vmem [shape: f32[2,32,128], index: 6, kind: input, shape index: {}]
  %s7 = inlined_call_operand.vmem [shape: f32[2,1,128], index: 7, kind: input, shape index: {}]
  %s8 = inlined_call_operand.vmem [shape: f32[2,128,32], index: 8, kind: input, shape index: {}]
  %s9 = inlined_call_operand.vmem [shape: f32[2,6,32], index: 9, kind: input, shape index: {}]
  %s10 = inlined_call_operand.vmem [shape: f32[32,128], index: 10, kind: input, shape index: {}]
  %s11 = inlined_call_operand.vmem [shape: f32[1,128], index: 11, kind: input, shape index: {}]
  %s12 = inlined_call_operand.vmem [shape: f32[32,128], index: 12, kind: input, shape index: {}]
  %s13 = inlined_call_operand.vmem [shape: f32[1,128], index: 13, kind: input, shape index: {}]
  %s14 = inlined_call_operand.hbm [shape: f32[2,128], index: 14, kind: output, shape index: {}]
  %s15 = sld [smem:[#allocation0]]
  $region66: #{tpu_custom_call.1} parent=0
    _
  %s17 = ssub.s32 1, %s15
  %s18 = scalar_select 0, %s17, %s15
  $region1: #{tpu_custom_call.1} parent=0
    #allocation2 [shape = 'u8[1024]{0}', space=vmem, size = 0x400, scoped, tag = 'output window, operand 0, single buffered']
    #allocation3 [shape = 's32[1]{0}', space=sflag, size = 0x4, scoped, tag = 'scoped memory for tpu_custom_call.1']
    %19 = vsyncpa [#allocation3], 0
    // Predicated region
    $region2: #{tpu_custom_call.1} parent=1 // pred_check
      _
    $region3: #{tpu_custom_call.1} parent=1 // pred_check_branch
      %21 = sbr.rel (0) target = $region5
    $region4: #{tpu_custom_call.1} parent=1 // pred_region
      _
    $region5: #{tpu_custom_call.1} parent=1 // pred_fallthru
      _
    // Predicated region
    $region6: #{tpu_custom_call.1} parent=1 // pred_check
      _
    $region7: #{tpu_custom_call.1} parent=1 // pred_check_branch
      %23 = sbr.rel (0) target = $region9
    $region8: #{tpu_custom_call.1} parent=1 // pred_region
      _
    $region9: #{tpu_custom_call.1} parent=1 // pred_fallthru
      _
    // Predicated region
    $region10: #{tpu_custom_call.1} parent=1 // pred_check
      _
    $region11: #{tpu_custom_call.1} parent=1 // pred_check_branch
      %25 = sbr.rel (0) target = $region13
    $region12: #{tpu_custom_call.1} parent=1 // pred_region
      _
    $region13: #{tpu_custom_call.1} parent=1 // pred_fallthru
      _
    // Predicated region
    $region14: #{tpu_custom_call.1} parent=1 // pred_check
      _
    $region15: #{tpu_custom_call.1} parent=1 // pred_check_branch
      %27 = sbr.rel (0) target = $region17
    $region16: #{tpu_custom_call.1} parent=1 // pred_region
      _
    $region17: #{tpu_custom_call.1} parent=1 // pred_fallthru
      _
    // Predicated region
    $region18: #{tpu_custom_call.1} parent=1 // pred_check
      _
    $region19: #{tpu_custom_call.1} parent=1 // pred_check_branch
      %29 = sbr.rel (0) target = $region21
    $region20: #{tpu_custom_call.1} parent=1 // pred_region
      _
    $region21: #{tpu_custom_call.1} parent=1 // pred_fallthru
      _
    // Predicated region
    $region22: #{tpu_custom_call.1} parent=1 // pred_check
      _
    $region23: #{tpu_custom_call.1} parent=1 // pred_check_branch
      %31 = sbr.rel (0) target = $region25
    $region24: #{tpu_custom_call.1} parent=1 // pred_region
      _
    $region25: #{tpu_custom_call.1} parent=1 // pred_fallthru
      _
    // Predicated region
    $region26: #{tpu_custom_call.1} parent=1 // pred_check
      _
    $region27: #{tpu_custom_call.1} parent=1 // pred_check_branch
      %33 = sbr.rel (0) target = $region29
    $region28: #{tpu_custom_call.1} parent=1 // pred_region
      _
    $region29: #{tpu_custom_call.1} parent=1 // pred_fallthru
      _
    // Predicated region
    $region30: #{tpu_custom_call.1} parent=1 // pred_check
      _
    $region31: #{tpu_custom_call.1} parent=1 // pred_check_branch
      %35 = sbr.rel (0) target = $region33
    $region32: #{tpu_custom_call.1} parent=1 // pred_region
      _
    $region33: #{tpu_custom_call.1} parent=1 // pred_fallthru
      _
    // Predicated region
    $region34: #{tpu_custom_call.1} parent=1 // pred_check
      _
    $region35: #{tpu_custom_call.1} parent=1 // pred_check_branch
      %37 = sbr.rel (0) target = $region37
    $region36: #{tpu_custom_call.1} parent=1 // pred_region
      _
    $region37: #{tpu_custom_call.1} parent=1 // pred_fallthru
      _
    // Predicated region
    $region38: #{tpu_custom_call.1} parent=1 // pred_check
      _
    $region39: #{tpu_custom_call.1} parent=1 // pred_check_branch
      %39 = sbr.rel (0) target = $region41
    $region40: #{tpu_custom_call.1} parent=1 // pred_region
      _
    $region41: #{tpu_custom_call.1} parent=1 // pred_fallthru
      _
    // Predicated region
    $region42: #{tpu_custom_call.1} parent=1 // pred_check
      _
    $region43: #{tpu_custom_call.1} parent=1 // pred_check_branch
      %41 = sbr.rel (0) target = $region45
    $region44: #{tpu_custom_call.1} parent=1 // pred_region
      _
    $region45: #{tpu_custom_call.1} parent=1 // pred_fallthru
      _
    // Predicated region
    $region46: #{tpu_custom_call.1} parent=1 // pred_check
      _
    $region47: #{tpu_custom_call.1} parent=1 // pred_check_branch
      %43 = sbr.rel (0) target = $region49
    $region48: #{tpu_custom_call.1} parent=1 // pred_region
      _
    $region49: #{tpu_custom_call.1} parent=1 // pred_fallthru
      _
    // Predicated region
    $region50: #{tpu_custom_call.1} parent=1 // pred_check
      _
    $region51: #{tpu_custom_call.1} parent=1 // pred_check_branch
      %45 = sbr.rel (0) target = $region53
    $region52: #{tpu_custom_call.1} parent=1 // pred_region
      _
    $region53: #{tpu_custom_call.1} parent=1 // pred_fallthru
      _
    // Predicated region
    $region54: #{tpu_custom_call.1} parent=1 // pred_check
      _
    $region55: #{tpu_custom_call.1} parent=1 // pred_check_branch
      %47 = sbr.rel (0) target = $region57
    $region56: #{tpu_custom_call.1} parent=1 // pred_region
      _
    $region57: #{tpu_custom_call.1} parent=1 // pred_fallthru
      _
    %v48 = vld [vmem:[%s2] sm:$0x3]
    %v49 = vld [vmem:[%s0] sm:$0xff]
    %v50 = vld [vmem:[%s0 + $0x8] sm:$0xff]
    %vm51 = vcmask 261120
    %v52 = vsel %vm51, %v49, 0.0
    %53 = vadd.xlane.f32.xlu0 %v52
    %v54 = vpop.xlane.xlu0 %53
    %v55 = vsel %vm51, %v50, 0.0
    %56 = vadd.xlane.f32.xlu0 %v55
    %v57 = vpop.xlane.xlu0 %56
    %v58 = vrcp.pop 32.0
    %v59 = vmul.f32 %v54, %v58
    %v60 = vmul.f32 %v57, %v58
    %v61 = vsub.f32 %v49, %v59
    %v62 = vsub.f32 %v50, %v60
    %v63 = vmul.f32 %v61, %v61
    %v64 = vmul.f32 %v62, %v62
    %v65 = vsel %vm51, %v63, 0.0
    %66 = vadd.xlane.f32.xlu0 %v65
    %v67 = vpop.xlane.xlu0 %66
    %v68 = vsel %vm51, %v64, 0.0
    %69 = vadd.xlane.f32.xlu0 %v68
    %v70 = vpop.xlane.xlu0 %69
    %v71 = vmul.f32 %v67, %v58
    %v72 = vmul.f32 %v70, %v58
    %v73 = vadd.f32 %v71, 1e-12
    %v74 = vadd.f32 %v72, 1e-12
    %v75 = vrsqrt.pop %v73
    %v76 = vrsqrt.pop %v74
    %v77 = vmul.f32 %v61, %v75
    %v78 = vmul.f32 %v62, %v76
    %v79 = vlaneseq
    %v80 = vshrl.u32 %v79, 7
    %v81 = vsub.s32 0, %v80
    %v82 = vrot.slane %v48, %v81
    %v83 = vmul.f32 %v77, %v82
    %v84 = vmul.f32 %v78, %v82
    %v85 = vlaneseq
    %v86 = vshrl.u32 %v85, 7
    %v87 = vsub.s32 1, %v86
    %v88 = vrot.slane %v48, %v87
    %v89 = vadd.f32 %v83, %v88
    %v90 = vadd.f32 %v84, %v88
    %v91 = vld [vmem:[%s1] sm:$0x3]
    %v92 = vsub.f32 1.0, %v91
    %v93 = vmul.f32 %v92, -10000.0
    %v96 = vunpack.c.l.s4 1966171168
    %v97 = vunpack.c.0.s8 %v96
    %v98 = vlaneseq
    %v99 = vshrl.u32 %v98, 7
    %v100 = vsub.s32 %v97, %v99
    %v101 = vrot.slane %v93, %v100
    %v102 = vcombine.high %v101, %v101
    %v104 = vunpack.c.l.s4 1966171168
    %v105 = vunpack.c.0.s8 %v104
    %v106 = vlaneseq
    %v107 = vshrl.u32 %v106, 7
    %v108 = vsub.s32 %v105, %v107
    %v109 = vrot.slane %v101, %v108
    %v111 = vunpack.c.l.s4 1966171168
    %v112 = vunpack.c.0.s8 %v111
    %v113 = vlaneseq
    %v114 = vshrl.u32 %v113, 7
    %v115 = vsub.s32 %v112, %v114
    %v116 = vrot.slane %v102, %v115
    %v117 = vld [vmem:[%s3] sm:$0xff]
    %v118 = vld [vmem:[%s3 + $0x8] sm:$0xff]
    %v119 = vld [vmem:[%s3 + $0x10] sm:$0xff]
    %v120 = vld [vmem:[%s3 + $0x18] sm:$0xff]
    %v121 = vld [vmem:[%s4] sm:$0x1]
    %v122 = vld [vmem:[%s5] sm:$0xff]
    %v123 = vld [vmem:[%s5 + $0x8] sm:$0xff]
    %v124 = vld [vmem:[%s5 + $0x10] sm:$0xff]
    %v125 = vld [vmem:[%s5 + $0x18] sm:$0xff]
    %v126 = vld [vmem:[%s6] sm:$0xff]
    %v127 = vld [vmem:[%s6 + $0x8] sm:$0xff]
    %v128 = vld [vmem:[%s6 + $0x10] sm:$0xff]
    %v129 = vld [vmem:[%s6 + $0x18] sm:$0xff]
    %v130 = vld [vmem:[%s7] sm:$0x1]
    %v131 = vld [vmem:[%s8] sm:$0xff]
    %v132 = vld [vmem:[%s8 + $0x8] sm:$0xff]
    %v133 = vld [vmem:[%s8 + $0x10] sm:$0xff]
    %v134 = vld [vmem:[%s8 + $0x18] sm:$0xff]
    %v135 = vld [vmem:[%s8 + $0x20] sm:$0xff]
    %v136 = vld [vmem:[%s8 + $0x28] sm:$0xff]
    %v137 = vld [vmem:[%s8 + $0x30] sm:$0xff]
    %v138 = vld [vmem:[%s8 + $0x38] sm:$0xff]
    %v139 = vld [vmem:[%s8 + $0x40] sm:$0xff]
    %v140 = vld [vmem:[%s8 + $0x48] sm:$0xff]
    %v141 = vld [vmem:[%s8 + $0x50] sm:$0xff]
    %v142 = vld [vmem:[%s8 + $0x58] sm:$0xff]
    %v143 = vld [vmem:[%s8 + $0x60] sm:$0xff]
    %v144 = vld [vmem:[%s8 + $0x68] sm:$0xff]
    %v145 = vld [vmem:[%s8 + $0x70] sm:$0xff]
    %v146 = vld [vmem:[%s8 + $0x78] sm:$0xff]
    %v147 = vld [vmem:[%s9] sm:$0x3f]
    %v149 = vlaneseq
    %v150 = vshrl.u32 %v149, 7
    %v151 = vsub.s32 0, %v150
    %v152 = vrot.slane %v121, %v151
    %v155 = vsel %vm51, %v89, 0
    %v158 = vsel %vm51, %v90, 0
    %160 = vmatprep.subr.mxu0 0.0
    %161 = vmatpush1.msra.mxu0 0.0
    %162 = vmatprep.subr.mxu0 0.0
    %163 = vmatpush1.msra.mxu0 0.0
    %164 = vmatprep.subr.mxu0 0.0
    %165 = vmatpush1.msra.mxu0 0.0
    %166 = vmatprep.subr.mxu0 0.0
    %167 = vmatpush1.msra.mxu0 0.0
    %168 = vmatprep.subr.mxu0 0.0
    %169 = vmatpush1.msra.mxu0 0.0
    %170 = vmatprep.subr.mxu0 0.0
    %171 = vmatpush1.msra.mxu0 0.0
    %172 = vmatprep.subr.mxu0 0.0
    %173 = vmatpush1.msra.mxu0 0.0
    %174 = vmatprep.subr.mxu0 0.0
    %175 = vmatpush1.msra.mxu0 0.0
    %176 = vmatprep.subr.mxu0 0.0
    %177 = vmatpush1.msra.mxu0 0.0
    %178 = vmatprep.subr.mxu0 0.0
    %179 = vmatpush1.msra.mxu0 0.0
    %180 = vmatprep.subr.mxu0 0.0
    %181 = vmatpush1.msra.mxu0 0.0
    %182 = vmatprep.subr.mxu0 0.0
    %183 = vmatpush1.msra.mxu0 0.0
    %184 = vmatprep.subr.mxu0 0.0
    %185 = vmatpush1.msra.mxu0 %v120
    %186 = vmatprep.subr.mxu0 0.0
    %187 = vmatpush1.msra.mxu0 %v119
    %188 = vmatprep.subr.mxu0 0.0
    %189 = vmatpush1.msra.mxu0 %v118
    %190 = vmatprep.subr.mxu0 0.0
    %191 = vmatpush1.msra.mxu0 %v117
    %192 = vmatprep.subr.mxu0 0.0
    %193 = vmatpush2.msra.mxu0 0.0
    %194 = vmatprep.subr.mxu0 0.0
    %195 = vmatpush2.msra.mxu0 0.0
    %196 = vmatprep.subr.mxu0 0.0
    %197 = vmatpush2.msra.mxu0 0.0
    %198 = vmatprep.subr.mxu0 0.0
    %199 = vmatpush2.msra.mxu0 0.0
    %200 = vmatprep.subr.mxu0 0.0
    %201 = vmatpush2.msra.mxu0 0.0
    %202 = vmatprep.subr.mxu0 0.0
    %203 = vmatpush2.msra.mxu0 0.0
    %204 = vmatprep.subr.mxu0 0.0
    %205 = vmatpush2.msra.mxu0 0.0
    %206 = vmatprep.subr.mxu0 0.0
    %207 = vmatpush2.msra.mxu0 0.0
    %208 = vmatprep.subr.mxu0 0.0
    %209 = vmatpush2.msra.mxu0 0.0
    %210 = vmatprep.subr.mxu0 0.0
    %211 = vmatpush2.msra.mxu0 0.0
    %212 = vmatprep.subr.mxu0 0.0
    %213 = vmatpush2.msra.mxu0 0.0
    %214 = vmatprep.subr.mxu0 0.0
    %215 = vmatpush2.msra.mxu0 0.0
    %216 = vmatprep.subr.mxu0 0.0
    %217 = vmatpush2.msra.mxu0 0.0
    %218 = vmatprep.subr.mxu0 0.0
    %219 = vmatpush2.msra.mxu0 0.0
    %220 = vmatprep.subr.mxu0 0.0
    %221 = vmatpush2.msra.mxu0 0.0
    %222 = vmatprep.subr.mxu0 0.0
    %223 = vmatpush2.msra.mxu0 0.0
    %224 = vmatprep.mubr.f32.mxu0 0.0
    %225 = vmatmul.mubr.f32.gmra.mxu0 %v155
    %v226 = vpop.f32.mrf.mxu0
    %v227 = vadd.f32 %v152, %v226
    %v228 = vpop.f32.mrf.mxu0
    %229 = vmatprep.mubr.f32.mxu0 0.0
    %230 = vmatmul.mubr.f32.gmra.mxu0 %v158
    %v231 = vpop.f32.mrf.mxu0
    %v232 = vadd.f32 %v152, %v231
    %v233 = vpop.f32.mrf.mxu0
    %234 = vdwg.mxu0
    %236 = vrot.lane.b32.xlu0 %v227, 96
    %v237 = vpop.permute.xlu0 %236
    %vm238 = vcmask 130048
    %v239 = vsel %vm238, %v227, 0
    %v241 = vsel %vm238, %v237, 0
    %243 = vmatprep.subr.mxu0 0.0
    %244 = vmatpush1.xpose.msra.mxu0 0.0
    %245 = vmatprep.subr.mxu0 0.0
    %246 = vmatpush1.xpose.msra.mxu0 0.0
    %247 = vmatprep.subr.mxu0 0.0
    %248 = vmatpush1.xpose.msra.mxu0 0.0
    %249 = vmatprep.subr.mxu0 0.0
    %250 = vmatpush1.xpose.msra.mxu0 0.0
    %251 = vmatprep.subr.mxu0 0.0
    %252 = vmatpush1.xpose.msra.mxu0 0.0
    %253 = vmatprep.subr.mxu0 0.0
    %254 = vmatpush1.xpose.msra.mxu0 0.0
    %255 = vmatprep.subr.mxu0 0.0
    %256 = vmatpush1.xpose.msra.mxu0 0.0
    %257 = vmatprep.subr.mxu0 0.0
    %258 = vmatpush1.xpose.msra.mxu0 0.0
    %259 = vmatprep.subr.mxu0 0.0
    %260 = vmatpush1.xpose.msra.mxu0 0.0
    %261 = vmatprep.subr.mxu0 0.0
    %262 = vmatpush1.xpose.msra.mxu0 0.0
    %263 = vmatprep.subr.mxu0 0.0
    %264 = vmatpush1.xpose.msra.mxu0 0.0
    %265 = vmatprep.subr.mxu0 0.0
    %266 = vmatpush1.xpose.msra.mxu0 0.0
    %267 = vmatprep.subr.mxu0 0.0
    %268 = vmatpush1.xpose.msra.mxu0 0.0
    %269 = vmatprep.subr.mxu0 0.0
    %270 = vmatpush1.xpose.msra.mxu0 0.0
    %271 = vmatprep.subr.mxu0 0.0
    %272 = vmatpush1.xpose.msra.mxu0 0.0
    %273 = vmatprep.subr.mxu0 0.0
    %274 = vmatpush1.xpose.msra.mxu0 %v241
    %275 = vmatprep.subr.mxu0 0.0
    %276 = vmatpush2.xpose.msra.mxu0 0.0
    %277 = vmatprep.subr.mxu0 0.0
    %278 = vmatpush2.xpose.msra.mxu0 0.0
    %279 = vmatprep.subr.mxu0 0.0
    %280 = vmatpush2.xpose.msra.mxu0 0.0
    %281 = vmatprep.subr.mxu0 0.0
    %282 = vmatpush2.xpose.msra.mxu0 0.0
    %283 = vmatprep.subr.mxu0 0.0
    %284 = vmatpush2.xpose.msra.mxu0 0.0
    %285 = vmatprep.subr.mxu0 0.0
    %286 = vmatpush2.xpose.msra.mxu0 0.0
    %287 = vmatprep.subr.mxu0 0.0
    %288 = vmatpush2.xpose.msra.mxu0 0.0
    %289 = vmatprep.subr.mxu0 0.0
    %290 = vmatpush2.xpose.msra.mxu0 0.0
    %291 = vmatprep.subr.mxu0 0.0
    %292 = vmatpush2.xpose.msra.mxu0 0.0
    %293 = vmatprep.subr.mxu0 0.0
    %294 = vmatpush2.xpose.msra.mxu0 0.0
    %295 = vmatprep.subr.mxu0 0.0
    %296 = vmatpush2.xpose.msra.mxu0 0.0
    %297 = vmatprep.subr.mxu0 0.0
    %298 = vmatpush2.xpose.msra.mxu0 0.0
    %299 = vmatprep.subr.mxu0 0.0
    %300 = vmatpush2.xpose.msra.mxu0 0.0
    %301 = vmatprep.subr.mxu0 0.0
    %302 = vmatpush2.xpose.msra.mxu0 0.0
    %303 = vmatprep.subr.mxu0 0.0
    %304 = vmatpush2.xpose.msra.mxu0 0.0
    %305 = vmatprep.subr.mxu0 0.0
    %306 = vmatpush2.xpose.msra.mxu0 0.0
    %307 = vmatprep.mubr.f32.mxu0 0.0
    %308 = vmatmul.mubr.f32.gmra.mxu0 %v239
    %v309 = vpop.f32.mrf.mxu0
    %v310 = vadd.f32 0.0, %v309
    %v311 = vpop.f32.mrf.mxu0
    %312 = vdwg.mxu0
    %314 = vrot.lane.b32.xlu0 %v232, 96
    %v315 = vpop.permute.xlu0 %314
    %v316 = vsel %vm238, %v232, 0
    %v318 = vsel %vm238, %v315, 0
    %320 = vmatprep.subr.mxu0 0.0
    %321 = vmatpush1.xpose.msra.mxu0 0.0
    %322 = vmatprep.subr.mxu0 0.0
    %323 = vmatpush1.xpose.msra.mxu0 0.0
    %324 = vmatprep.subr.mxu0 0.0
    %325 = vmatpush1.xpose.msra.mxu0 0.0
    %326 = vmatprep.subr.mxu0 0.0
    %327 = vmatpush1.xpose.msra.mxu0 0.0
    %328 = vmatprep.subr.mxu0 0.0
    %329 = vmatpush1.xpose.msra.mxu0 0.0
    %330 = vmatprep.subr.mxu0 0.0
    %331 = vmatpush1.xpose.msra.mxu0 0.0
    %332 = vmatprep.subr.mxu0 0.0
    %333 = vmatpush1.xpose.msra.mxu0 0.0
    %334 = vmatprep.subr.mxu0 0.0
    %335 = vmatpush1.xpose.msra.mxu0 0.0
    %336 = vmatprep.subr.mxu0 0.0
    %337 = vmatpush1.xpose.msra.mxu0 0.0
    %338 = vmatprep.subr.mxu0 0.0
    %339 = vmatpush1.xpose.msra.mxu0 0.0
    %340 = vmatprep.subr.mxu0 0.0
    %341 = vmatpush1.xpose.msra.mxu0 0.0
    %342 = vmatprep.subr.mxu0 0.0
    %343 = vmatpush1.xpose.msra.mxu0 0.0
    %344 = vmatprep.subr.mxu0 0.0
    %345 = vmatpush1.xpose.msra.mxu0 0.0
    %346 = vmatprep.subr.mxu0 0.0
    %347 = vmatpush1.xpose.msra.mxu0 0.0
    %348 = vmatprep.subr.mxu0 0.0
    %349 = vmatpush1.xpose.msra.mxu0 0.0
    %350 = vmatprep.subr.mxu0 0.0
    %351 = vmatpush1.xpose.msra.mxu0 %v318
    %352 = vmatprep.subr.mxu0 0.0
    %353 = vmatpush2.xpose.msra.mxu0 0.0
    %354 = vmatprep.subr.mxu0 0.0
    %355 = vmatpush2.xpose.msra.mxu0 0.0
    %356 = vmatprep.subr.mxu0 0.0
    %357 = vmatpush2.xpose.msra.mxu0 0.0
    %358 = vmatprep.subr.mxu0 0.0
    %359 = vmatpush2.xpose.msra.mxu0 0.0
    %360 = vmatprep.subr.mxu0 0.0
    %361 = vmatpush2.xpose.msra.mxu0 0.0
    %362 = vmatprep.subr.mxu0 0.0
    %363 = vmatpush2.xpose.msra.mxu0 0.0
    %364 = vmatprep.subr.mxu0 0.0
    %365 = vmatpush2.xpose.msra.mxu0 0.0
    %366 = vmatprep.subr.mxu0 0.0
    %367 = vmatpush2.xpose.msra.mxu0 0.0
    %368 = vmatprep.subr.mxu0 0.0
    %369 = vmatpush2.xpose.msra.mxu0 0.0
    %370 = vmatprep.subr.mxu0 0.0
    %371 = vmatpush2.xpose.msra.mxu0 0.0
    %372 = vmatprep.subr.mxu0 0.0
    %373 = vmatpush2.xpose.msra.mxu0 0.0
    %374 = vmatprep.subr.mxu0 0.0
    %375 = vmatpush2.xpose.msra.mxu0 0.0
    %376 = vmatprep.subr.mxu0 0.0
    %377 = vmatpush2.xpose.msra.mxu0 0.0
    %378 = vmatprep.subr.mxu0 0.0
    %379 = vmatpush2.xpose.msra.mxu0 0.0
    %380 = vmatprep.subr.mxu0 0.0
    %381 = vmatpush2.xpose.msra.mxu0 0.0
    %382 = vmatprep.subr.mxu0 0.0
    %383 = vmatpush2.xpose.msra.mxu0 0.0
    %384 = vmatprep.mubr.f32.mxu0 0.0
    %385 = vmatmul.mubr.f32.gmra.mxu0 %v316
    %v386 = vpop.f32.mrf.mxu0
    %v387 = vadd.f32 0.0, %v386
    %v388 = vpop.f32.mrf.mxu0
    %389 = vdwg.mxu0
    %v390 = vmul.f32 %v310, 0.25
    %v391 = vmul.f32 %v387, 0.25
    %v392 = vlaneseq
    %v393 = vshrl.u32 %v392, 7
    %v394 = vsub.s32 0, %v393
    %v395 = vrot.slane %v109, %v394
    %v396 = vlaneseq
    %v397 = vshrl.u32 %v396, 7
    %v398 = vsub.s32 0, %v397
    %v399 = vrot.slane %v116, %v398
    %v402 = vadd.f32 %v390, %v395
    %v403 = vadd.f32 %v391, %v399
    %vm404 = vcmask 64512
    %v405 = vsel %vm404, %v402, -inf
    %406 = vmax.xlane.f32.xlu0 %v405
    %v407 = vpop.xlane.xlu0 %406
    %v408 = vsel %vm404, %v403, -inf
    %409 = vmax.xlane.f32.xlu0 %v408
    %v410 = vpop.xlane.xlu0 %409
    %v411 = vsub.f32 %v402, %v407
    %v412 = vsub.f32 %v403, %v410
    %v413 = vmul.f32 %v411, 1.442695
    %v414 = vpow.pop %v413
    %v415 = vmul.f32 %v412, 1.442695
    %v416 = vpow.pop %v415
    %v417 = vsel %vm404, %v414, 0.0
    %418 = vadd.xlane.f32.xlu0 %v417
    %v419 = vpop.xlane.xlu0 %418
    %v420 = vsel %vm404, %v416, 0.0
    %421 = vadd.xlane.f32.xlu0 %v420
    %v422 = vpop.xlane.xlu0 %421
    %v423 = vrcp.pop %v419
    %v424 = vrcp.pop %v422
    %v425 = vmul.f32 %v414, %v423
    %v426 = vmul.f32 %v416, %v424
    %427 = vrot.lane.b32.xlu0 %v227, 64
    %v428 = vpop.permute.xlu0 %427
    %v431 = vsel %vm404, %v425, 0
    %433 = vmatprep.subr.mxu0 0.0
    %434 = vmatpush1.msra.mxu0 0.0
    %435 = vmatprep.subr.mxu0 0.0
    %436 = vmatpush1.msra.mxu0 0.0
    %437 = vmatprep.subr.mxu0 0.0
    %438 = vmatpush1.msra.mxu0 0.0
    %439 = vmatprep.subr.mxu0 0.0
    %440 = vmatpush1.msra.mxu0 0.0
    %441 = vmatprep.subr.mxu0 0.0
    %442 = vmatpush1.msra.mxu0 0.0
    %443 = vmatprep.subr.mxu0 0.0
    %444 = vmatpush1.msra.mxu0 0.0
    %445 = vmatprep.subr.mxu0 0.0
    %446 = vmatpush1.msra.mxu0 0.0
    %447 = vmatprep.subr.mxu0 0.0
    %448 = vmatpush1.msra.mxu0 0.0
    %449 = vmatprep.subr.mxu0 0.0
    %450 = vmatpush1.msra.mxu0 0.0
    %451 = vmatprep.subr.mxu0 0.0
    %452 = vmatpush1.msra.mxu0 0.0
    %453 = vmatprep.subr.mxu0 0.0
    %454 = vmatpush1.msra.mxu0 0.0
    %455 = vmatprep.subr.mxu0 0.0
    %456 = vmatpush1.msra.mxu0 0.0
    %457 = vmatprep.subr.mxu0 0.0
    %458 = vmatpush1.msra.mxu0 0.0
    %459 = vmatprep.subr.mxu0 0.0
    %460 = vmatpush1.msra.mxu0 0.0
    %461 = vmatprep.subr.mxu0 0.0
    %462 = vmatpush1.msra.mxu0 0.0
    %463 = vmatprep.subr.mxu0 0.0
    %464 = vmatpush1.msra.mxu0 %v428
    %465 = vmatprep.subr.mxu0 0.0
    %466 = vmatpush2.msra.mxu0 0.0
    %467 = vmatprep.subr.mxu0 0.0
    %468 = vmatpush2.msra.mxu0 0.0
    %469 = vmatprep.subr.mxu0 0.0
    %470 = vmatpush2.msra.mxu0 0.0
    %471 = vmatprep.subr.mxu0 0.0
    %472 = vmatpush2.msra.mxu0 0.0
    %473 = vmatprep.subr.mxu0 0.0
    %474 = vmatpush2.msra.mxu0 0.0
    %475 = vmatprep.subr.mxu0 0.0
    %476 = vmatpush2.msra.mxu0 0.0
    %477 = vmatprep.subr.mxu0 0.0
    %478 = vmatpush2.msra.mxu0 0.0
    %479 = vmatprep.subr.mxu0 0.0
    %480 = vmatpush2.msra.mxu0 0.0
    %481 = vmatprep.subr.mxu0 0.0
    %482 = vmatpush2.msra.mxu0 0.0
    %483 = vmatprep.subr.mxu0 0.0
    %484 = vmatpush2.msra.mxu0 0.0
    %485 = vmatprep.subr.mxu0 0.0
    %486 = vmatpush2.msra.mxu0 0.0
    %487 = vmatprep.subr.mxu0 0.0
    %488 = vmatpush2.msra.mxu0 0.0
    %489 = vmatprep.subr.mxu0 0.0
    %490 = vmatpush2.msra.mxu0 0.0
    %491 = vmatprep.subr.mxu0 0.0
    %492 = vmatpush2.msra.mxu0 0.0
    %493 = vmatprep.subr.mxu0 0.0
    %494 = vmatpush2.msra.mxu0 0.0
    %495 = vmatprep.subr.mxu0 0.0
    %496 = vmatpush2.msra.mxu0 0.0
    %497 = vmatprep.mubr.f32.mxu0 0.0
    %498 = vmatmul.mubr.f32.gmra.mxu0 %v431
    %v499 = vpop.f32.mrf.mxu0
    %v500 = vadd.f32 0.0, %v499
    %v501 = vpop.f32.mrf.mxu0
    %502 = vdwg.mxu0
    %503 = vrot.lane.b32.xlu0 %v232, 64
    %v504 = vpop.permute.xlu0 %503
    %v507 = vsel %vm404, %v426, 0
    %509 = vmatprep.subr.mxu0 0.0
    %510 = vmatpush1.msra.mxu0 0.0
    %511 = vmatprep.subr.mxu0 0.0
    %512 = vmatpush1.msra.mxu0 0.0
    %513 = vmatprep.subr.mxu0 0.0
    %514 = vmatpush1.msra.mxu0 0.0
    %515 = vmatprep.subr.mxu0 0.0
    %516 = vmatpush1.msra.mxu0 0.0
    %517 = vmatprep.subr.mxu0 0.0
    %518 = vmatpush1.msra.mxu0 0.0
    %519 = vmatprep.subr.mxu0 0.0
    %520 = vmatpush1.msra.mxu0 0.0
    %521 = vmatprep.subr.mxu0 0.0
    %522 = vmatpush1.msra.mxu0 0.0
    %523 = vmatprep.subr.mxu0 0.0
    %524 = vmatpush1.msra.mxu0 0.0
    %525 = vmatprep.subr.mxu0 0.0
    %526 = vmatpush1.msra.mxu0 0.0
    %527 = vmatprep.subr.mxu0 0.0
    %528 = vmatpush1.msra.mxu0 0.0
    %529 = vmatprep.subr.mxu0 0.0
    %530 = vmatpush1.msra.mxu0 0.0
    %531 = vmatprep.subr.mxu0 0.0
    %532 = vmatpush1.msra.mxu0 0.0
    %533 = vmatprep.subr.mxu0 0.0
    %534 = vmatpush1.msra.mxu0 0.0
    %535 = vmatprep.subr.mxu0 0.0
    %536 = vmatpush1.msra.mxu0 0.0
    %537 = vmatprep.subr.mxu0 0.0
    %538 = vmatpush1.msra.mxu0 0.0
    %539 = vmatprep.subr.mxu0 0.0
    %540 = vmatpush1.msra.mxu0 %v504
    %541 = vmatprep.subr.mxu0 0.0
    %542 = vmatpush2.msra.mxu0 0.0
    %543 = vmatprep.subr.mxu0 0.0
    %544 = vmatpush2.msra.mxu0 0.0
    %545 = vmatprep.subr.mxu0 0.0
    %546 = vmatpush2.msra.mxu0 0.0
    %547 = vmatprep.subr.mxu0 0.0
    %548 = vmatpush2.msra.mxu0 0.0
    %549 = vmatprep.subr.mxu0 0.0
    %550 = vmatpush2.msra.mxu0 0.0
    %551 = vmatprep.subr.mxu0 0.0
    %552 = vmatpush2.msra.mxu0 0.0
    %553 = vmatprep.subr.mxu0 0.0
    %554 = vmatpush2.msra.mxu0 0.0
    %555 = vmatprep.subr.mxu0 0.0
    %556 = vmatpush2.msra.mxu0 0.0
    %557 = vmatprep.subr.mxu0 0.0
    %558 = vmatpush2.msra.mxu0 0.0
    %559 = vmatprep.subr.mxu0 0.0
    %560 = vmatpush2.msra.mxu0 0.0
    %561 = vmatprep.subr.mxu0 0.0
    %562 = vmatpush2.msra.mxu0 0.0
    %563 = vmatprep.subr.mxu0 0.0
    %564 = vmatpush2.msra.mxu0 0.0
    %565 = vmatprep.subr.mxu0 0.0
    %566 = vmatpush2.msra.mxu0 0.0
    %567 = vmatprep.subr.mxu0 0.0
    %568 = vmatpush2.msra.mxu0 0.0
    %569 = vmatprep.subr.mxu0 0.0
    %570 = vmatpush2.msra.mxu0 0.0
    %571 = vmatprep.subr.mxu0 0.0
    %572 = vmatpush2.msra.mxu0 0.0
    %573 = vmatprep.mubr.f32.mxu0 0.0
    %574 = vmatmul.mubr.f32.gmra.mxu0 %v507
    %v575 = vpop.f32.mrf.mxu0
    %v576 = vadd.f32 0.0, %v575
    %v577 = vpop.f32.mrf.mxu0
    %578 = vdwg.mxu0
    %579 = vrot.lane.b32.xlu0 %v227, 112
    %v580 = vpop.permute.xlu0 %579
    %581 = vrot.lane.b32.xlu0 %v227, 80
    %v582 = vpop.permute.xlu0 %581
    %v583 = vsel %vm238, %v580, 0
    %v585 = vsel %vm238, %v582, 0
    %587 = vmatprep.subr.mxu0 0.0
    %588 = vmatpush1.xpose.msra.mxu0 0.0
    %589 = vmatprep.subr.mxu0 0.0
    %590 = vmatpush1.xpose.msra.mxu0 0.0
    %591 = vmatprep.subr.mxu0 0.0
    %592 = vmatpush1.xpose.msra.mxu0 0.0
    %593 = vmatprep.subr.mxu0 0.0
    %594 = vmatpush1.xpose.msra.mxu0 0.0
    %595 = vmatprep.subr.mxu0 0.0
    %596 = vmatpush1.xpose.msra.mxu0 0.0
    %597 = vmatprep.subr.mxu0 0.0
    %598 = vmatpush1.xpose.msra.mxu0 0.0
    %599 = vmatprep.subr.mxu0 0.0
    %600 = vmatpush1.xpose.msra.mxu0 0.0
    %601 = vmatprep.subr.mxu0 0.0
    %602 = vmatpush1.xpose.msra.mxu0 0.0
    %603 = vmatprep.subr.mxu0 0.0
    %604 = vmatpush1.xpose.msra.mxu0 0.0
    %605 = vmatprep.subr.mxu0 0.0
    %606 = vmatpush1.xpose.msra.mxu0 0.0
    %607 = vmatprep.subr.mxu0 0.0
    %608 = vmatpush1.xpose.msra.mxu0 0.0
    %609 = vmatprep.subr.mxu0 0.0
    %610 = vmatpush1.xpose.msra.mxu0 0.0
    %611 = vmatprep.subr.mxu0 0.0
    %612 = vmatpush1.xpose.msra.mxu0 0.0
    %613 = vmatprep.subr.mxu0 0.0
    %614 = vmatpush1.xpose.msra.mxu0 0.0
    %615 = vmatprep.subr.mxu0 0.0
    %616 = vmatpush1.xpose.msra.mxu0 0.0
    %617 = vmatprep.subr.mxu0 0.0
    %618 = vmatpush1.xpose.msra.mxu0 %v585
    %619 = vmatprep.subr.mxu0 0.0
    %620 = vmatpush2.xpose.msra.mxu0 0.0
    %621 = vmatprep.subr.mxu0 0.0
    %622 = vmatpush2.xpose.msra.mxu0 0.0
    %623 = vmatprep.subr.mxu0 0.0
    %624 = vmatpush2.xpose.msra.mxu0 0.0
    %625 = vmatprep.subr.mxu0 0.0
    %626 = vmatpush2.xpose.msra.mxu0 0.0
    %627 = vmatprep.subr.mxu0 0.0
    %628 = vmatpush2.xpose.msra.mxu0 0.0
    %629 = vmatprep.subr.mxu0 0.0
    %630 = vmatpush2.xpose.msra.mxu0 0.0
    %631 = vmatprep.subr.mxu0 0.0
    %632 = vmatpush2.xpose.msra.mxu0 0.0
    %633 = vmatprep.subr.mxu0 0.0
    %634 = vmatpush2.xpose.msra.mxu0 0.0
    %635 = vmatprep.subr.mxu0 0.0
    %636 = vmatpush2.xpose.msra.mxu0 0.0
    %637 = vmatprep.subr.mxu0 0.0
    %638 = vmatpush2.xpose.msra.mxu0 0.0
    %639 = vmatprep.subr.mxu0 0.0
    %640 = vmatpush2.xpose.msra.mxu0 0.0
    %641 = vmatprep.subr.mxu0 0.0
    %642 = vmatpush2.xpose.msra.mxu0 0.0
    %643 = vmatprep.subr.mxu0 0.0
    %644 = vmatpush2.xpose.msra.mxu0 0.0
    %645 = vmatprep.subr.mxu0 0.0
    %646 = vmatpush2.xpose.msra.mxu0 0.0
    %647 = vmatprep.subr.mxu0 0.0
    %648 = vmatpush2.xpose.msra.mxu0 0.0
    %649 = vmatprep.subr.mxu0 0.0
    %650 = vmatpush2.xpose.msra.mxu0 0.0
    %651 = vmatprep.mubr.f32.mxu0 0.0
    %652 = vmatmul.mubr.f32.gmra.mxu0 %v583
    %v653 = vpop.f32.mrf.mxu0
    %v654 = vadd.f32 0.0, %v653
    %v655 = vpop.f32.mrf.mxu0
    %656 = vdwg.mxu0
    %657 = vrot.lane.b32.xlu0 %v232, 112
    %v658 = vpop.permute.xlu0 %657
    %659 = vrot.lane.b32.xlu0 %v232, 80
    %v660 = vpop.permute.xlu0 %659
    %v661 = vsel %vm238, %v658, 0
    %v663 = vsel %vm238, %v660, 0
    %665 = vmatprep.subr.mxu0 0.0
    %666 = vmatpush1.xpose.msra.mxu0 0.0
    %667 = vmatprep.subr.mxu0 0.0
    %668 = vmatpush1.xpose.msra.mxu0 0.0
    %669 = vmatprep.subr.mxu0 0.0
    %670 = vmatpush1.xpose.msra.mxu0 0.0
    %671 = vmatprep.subr.mxu0 0.0
    %672 = vmatpush1.xpose.msra.mxu0 0.0
    %673 = vmatprep.subr.mxu0 0.0
    %674 = vmatpush1.xpose.msra.mxu0 0.0
    %675 = vmatprep.subr.mxu0 0.0
    %676 = vmatpush1.xpose.msra.mxu0 0.0
    %677 = vmatprep.subr.mxu0 0.0
    %678 = vmatpush1.xpose.msra.mxu0 0.0
    %679 = vmatprep.subr.mxu0 0.0
    %680 = vmatpush1.xpose.msra.mxu0 0.0
    %681 = vmatprep.subr.mxu0 0.0
    %682 = vmatpush1.xpose.msra.mxu0 0.0
    %683 = vmatprep.subr.mxu0 0.0
    %684 = vmatpush1.xpose.msra.mxu0 0.0
    %685 = vmatprep.subr.mxu0 0.0
    %686 = vmatpush1.xpose.msra.mxu0 0.0
    %687 = vmatprep.subr.mxu0 0.0
    %688 = vmatpush1.xpose.msra.mxu0 0.0
    %689 = vmatprep.subr.mxu0 0.0
    %690 = vmatpush1.xpose.msra.mxu0 0.0
    %691 = vmatprep.subr.mxu0 0.0
    %692 = vmatpush1.xpose.msra.mxu0 0.0
    %693 = vmatprep.subr.mxu0 0.0
    %694 = vmatpush1.xpose.msra.mxu0 0.0
    %695 = vmatprep.subr.mxu0 0.0
    %696 = vmatpush1.xpose.msra.mxu0 %v663
    %697 = vmatprep.subr.mxu0 0.0
    %698 = vmatpush2.xpose.msra.mxu0 0.0
    %699 = vmatprep.subr.mxu0 0.0
    %700 = vmatpush2.xpose.msra.mxu0 0.0
    %701 = vmatprep.subr.mxu0 0.0
    %702 = vmatpush2.xpose.msra.mxu0 0.0
    %703 = vmatprep.subr.mxu0 0.0
    %704 = vmatpush2.xpose.msra.mxu0 0.0
    %705 = vmatprep.subr.mxu0 0.0
    %706 = vmatpush2.xpose.msra.mxu0 0.0
    %707 = vmatprep.subr.mxu0 0.0
    %708 = vmatpush2.xpose.msra.mxu0 0.0
    %709 = vmatprep.subr.mxu0 0.0
    %710 = vmatpush2.xpose.msra.mxu0 0.0
    %711 = vmatprep.subr.mxu0 0.0
    %712 = vmatpush2.xpose.msra.mxu0 0.0
    %713 = vmatprep.subr.mxu0 0.0
    %714 = vmatpush2.xpose.msra.mxu0 0.0
    %715 = vmatprep.subr.mxu0 0.0
    %716 = vmatpush2.xpose.msra.mxu0 0.0
    %717 = vmatprep.subr.mxu0 0.0
    %718 = vmatpush2.xpose.msra.mxu0 0.0
    %719 = vmatprep.subr.mxu0 0.0
    %720 = vmatpush2.xpose.msra.mxu0 0.0
    %721 = vmatprep.subr.mxu0 0.0
    %722 = vmatpush2.xpose.msra.mxu0 0.0
    %723 = vmatprep.subr.mxu0 0.0
    %724 = vmatpush2.xpose.msra.mxu0 0.0
    %725 = vmatprep.subr.mxu0 0.0
    %726 = vmatpush2.xpose.msra.mxu0 0.0
    %727 = vmatprep.subr.mxu0 0.0
    %728 = vmatpush2.xpose.msra.mxu0 0.0
    %729 = vmatprep.mubr.f32.mxu0 0.0
    %730 = vmatmul.mubr.f32.gmra.mxu0 %v661
    %v731 = vpop.f32.mrf.mxu0
    %v732 = vadd.f32 0.0, %v731
    %v733 = vpop.f32.mrf.mxu0
    %734 = vdwg.mxu0
    %v735 = vmul.f32 %v654, 0.25
    %v736 = vmul.f32 %v732, 0.25
    %v737 = vadd.f32 %v735, %v395
    %v738 = vadd.f32 %v736, %v399
    %v739 = vsel %vm404, %v737, -inf
    %740 = vmax.xlane.f32.xlu0 %v739
    %v741 = vpop.xlane.xlu0 %740
    %v742 = vsel %vm404, %v738, -inf
    %743 = vmax.xlane.f32.xlu0 %v742
    %v744 = vpop.xlane.xlu0 %743
    %v745 = vsub.f32 %v737, %v741
    %v746 = vsub.f32 %v738, %v744
    %v747 = vmul.f32 %v745, 1.442695
    %v748 = vpow.pop %v747
    %v749 = vmul.f32 %v746, 1.442695
    %v750 = vpow.pop %v749
    %v751 = vsel %vm404, %v748, 0.0
    %752 = vadd.xlane.f32.xlu0 %v751
    %v753 = vpop.xlane.xlu0 %752
    %v754 = vsel %vm404, %v750, 0.0
    %755 = vadd.xlane.f32.xlu0 %v754
    %v756 = vpop.xlane.xlu0 %755
    %v757 = vrcp.pop %v753
    %v758 = vrcp.pop %v756
    %v759 = vmul.f32 %v748, %v757
    %v760 = vmul.f32 %v750, %v758
    %761 = vrot.lane.b32.xlu0 %v227, 48
    %v762 = vpop.permute.xlu0 %761
    %v765 = vsel %vm404, %v759, 0
    %767 = vmatprep.subr.mxu0 0.0
    %768 = vmatpush1.msra.mxu0 0.0
    %769 = vmatprep.subr.mxu0 0.0
    %770 = vmatpush1.msra.mxu0 0.0
    %771 = vmatprep.subr.mxu0 0.0
    %772 = vmatpush1.msra.mxu0 0.0
    %773 = vmatprep.subr.mxu0 0.0
    %774 = vmatpush1.msra.mxu0 0.0
    %775 = vmatprep.subr.mxu0 0.0
    %776 = vmatpush1.msra.mxu0 0.0
    %777 = vmatprep.subr.mxu0 0.0
    %778 = vmatpush1.msra.mxu0 0.0
    %779 = vmatprep.subr.mxu0 0.0
    %780 = vmatpush1.msra.mxu0 0.0
    %781 = vmatprep.subr.mxu0 0.0
    %782 = vmatpush1.msra.mxu0 0.0
    %783 = vmatprep.subr.mxu0 0.0
    %784 = vmatpush1.msra.mxu0 0.0
    %785 = vmatprep.subr.mxu0 0.0
    %786 = vmatpush1.msra.mxu0 0.0
    %787 = vmatprep.subr.mxu0 0.0
    %788 = vmatpush1.msra.mxu0 0.0
    %789 = vmatprep.subr.mxu0 0.0
    %790 = vmatpush1.msra.mxu0 0.0
    %791 = vmatprep.subr.mxu0 0.0
    %792 = vmatpush1.msra.mxu0 0.0
    %793 = vmatprep.subr.mxu0 0.0
    %794 = vmatpush1.msra.mxu0 0.0
    %795 = vmatprep.subr.mxu0 0.0
    %796 = vmatpush1.msra.mxu0 0.0
    %797 = vmatprep.subr.mxu0 0.0
    %798 = vmatpush1.msra.mxu0 %v762
    %799 = vmatprep.subr.mxu0 0.0
    %800 = vmatpush2.msra.mxu0 0.0
    %801 = vmatprep.subr.mxu0 0.0
    %802 = vmatpush2.msra.mxu0 0.0
    %803 = vmatprep.subr.mxu0 0.0
    %804 = vmatpush2.msra.mxu0 0.0
    %805 = vmatprep.subr.mxu0 0.0
    %806 = vmatpush2.msra.mxu0 0.0
    %807 = vmatprep.subr.mxu0 0.0
    %808 = vmatpush2.msra.mxu0 0.0
    %809 = vmatprep.subr.mxu0 0.0
    %810 = vmatpush2.msra.mxu0 0.0
    %811 = vmatprep.subr.mxu0 0.0
    %812 = vmatpush2.msra.mxu0 0.0
    %813 = vmatprep.subr.mxu0 0.0
    %814 = vmatpush2.msra.mxu0 0.0
    %815 = vmatprep.subr.mxu0 0.0
    %816 = vmatpush2.msra.mxu0 0.0
    %817 = vmatprep.subr.mxu0 0.0
    %818 = vmatpush2.msra.mxu0 0.0
    %819 = vmatprep.subr.mxu0 0.0
    %820 = vmatpush2.msra.mxu0 0.0
    %821 = vmatprep.subr.mxu0 0.0
    %822 = vmatpush2.msra.mxu0 0.0
    %823 = vmatprep.subr.mxu0 0.0
    %824 = vmatpush2.msra.mxu0 0.0
    %825 = vmatprep.subr.mxu0 0.0
    %826 = vmatpush2.msra.mxu0 0.0
    %827 = vmatprep.subr.mxu0 0.0
    %828 = vmatpush2.msra.mxu0 0.0
    %829 = vmatprep.subr.mxu0 0.0
    %830 = vmatpush2.msra.mxu0 0.0
    %831 = vmatprep.mubr.f32.mxu0 0.0
    %832 = vmatmul.mubr.f32.gmra.mxu0 %v765
    %v833 = vpop.f32.mrf.mxu0
    %v834 = vadd.f32 0.0, %v833
    %v835 = vpop.f32.mrf.mxu0
    %836 = vdwg.mxu0
    %837 = vrot.lane.b32.xlu0 %v232, 48
    %v838 = vpop.permute.xlu0 %837
    %v841 = vsel %vm404, %v760, 0
    %843 = vmatprep.subr.mxu0 0.0
    %844 = vmatpush1.msra.mxu0 0.0
    %845 = vmatprep.subr.mxu0 0.0
    %846 = vmatpush1.msra.mxu0 0.0
    %847 = vmatprep.subr.mxu0 0.0
    %848 = vmatpush1.msra.mxu0 0.0
    %849 = vmatprep.subr.mxu0 0.0
    %850 = vmatpush1.msra.mxu0 0.0
    %851 = vmatprep.subr.mxu0 0.0
    %852 = vmatpush1.msra.mxu0 0.0
    %853 = vmatprep.subr.mxu0 0.0
    %854 = vmatpush1.msra.mxu0 0.0
    %855 = vmatprep.subr.mxu0 0.0
    %856 = vmatpush1.msra.mxu0 0.0
    %857 = vmatprep.subr.mxu0 0.0
    %858 = vmatpush1.msra.mxu0 0.0
    %859 = vmatprep.subr.mxu0 0.0
    %860 = vmatpush1.msra.mxu0 0.0
    %861 = vmatprep.subr.mxu0 0.0
    %862 = vmatpush1.msra.mxu0 0.0
    %863 = vmatprep.subr.mxu0 0.0
    %864 = vmatpush1.msra.mxu0 0.0
    %865 = vmatprep.subr.mxu0 0.0
    %866 = vmatpush1.msra.mxu0 0.0
    %867 = vmatprep.subr.mxu0 0.0
    %868 = vmatpush1.msra.mxu0 0.0
    %869 = vmatprep.subr.mxu0 0.0
    %870 = vmatpush1.msra.mxu0 0.0
    %871 = vmatprep.subr.mxu0 0.0
    %872 = vmatpush1.msra.mxu0 0.0
    %873 = vmatprep.subr.mxu0 0.0
    %874 = vmatpush1.msra.mxu0 %v838
    %875 = vmatprep.subr.mxu0 0.0
    %876 = vmatpush2.msra.mxu0 0.0
    %877 = vmatprep.subr.mxu0 0.0
    %878 = vmatpush2.msra.mxu0 0.0
    %879 = vmatprep.subr.mxu0 0.0
    %880 = vmatpush2.msra.mxu0 0.0
    %881 = vmatprep.subr.mxu0 0.0
    %882 = vmatpush2.msra.mxu0 0.0
    %883 = vmatprep.subr.mxu0 0.0
    %884 = vmatpush2.msra.mxu0 0.0
    %885 = vmatprep.subr.mxu0 0.0
    %886 = vmatpush2.msra.mxu0 0.0
    %887 = vmatprep.subr.mxu0 0.0
    %888 = vmatpush2.msra.mxu0 0.0
    %889 = vmatprep.subr.mxu0 0.0
    %890 = vmatpush2.msra.mxu0 0.0
    %891 = vmatprep.subr.mxu0 0.0
    %892 = vmatpush2.msra.mxu0 0.0
    %893 = vmatprep.subr.mxu0 0.0
    %894 = vmatpush2.msra.mxu0 0.0
    %895 = vmatprep.subr.mxu0 0.0
    %896 = vmatpush2.msra.mxu0 0.0
    %897 = vmatprep.subr.mxu0 0.0
    %898 = vmatpush2.msra.mxu0 0.0
    %899 = vmatprep.subr.mxu0 0.0
    %900 = vmatpush2.msra.mxu0 0.0
    %901 = vmatprep.subr.mxu0 0.0
    %902 = vmatpush2.msra.mxu0 0.0
    %903 = vmatprep.subr.mxu0 0.0
    %904 = vmatpush2.msra.mxu0 0.0
    %905 = vmatprep.subr.mxu0 0.0
    %906 = vmatpush2.msra.mxu0 0.0
    %907 = vmatprep.mubr.f32.mxu0 0.0
    %908 = vmatmul.mubr.f32.gmra.mxu0 %v841
    %v909 = vpop.f32.mrf.mxu0
    %v910 = vadd.f32 0.0, %v909
    %v911 = vpop.f32.mrf.mxu0
    %912 = vdwg.mxu0
    %v914 = vsel %vm238, %v834, 0
    %v917 = vsel %vm238, %v910, 0
    %919 = vmatprep.subr.mxu0 0.0
    %920 = vmatpush1.msra.mxu0 0.0
    %921 = vmatprep.subr.mxu0 0.0
    %922 = vmatpush1.msra.mxu0 0.0
    %923 = vmatprep.subr.mxu0 0.0
    %924 = vmatpush1.msra.mxu0 0.0
    %925 = vmatprep.subr.mxu0 0.0
    %926 = vmatpush1.msra.mxu0 0.0
    %927 = vmatprep.subr.mxu0 0.0
    %928 = vmatpush1.msra.mxu0 0.0
    %929 = vmatprep.subr.mxu0 0.0
    %930 = vmatpush1.msra.mxu0 0.0
    %931 = vmatprep.subr.mxu0 0.0
    %932 = vmatpush1.msra.mxu0 0.0
    %933 = vmatprep.subr.mxu0 0.0
    %934 = vmatpush1.msra.mxu0 0.0
    %935 = vmatprep.subr.mxu0 0.0
    %936 = vmatpush1.msra.mxu0 0.0
    %937 = vmatprep.subr.mxu0 0.0
    %938 = vmatpush1.msra.mxu0 0.0
    %939 = vmatprep.subr.mxu0 0.0
    %940 = vmatpush1.msra.mxu0 0.0
    %941 = vmatprep.subr.mxu0 0.0
    %942 = vmatpush1.msra.mxu0 0.0
    %943 = vmatprep.subr.mxu0 0.0
    %944 = vmatpush1.msra.mxu0 0.0
    %945 = vmatprep.subr.mxu0 0.0
    %946 = vmatpush1.msra.mxu0 0.0
    %947 = vmatprep.subr.mxu0 0.0
    %948 = vmatpush1.msra.mxu0 %v125
    %949 = vmatprep.subr.mxu0 0.0
    %950 = vmatpush1.msra.mxu0 %v124
    %951 = vmatprep.subr.mxu0 0.0
    %952 = vmatpush2.msra.mxu0 0.0
    %953 = vmatprep.subr.mxu0 0.0
    %954 = vmatpush2.msra.mxu0 0.0
    %955 = vmatprep.subr.mxu0 0.0
    %956 = vmatpush2.msra.mxu0 0.0
    %957 = vmatprep.subr.mxu0 0.0
    %958 = vmatpush2.msra.mxu0 0.0
    %959 = vmatprep.subr.mxu0 0.0
    %960 = vmatpush2.msra.mxu0 0.0
    %961 = vmatprep.subr.mxu0 0.0
    %962 = vmatpush2.msra.mxu0 0.0
    %963 = vmatprep.subr.mxu0 0.0
    %964 = vmatpush2.msra.mxu0 0.0
    %965 = vmatprep.subr.mxu0 0.0
    %966 = vmatpush2.msra.mxu0 0.0
    %967 = vmatprep.subr.mxu0 0.0
    %968 = vmatpush2.msra.mxu0 0.0
    %969 = vmatprep.subr.mxu0 0.0
    %970 = vmatpush2.msra.mxu0 0.0
    %971 = vmatprep.subr.mxu0 0.0
    %972 = vmatpush2.msra.mxu0 0.0
    %973 = vmatprep.subr.mxu0 0.0
    %974 = vmatpush2.msra.mxu0 0.0
    %975 = vmatprep.subr.mxu0 0.0
    %976 = vmatpush2.msra.mxu0 0.0
    %977 = vmatprep.subr.mxu0 0.0
    %978 = vmatpush2.msra.mxu0 0.0
    %979 = vmatprep.subr.mxu0 0.0
    %980 = vmatpush2.msra.mxu0 0.0
    %981 = vmatprep.subr.mxu0 0.0
    %982 = vmatpush2.msra.mxu0 0.0
    %983 = vmatprep.mubr.f32.mxu0 0.0
    %984 = vmatmul.mubr.f32.gmra.mxu0 %v914
    %v985 = vpop.f32.mrf.mxu0
    %v986 = vadd.f32 0.0, %v985
    %v987 = vpop.f32.mrf.mxu0
    %988 = vmatprep.mubr.f32.mxu0 0.0
    %989 = vmatmul.mubr.f32.gmra.mxu0 %v917
    %v990 = vpop.f32.mrf.mxu0
    %v991 = vadd.f32 0.0, %v990
    %v992 = vpop.f32.mrf.mxu0
    %993 = vdwg.mxu0
    %v995 = vsel %vm238, %v500, 0
    %v998 = vsel %vm238, %v576, 0
    %1000 = vmatprep.subr.mxu0 0.0
    %1001 = vmatpush1.msra.mxu0 0.0
    %1002 = vmatprep.subr.mxu0 0.0
    %1003 = vmatpush1.msra.mxu0 0.0
    %1004 = vmatprep.subr.mxu0 0.0
    %1005 = vmatpush1.msra.mxu0 0.0
    %1006 = vmatprep.subr.mxu0 0.0
    %1007 = vmatpush1.msra.mxu0 0.0
    %1008 = vmatprep.subr.mxu0 0.0
    %1009 = vmatpush1.msra.mxu0 0.0
    %1010 = vmatprep.subr.mxu0 0.0
    %1011 = vmatpush1.msra.mxu0 0.0
    %1012 = vmatprep.subr.mxu0 0.0
    %1013 = vmatpush1.msra.mxu0 0.0
    %1014 = vmatprep.subr.mxu0 0.0
    %1015 = vmatpush1.msra.mxu0 0.0
    %1016 = vmatprep.subr.mxu0 0.0
    %1017 = vmatpush1.msra.mxu0 0.0
    %1018 = vmatprep.subr.mxu0 0.0
    %1019 = vmatpush1.msra.mxu0 0.0
    %1020 = vmatprep.subr.mxu0 0.0
    %1021 = vmatpush1.msra.mxu0 0.0
    %1022 = vmatprep.subr.mxu0 0.0
    %1023 = vmatpush1.msra.mxu0 0.0
    %1024 = vmatprep.subr.mxu0 0.0
    %1025 = vmatpush1.msra.mxu0 0.0
    %1026 = vmatprep.subr.mxu0 0.0
    %1027 = vmatpush1.msra.mxu0 0.0
    %1028 = vmatprep.subr.mxu0 0.0
    %1029 = vmatpush1.msra.mxu0 %v123
    %1030 = vmatprep.subr.mxu0 0.0
    %1031 = vmatpush1.msra.mxu0 %v122
    %1032 = vmatprep.subr.mxu0 0.0
    %1033 = vmatpush2.msra.mxu0 0.0
    %1034 = vmatprep.subr.mxu0 0.0
    %1035 = vmatpush2.msra.mxu0 0.0
    %1036 = vmatprep.subr.mxu0 0.0
    %1037 = vmatpush2.msra.mxu0 0.0
    %1038 = vmatprep.subr.mxu0 0.0
    %1039 = vmatpush2.msra.mxu0 0.0
    %1040 = vmatprep.subr.mxu0 0.0
    %1041 = vmatpush2.msra.mxu0 0.0
    %1042 = vmatprep.subr.mxu0 0.0
    %1043 = vmatpush2.msra.mxu0 0.0
    %1044 = vmatprep.subr.mxu0 0.0
    %1045 = vmatpush2.msra.mxu0 0.0
    %1046 = vmatprep.subr.mxu0 0.0
    %1047 = vmatpush2.msra.mxu0 0.0
    %1048 = vmatprep.subr.mxu0 0.0
    %1049 = vmatpush2.msra.mxu0 0.0
    %1050 = vmatprep.subr.mxu0 0.0
    %1051 = vmatpush2.msra.mxu0 0.0
    %1052 = vmatprep.subr.mxu0 0.0
    %1053 = vmatpush2.msra.mxu0 0.0
    %1054 = vmatprep.subr.mxu0 0.0
    %1055 = vmatpush2.msra.mxu0 0.0
    %1056 = vmatprep.subr.mxu0 0.0
    %1057 = vmatpush2.msra.mxu0 0.0
    %1058 = vmatprep.subr.mxu0 0.0
    %1059 = vmatpush2.msra.mxu0 0.0
    %1060 = vmatprep.subr.mxu0 0.0
    %1061 = vmatpush2.msra.mxu0 0.0
    %1062 = vmatprep.subr.mxu0 0.0
    %1063 = vmatpush2.msra.mxu0 0.0
    %1064 = vmatprep.mubr.f32.mxu0 0.0
    %1065 = vmatmul.mubr.f32.gmra.mxu0 %v995
    %v1066 = vpop.f32.mrf.mxu0
    %v1067 = vadd.f32 %v986, %v1066
    %v1068 = vpop.f32.mrf.mxu0
    %1069 = vmatprep.mubr.f32.mxu0 0.0
    %1070 = vmatmul.mubr.f32.gmra.mxu0 %v998
    %v1071 = vpop.f32.mrf.mxu0
    %v1072 = vadd.f32 %v991, %v1071
    %v1073 = vpop.f32.mrf.mxu0
    %1074 = vdwg.mxu0
    %v1075 = vlaneseq
    %v1076 = vshrl.u32 %v1075, 7
    %v1077 = vsub.s32 0, %v1076
    %v1078 = vrot.slane %v147, %v1077
    %v1079 = vadd.f32 %v1067, %v1078
    %v1080 = vadd.f32 %v1072, %v1078
    %v1081 = vadd.f32 %v89, %v1079
    %v1082 = vadd.f32 %v90, %v1080
    %v1083 = vsel %vm51, %v1081, 0.0
    %1084 = vadd.xlane.f32.xlu0 %v1083
    %v1085 = vpop.xlane.xlu0 %1084
    %v1086 = vsel %vm51, %v1082, 0.0
    %1087 = vadd.xlane.f32.xlu0 %v1086
    %v1088 = vpop.xlane.xlu0 %1087
    %v1089 = vmul.f32 %v1085, %v58
    %v1090 = vmul.f32 %v1088, %v58
    %v1091 = vsub.f32 %v1081, %v1089
    %v1092 = vsub.f32 %v1082, %v1090
    %v1093 = vmul.f32 %v1091, %v1091
    %v1094 = vmul.f32 %v1092, %v1092
    %v1095 = vsel %vm51, %v1093, 0.0
    %1096 = vadd.xlane.f32.xlu0 %v1095
    %v1097 = vpop.xlane.xlu0 %1096
    %v1098 = vsel %vm51, %v1094, 0.0
    %1099 = vadd.xlane.f32.xlu0 %v1098
    %v1100 = vpop.xlane.xlu0 %1099
    %v1101 = vmul.f32 %v1097, %v58
    %v1102 = vmul.f32 %v1100, %v58
    %v1103 = vadd.f32 %v1101, 1e-12
    %v1104 = vadd.f32 %v1102, 1e-12
    %v1105 = vrsqrt.pop %v1103
    %v1106 = vrsqrt.pop %v1104
    %v1107 = vmul.f32 %v1091, %v1105
    %v1108 = vmul.f32 %v1092, %v1106
    %v1109 = vlaneseq
    %v1110 = vshrl.u32 %v1109, 7
    %v1111 = vsub.s32 1, %v1110
    %v1112 = vrot.slane %v147, %v1111
    %v1113 = vmul.f32 %v1107, %v1112
    %v1114 = vmul.f32 %v1108, %v1112
    %v1115 = vlaneseq
    %v1116 = vshrl.u32 %v1115, 7
    %v1117 = vsub.s32 2, %v1116
    %v1118 = vrot.slane %v147, %v1117
    %v1119 = vadd.f32 %v1113, %v1118
    %v1120 = vadd.f32 %v1114, %v1118
    %v1122 = vlaneseq
    %v1123 = vshrl.u32 %v1122, 7
    %v1124 = vsub.s32 0, %v1123
    %v1125 = vrot.slane %v130, %v1124
    %v1128 = vsel %vm51, %v1119, 0
    %v1131 = vsel %vm51, %v1120, 0
    %1133 = vmatprep.subr.mxu0 0.0
    %1134 = vmatpush1.msra.mxu0 0.0
    %1135 = vmatprep.subr.mxu0 0.0
    %1136 = vmatpush1.msra.mxu0 0.0
    %1137 = vmatprep.subr.mxu0 0.0
    %1138 = vmatpush1.msra.mxu0 0.0
    %1139 = vmatprep.subr.mxu0 0.0
    %1140 = vmatpush1.msra.mxu0 0.0
    %1141 = vmatprep.subr.mxu0 0.0
    %1142 = vmatpush1.msra.mxu0 0.0
    %1143 = vmatprep.subr.mxu0 0.0
    %1144 = vmatpush1.msra.mxu0 0.0
    %1145 = vmatprep.subr.mxu0 0.0
    %1146 = vmatpush1.msra.mxu0 0.0
    %1147 = vmatprep.subr.mxu0 0.0
    %1148 = vmatpush1.msra.mxu0 0.0
    %1149 = vmatprep.subr.mxu0 0.0
    %1150 = vmatpush1.msra.mxu0 0.0
    %1151 = vmatprep.subr.mxu0 0.0
    %1152 = vmatpush1.msra.mxu0 0.0
    %1153 = vmatprep.subr.mxu0 0.0
    %1154 = vmatpush1.msra.mxu0 0.0
    %1155 = vmatprep.subr.mxu0 0.0
    %1156 = vmatpush1.msra.mxu0 0.0
    %1157 = vmatprep.subr.mxu0 0.0
    %1158 = vmatpush1.msra.mxu0 %v129
    %1159 = vmatprep.subr.mxu0 0.0
    %1160 = vmatpush1.msra.mxu0 %v128
    %1161 = vmatprep.subr.mxu0 0.0
    %1162 = vmatpush1.msra.mxu0 %v127
    %1163 = vmatprep.subr.mxu0 0.0
    %1164 = vmatpush1.msra.mxu0 %v126
    %1165 = vmatprep.subr.mxu0 0.0
    %1166 = vmatpush2.msra.mxu0 0.0
    %1167 = vmatprep.subr.mxu0 0.0
    %1168 = vmatpush2.msra.mxu0 0.0
    %1169 = vmatprep.subr.mxu0 0.0
    %1170 = vmatpush2.msra.mxu0 0.0
    %1171 = vmatprep.subr.mxu0 0.0
    %1172 = vmatpush2.msra.mxu0 0.0
    %1173 = vmatprep.subr.mxu0 0.0
    %1174 = vmatpush2.msra.mxu0 0.0
    %1175 = vmatprep.subr.mxu0 0.0
    %1176 = vmatpush2.msra.mxu0 0.0
    %1177 = vmatprep.subr.mxu0 0.0
    %1178 = vmatpush2.msra.mxu0 0.0
    %1179 = vmatprep.subr.mxu0 0.0
    %1180 = vmatpush2.msra.mxu0 0.0
    %1181 = vmatprep.subr.mxu0 0.0
    %1182 = vmatpush2.msra.mxu0 0.0
    %1183 = vmatprep.subr.mxu0 0.0
    %1184 = vmatpush2.msra.mxu0 0.0
    %1185 = vmatprep.subr.mxu0 0.0
    %1186 = vmatpush2.msra.mxu0 0.0
    %1187 = vmatprep.subr.mxu0 0.0
    %1188 = vmatpush2.msra.mxu0 0.0
    %1189 = vmatprep.subr.mxu0 0.0
    %1190 = vmatpush2.msra.mxu0 0.0
    %1191 = vmatprep.subr.mxu0 0.0
    %1192 = vmatpush2.msra.mxu0 0.0
    %1193 = vmatprep.subr.mxu0 0.0
    %1194 = vmatpush2.msra.mxu0 0.0
    %1195 = vmatprep.subr.mxu0 0.0
    %1196 = vmatpush2.msra.mxu0 0.0
    %1197 = vmatprep.mubr.f32.mxu0 0.0
    %1198 = vmatmul.mubr.f32.gmra.mxu0 %v1128
    %v1199 = vpop.f32.mrf.mxu0
    %v1200 = vadd.f32 %v1125, %v1199
    %v1201 = vpop.f32.mrf.mxu0
    %1202 = vmatprep.mubr.f32.mxu0 0.0
    %1203 = vmatmul.mubr.f32.gmra.mxu0 %v1131
    %v1204 = vpop.f32.mrf.mxu0
    %v1205 = vadd.f32 %v1125, %v1204
    %v1206 = vpop.f32.mrf.mxu0
    %1207 = vdwg.mxu0
    %v1208 = vmul.f32 %v1200, 0.5
    %v1209 = vmul.f32 %v1205, 0.5
    %v1210 = vmul.f32 %v1200, 0.044715
    %v1211 = vmul.f32 %v1205, 0.044715
    %v1212 = vmul.f32 %v1210, %v1200
    %v1213 = vmul.f32 %v1211, %v1205
    %v1214 = vmul.f32 %v1212, %v1200
    %v1215 = vmul.f32 %v1213, %v1205
    %v1216 = vadd.f32 %v1200, %v1214
    %v1217 = vadd.f32 %v1205, %v1215
    %v1218 = vmul.f32 %v1216, 0.7978846
    %v1219 = vmul.f32 %v1217, 0.7978846
    %v1220 = vtanh.pop %v1218
    %v1221 = vtanh.pop %v1219
    %v1222 = vadd.f32 %v1220, 1.0
    %v1223 = vadd.f32 %v1221, 1.0
    %v1224 = vmul.f32 %v1208, %v1222
    %v1225 = vmul.f32 %v1209, %v1223
    %v1226 = vlaneseq
    %v1227 = vshrl.u32 %v1226, 7
    %v1228 = vsub.s32 3, %v1227
    %v1229 = vrot.slane %v147, %v1228
    %1230 = vmatprep.subr.mxu0 0.0
    %1231 = vmatpush1.msra.mxu0 %v146
    %1232 = vmatprep.subr.mxu0 0.0
    %1233 = vmatpush1.msra.mxu0 %v145
    %1234 = vmatprep.subr.mxu0 0.0
    %1235 = vmatpush1.msra.mxu0 %v144
    %1236 = vmatprep.subr.mxu0 0.0
    %1237 = vmatpush1.msra.mxu0 %v143
    %1238 = vmatprep.subr.mxu0 0.0
    %1239 = vmatpush1.msra.mxu0 %v142
    %1240 = vmatprep.subr.mxu0 0.0
    %1241 = vmatpush1.msra.mxu0 %v141
    %1242 = vmatprep.subr.mxu0 0.0
    %1243 = vmatpush1.msra.mxu0 %v140
    %1244 = vmatprep.subr.mxu0 0.0
    %1245 = vmatpush1.msra.mxu0 %v139
    %1246 = vmatprep.subr.mxu0 0.0
    %1247 = vmatpush1.msra.mxu0 %v138
    %1248 = vmatprep.subr.mxu0 0.0
    %1249 = vmatpush1.msra.mxu0 %v137
    %1250 = vmatprep.subr.mxu0 0.0
    %1251 = vmatpush1.msra.mxu0 %v136
    %1252 = vmatprep.subr.mxu0 0.0
    %1253 = vmatpush1.msra.mxu0 %v135
    %1254 = vmatprep.subr.mxu0 0.0
    %1255 = vmatpush1.msra.mxu0 %v134
    %1256 = vmatprep.subr.mxu0 0.0
    %1257 = vmatpush1.msra.mxu0 %v133
    %1258 = vmatprep.subr.mxu0 0.0
    %1259 = vmatpush1.msra.mxu0 %v132
    %1260 = vmatprep.subr.mxu0 0.0
    %1261 = vmatpush1.msra.mxu0 %v131
    %1262 = vmatprep.subr.mxu0 0.0
    %1263 = vmatpush2.msra.mxu0 0.0
    %1264 = vmatprep.subr.mxu0 0.0
    %1265 = vmatpush2.msra.mxu0 0.0
    %1266 = vmatprep.subr.mxu0 0.0
    %1267 = vmatpush2.msra.mxu0 0.0
    %1268 = vmatprep.subr.mxu0 0.0
    %1269 = vmatpush2.msra.mxu0 0.0
    %1270 = vmatprep.subr.mxu0 0.0
    %1271 = vmatpush2.msra.mxu0 0.0
    %1272 = vmatprep.subr.mxu0 0.0
    %1273 = vmatpush2.msra.mxu0 0.0
    %1274 = vmatprep.subr.mxu0 0.0
    %1275 = vmatpush2.msra.mxu0 0.0
    %1276 = vmatprep.subr.mxu0 0.0
    %1277 = vmatpush2.msra.mxu0 0.0
    %1278 = vmatprep.subr.mxu0 0.0
    %1279 = vmatpush2.msra.mxu0 0.0
    %1280 = vmatprep.subr.mxu0 0.0
    %1281 = vmatpush2.msra.mxu0 0.0
    %1282 = vmatprep.subr.mxu0 0.0
    %1283 = vmatpush2.msra.mxu0 0.0
    %1284 = vmatprep.subr.mxu0 0.0
    %1285 = vmatpush2.msra.mxu0 0.0
    %1286 = vmatprep.subr.mxu0 0.0
    %1287 = vmatpush2.msra.mxu0 0.0
    %1288 = vmatprep.subr.mxu0 0.0
    %1289 = vmatpush2.msra.mxu0 0.0
    %1290 = vmatprep.subr.mxu0 0.0
    %1291 = vmatpush2.msra.mxu0 0.0
    %1292 = vmatprep.subr.mxu0 0.0
    %1293 = vmatpush2.msra.mxu0 0.0
    %1294 = vmatprep.mubr.f32.mxu0 0.0
    %1295 = vmatmul.mubr.f32.gmra.mxu0 %v1224
    %v1296 = vpop.f32.mrf.mxu0
    %v1297 = vadd.f32 %v1229, %v1296
    %v1298 = vpop.f32.mrf.mxu0
    %1299 = vmatprep.mubr.f32.mxu0 0.0
    %1300 = vmatmul.mubr.f32.gmra.mxu0 %v1225
    %v1301 = vpop.f32.mrf.mxu0
    %v1302 = vadd.f32 %v1229, %v1301
    %v1303 = vpop.f32.mrf.mxu0
    %1304 = vdwg.mxu0
    %v1305 = vadd.f32 %v1119, %v1297
    %v1306 = vadd.f32 %v1120, %v1302
    %v1307 = vsel %vm51, %v1305, 0.0
    %1308 = vadd.xlane.f32.xlu0 %v1307
    %v1309 = vpop.xlane.xlu0 %1308
    %v1310 = vsel %vm51, %v1306, 0.0
    %1311 = vadd.xlane.f32.xlu0 %v1310
    %v1312 = vpop.xlane.xlu0 %1311
    %v1313 = vmul.f32 %v1309, %v58
    %v1314 = vmul.f32 %v1312, %v58
    %v1315 = vsub.f32 %v1305, %v1313
    %v1316 = vsub.f32 %v1306, %v1314
    %v1317 = vmul.f32 %v1315, %v1315
    %v1318 = vmul.f32 %v1316, %v1316
    %v1319 = vsel %vm51, %v1317, 0.0
    %1320 = vadd.xlane.f32.xlu0 %v1319
    %v1321 = vpop.xlane.xlu0 %1320
    %v1322 = vsel %vm51, %v1318, 0.0
    %1323 = vadd.xlane.f32.xlu0 %v1322
    %v1324 = vpop.xlane.xlu0 %1323
    %v1325 = vmul.f32 %v1321, %v58
    %v1326 = vmul.f32 %v1324, %v58
    %v1327 = vadd.f32 %v1325, 1e-12
    %v1328 = vadd.f32 %v1326, 1e-12
    %v1329 = vrsqrt.pop %v1327
    %v1330 = vrsqrt.pop %v1328
    %v1331 = vmul.f32 %v1315, %v1329
    %v1332 = vmul.f32 %v1316, %v1330
    %v1333 = vlaneseq
    %v1334 = vshrl.u32 %v1333, 7
    %v1335 = vsub.s32 4, %v1334
    %v1336 = vrot.slane %v147, %v1335
    %v1337 = vmul.f32 %v1331, %v1336
    %v1338 = vmul.f32 %v1332, %v1336
    %v1339 = vlaneseq
    %v1340 = vshrl.u32 %v1339, 7
    %v1341 = vsub.s32 5, %v1340
    %v1342 = vrot.slane %v147, %v1341
    %v1343 = vadd.f32 %v1337, %v1342
    %v1344 = vadd.f32 %v1338, %v1342
    %s1345 = scalar_lea.vmem %s3, 32
    %v1346 = vld [vmem:[%s1345] sm:$0xff]
    %v1347 = vld [vmem:[%s1345 + $0x8] sm:$0xff]
    %v1348 = vld [vmem:[%s1345 + $0x10] sm:$0xff]
    %v1349 = vld [vmem:[%s1345 + $0x18] sm:$0xff]
    %s1350 = scalar_lea.vmem %s4, 1
    %v1351 = vld [vmem:[%s1350] sm:$0x1]
    %s1352 = scalar_lea.vmem %s5, 32
    %v1353 = vld [vmem:[%s1352] sm:$0xff]
    %v1354 = vld [vmem:[%s1352 + $0x8] sm:$0xff]
    %v1355 = vld [vmem:[%s1352 + $0x10] sm:$0xff]
    %v1356 = vld [vmem:[%s1352 + $0x18] sm:$0xff]
    %s1357 = scalar_lea.vmem %s6, 32
    %v1358 = vld [vmem:[%s1357] sm:$0xff]
    %v1359 = vld [vmem:[%s1357 + $0x8] sm:$0xff]
    %v1360 = vld [vmem:[%s1357 + $0x10] sm:$0xff]
    %v1361 = vld [vmem:[%s1357 + $0x18] sm:$0xff]
    %s1362 = scalar_lea.vmem %s7, 1
    %v1363 = vld [vmem:[%s1362] sm:$0x1]
    %s1364 = scalar_lea.vmem %s8, 128
    %v1365 = vld [vmem:[%s1364] sm:$0xff]
    %v1366 = vld [vmem:[%s1364 + $0x8] sm:$0xff]
    %v1367 = vld [vmem:[%s1364 + $0x10] sm:$0xff]
    %v1368 = vld [vmem:[%s1364 + $0x18] sm:$0xff]
    %v1369 = vld [vmem:[%s1364 + $0x20] sm:$0xff]
    %v1370 = vld [vmem:[%s1364 + $0x28] sm:$0xff]
    %v1371 = vld [vmem:[%s1364 + $0x30] sm:$0xff]
    %v1372 = vld [vmem:[%s1364 + $0x38] sm:$0xff]
    %v1373 = vld [vmem:[%s1364 + $0x40] sm:$0xff]
    %v1374 = vld [vmem:[%s1364 + $0x48] sm:$0xff]
    %v1375 = vld [vmem:[%s1364 + $0x50] sm:$0xff]
    %v1376 = vld [vmem:[%s1364 + $0x58] sm:$0xff]
    %v1377 = vld [vmem:[%s1364 + $0x60] sm:$0xff]
    %v1378 = vld [vmem:[%s1364 + $0x68] sm:$0xff]
    %v1379 = vld [vmem:[%s1364 + $0x70] sm:$0xff]
    %v1380 = vld [vmem:[%s1364 + $0x78] sm:$0xff]
    %s1381 = scalar_lea.vmem %s9, 8
    %v1382 = vld [vmem:[%s1381] sm:$0x3f]
    %v1384 = vlaneseq
    %v1385 = vshrl.u32 %v1384, 7
    %v1386 = vsub.s32 0, %v1385
    %v1387 = vrot.slane %v1351, %v1386
    %v1390 = vsel %vm51, %v1343, 0
    %v1393 = vsel %vm51, %v1344, 0
    %1395 = vmatprep.subr.mxu0 0.0
    %1396 = vmatpush1.msra.mxu0 0.0
    %1397 = vmatprep.subr.mxu0 0.0
    %1398 = vmatpush1.msra.mxu0 0.0
    %1399 = vmatprep.subr.mxu0 0.0
    %1400 = vmatpush1.msra.mxu0 0.0
    %1401 = vmatprep.subr.mxu0 0.0
    %1402 = vmatpush1.msra.mxu0 0.0
    %1403 = vmatprep.subr.mxu0 0.0
    %1404 = vmatpush1.msra.mxu0 0.0
    %1405 = vmatprep.subr.mxu0 0.0
    %1406 = vmatpush1.msra.mxu0 0.0
    %1407 = vmatprep.subr.mxu0 0.0
    %1408 = vmatpush1.msra.mxu0 0.0
    %1409 = vmatprep.subr.mxu0 0.0
    %1410 = vmatpush1.msra.mxu0 0.0
    %1411 = vmatprep.subr.mxu0 0.0
    %1412 = vmatpush1.msra.mxu0 0.0
    %1413 = vmatprep.subr.mxu0 0.0
    %1414 = vmatpush1.msra.mxu0 0.0
    %1415 = vmatprep.subr.mxu0 0.0
    %1416 = vmatpush1.msra.mxu0 0.0
    %1417 = vmatprep.subr.mxu0 0.0
    %1418 = vmatpush1.msra.mxu0 0.0
    %1419 = vmatprep.subr.mxu0 0.0
    %1420 = vmatpush1.msra.mxu0 %v1349
    %1421 = vmatprep.subr.mxu0 0.0
    %1422 = vmatpush1.msra.mxu0 %v1348
    %1423 = vmatprep.subr.mxu0 0.0
    %1424 = vmatpush1.msra.mxu0 %v1347
    %1425 = vmatprep.subr.mxu0 0.0
    %1426 = vmatpush1.msra.mxu0 %v1346
    %1427 = vmatprep.subr.mxu0 0.0
    %1428 = vmatpush2.msra.mxu0 0.0
    %1429 = vmatprep.subr.mxu0 0.0
    %1430 = vmatpush2.msra.mxu0 0.0
    %1431 = vmatprep.subr.mxu0 0.0
    %1432 = vmatpush2.msra.mxu0 0.0
    %1433 = vmatprep.subr.mxu0 0.0
    %1434 = vmatpush2.msra.mxu0 0.0
    %1435 = vmatprep.subr.mxu0 0.0
    %1436 = vmatpush2.msra.mxu0 0.0
    %1437 = vmatprep.subr.mxu0 0.0
    %1438 = vmatpush2.msra.mxu0 0.0
    %1439 = vmatprep.subr.mxu0 0.0
    %1440 = vmatpush2.msra.mxu0 0.0
    %1441 = vmatprep.subr.mxu0 0.0
    %1442 = vmatpush2.msra.mxu0 0.0
    %1443 = vmatprep.subr.mxu0 0.0
    %1444 = vmatpush2.msra.mxu0 0.0
    %1445 = vmatprep.subr.mxu0 0.0
    %1446 = vmatpush2.msra.mxu0 0.0
    %1447 = vmatprep.subr.mxu0 0.0
    %1448 = vmatpush2.msra.mxu0 0.0
    %1449 = vmatprep.subr.mxu0 0.0
    %1450 = vmatpush2.msra.mxu0 0.0
    %1451 = vmatprep.subr.mxu0 0.0
    %1452 = vmatpush2.msra.mxu0 0.0
    %1453 = vmatprep.subr.mxu0 0.0
    %1454 = vmatpush2.msra.mxu0 0.0
    %1455 = vmatprep.subr.mxu0 0.0
    %1456 = vmatpush2.msra.mxu0 0.0
    %1457 = vmatprep.subr.mxu0 0.0
    %1458 = vmatpush2.msra.mxu0 0.0
    %1459 = vmatprep.mubr.f32.mxu0 0.0
    %1460 = vmatmul.mubr.f32.gmra.mxu0 %v1390
    %v1461 = vpop.f32.mrf.mxu0
    %v1462 = vadd.f32 %v1387, %v1461
    %v1463 = vpop.f32.mrf.mxu0
    %1464 = vmatprep.mubr.f32.mxu0 0.0
    %1465 = vmatmul.mubr.f32.gmra.mxu0 %v1393
    %v1466 = vpop.f32.mrf.mxu0
    %v1467 = vadd.f32 %v1387, %v1466
    %v1468 = vpop.f32.mrf.mxu0
    %1469 = vdwg.mxu0
    %1471 = vrot.lane.b32.xlu0 %v1462, 96
    %v1472 = vpop.permute.xlu0 %1471
    %v1473 = vsel %vm238, %v1462, 0
    %v1475 = vsel %vm238, %v1472, 0
    %1477 = vmatprep.subr.mxu0 0.0
    %1478 = vmatpush1.xpose.msra.mxu0 0.0
    %1479 = vmatprep.subr.mxu0 0.0
    %1480 = vmatpush1.xpose.msra.mxu0 0.0
    %1481 = vmatprep.subr.mxu0 0.0
    %1482 = vmatpush1.xpose.msra.mxu0 0.0
    %1483 = vmatprep.subr.mxu0 0.0
    %1484 = vmatpush1.xpose.msra.mxu0 0.0
    %1485 = vmatprep.subr.mxu0 0.0
    %1486 = vmatpush1.xpose.msra.mxu0 0.0
    %1487 = vmatprep.subr.mxu0 0.0
    %1488 = vmatpush1.xpose.msra.mxu0 0.0
    %1489 = vmatprep.subr.mxu0 0.0
    %1490 = vmatpush1.xpose.msra.mxu0 0.0
    %1491 = vmatprep.subr.mxu0 0.0
    %1492 = vmatpush1.xpose.msra.mxu0 0.0
    %1493 = vmatprep.subr.mxu0 0.0
    %1494 = vmatpush1.xpose.msra.mxu0 0.0
    %1495 = vmatprep.subr.mxu0 0.0
    %1496 = vmatpush1.xpose.msra.mxu0 0.0
    %1497 = vmatprep.subr.mxu0 0.0
    %1498 = vmatpush1.xpose.msra.mxu0 0.0
    %1499 = vmatprep.subr.mxu0 0.0
    %1500 = vmatpush1.xpose.msra.mxu0 0.0
    %1501 = vmatprep.subr.mxu0 0.0
    %1502 = vmatpush1.xpose.msra.mxu0 0.0
    %1503 = vmatprep.subr.mxu0 0.0
    %1504 = vmatpush1.xpose.msra.mxu0 0.0
    %1505 = vmatprep.subr.mxu0 0.0
    %1506 = vmatpush1.xpose.msra.mxu0 0.0
    %1507 = vmatprep.subr.mxu0 0.0
    %1508 = vmatpush1.xpose.msra.mxu0 %v1475
    %1509 = vmatprep.subr.mxu0 0.0
    %1510 = vmatpush2.xpose.msra.mxu0 0.0
    %1511 = vmatprep.subr.mxu0 0.0
    %1512 = vmatpush2.xpose.msra.mxu0 0.0
    %1513 = vmatprep.subr.mxu0 0.0
    %1514 = vmatpush2.xpose.msra.mxu0 0.0
    %1515 = vmatprep.subr.mxu0 0.0
    %1516 = vmatpush2.xpose.msra.mxu0 0.0
    %1517 = vmatprep.subr.mxu0 0.0
    %1518 = vmatpush2.xpose.msra.mxu0 0.0
    %1519 = vmatprep.subr.mxu0 0.0
    %1520 = vmatpush2.xpose.msra.mxu0 0.0
    %1521 = vmatprep.subr.mxu0 0.0
    %1522 = vmatpush2.xpose.msra.mxu0 0.0
    %1523 = vmatprep.subr.mxu0 0.0
    %1524 = vmatpush2.xpose.msra.mxu0 0.0
    %1525 = vmatprep.subr.mxu0 0.0
    %1526 = vmatpush2.xpose.msra.mxu0 0.0
    %1527 = vmatprep.subr.mxu0 0.0
    %1528 = vmatpush2.xpose.msra.mxu0 0.0
    %1529 = vmatprep.subr.mxu0 0.0
    %1530 = vmatpush2.xpose.msra.mxu0 0.0
    %1531 = vmatprep.subr.mxu0 0.0
    %1532 = vmatpush2.xpose.msra.mxu0 0.0
    %1533 = vmatprep.subr.mxu0 0.0
    %1534 = vmatpush2.xpose.msra.mxu0 0.0
    %1535 = vmatprep.subr.mxu0 0.0
    %1536 = vmatpush2.xpose.msra.mxu0 0.0
    %1537 = vmatprep.subr.mxu0 0.0
    %1538 = vmatpush2.xpose.msra.mxu0 0.0
    %1539 = vmatprep.subr.mxu0 0.0
    %1540 = vmatpush2.xpose.msra.mxu0 0.0
    %1541 = vmatprep.mubr.f32.mxu0 0.0
    %1542 = vmatmul.mubr.f32.gmra.mxu0 %v1473
    %v1543 = vpop.f32.mrf.mxu0
    %v1544 = vadd.f32 0.0, %v1543
    %v1545 = vpop.f32.mrf.mxu0
    %1546 = vdwg.mxu0
    %1548 = vrot.lane.b32.xlu0 %v1467, 96
    %v1549 = vpop.permute.xlu0 %1548
    %v1550 = vsel %vm238, %v1467, 0
    %v1552 = vsel %vm238, %v1549, 0
    %1554 = vmatprep.subr.mxu0 0.0
    %1555 = vmatpush1.xpose.msra.mxu0 0.0
    %1556 = vmatprep.subr.mxu0 0.0
    %1557 = vmatpush1.xpose.msra.mxu0 0.0
    %1558 = vmatprep.subr.mxu0 0.0
    %1559 = vmatpush1.xpose.msra.mxu0 0.0
    %1560 = vmatprep.subr.mxu0 0.0
    %1561 = vmatpush1.xpose.msra.mxu0 0.0
    %1562 = vmatprep.subr.mxu0 0.0
    %1563 = vmatpush1.xpose.msra.mxu0 0.0
    %1564 = vmatprep.subr.mxu0 0.0
    %1565 = vmatpush1.xpose.msra.mxu0 0.0
    %1566 = vmatprep.subr.mxu0 0.0
    %1567 = vmatpush1.xpose.msra.mxu0 0.0
    %1568 = vmatprep.subr.mxu0 0.0
    %1569 = vmatpush1.xpose.msra.mxu0 0.0
    %1570 = vmatprep.subr.mxu0 0.0
    %1571 = vmatpush1.xpose.msra.mxu0 0.0
    %1572 = vmatprep.subr.mxu0 0.0
    %1573 = vmatpush1.xpose.msra.mxu0 0.0
    %1574 = vmatprep.subr.mxu0 0.0
    %1575 = vmatpush1.xpose.msra.mxu0 0.0
    %1576 = vmatprep.subr.mxu0 0.0
    %1577 = vmatpush1.xpose.msra.mxu0 0.0
    %1578 = vmatprep.subr.mxu0 0.0
    %1579 = vmatpush1.xpose.msra.mxu0 0.0
    %1580 = vmatprep.subr.mxu0 0.0
    %1581 = vmatpush1.xpose.msra.mxu0 0.0
    %1582 = vmatprep.subr.mxu0 0.0
    %1583 = vmatpush1.xpose.msra.mxu0 0.0
    %1584 = vmatprep.subr.mxu0 0.0
    %1585 = vmatpush1.xpose.msra.mxu0 %v1552
    %1586 = vmatprep.subr.mxu0 0.0
    %1587 = vmatpush2.xpose.msra.mxu0 0.0
    %1588 = vmatprep.subr.mxu0 0.0
    %1589 = vmatpush2.xpose.msra.mxu0 0.0
    %1590 = vmatprep.subr.mxu0 0.0
    %1591 = vmatpush2.xpose.msra.mxu0 0.0
    %1592 = vmatprep.subr.mxu0 0.0
    %1593 = vmatpush2.xpose.msra.mxu0 0.0
    %1594 = vmatprep.subr.mxu0 0.0
    %1595 = vmatpush2.xpose.msra.mxu0 0.0
    %1596 = vmatprep.subr.mxu0 0.0
    %1597 = vmatpush2.xpose.msra.mxu0 0.0
    %1598 = vmatprep.subr.mxu0 0.0
    %1599 = vmatpush2.xpose.msra.mxu0 0.0
    %1600 = vmatprep.subr.mxu0 0.0
    %1601 = vmatpush2.xpose.msra.mxu0 0.0
    %1602 = vmatprep.subr.mxu0 0.0
    %1603 = vmatpush2.xpose.msra.mxu0 0.0
    %1604 = vmatprep.subr.mxu0 0.0
    %1605 = vmatpush2.xpose.msra.mxu0 0.0
    %1606 = vmatprep.subr.mxu0 0.0
    %1607 = vmatpush2.xpose.msra.mxu0 0.0
    %1608 = vmatprep.subr.mxu0 0.0
    %1609 = vmatpush2.xpose.msra.mxu0 0.0
    %1610 = vmatprep.subr.mxu0 0.0
    %1611 = vmatpush2.xpose.msra.mxu0 0.0
    %1612 = vmatprep.subr.mxu0 0.0
    %1613 = vmatpush2.xpose.msra.mxu0 0.0
    %1614 = vmatprep.subr.mxu0 0.0
    %1615 = vmatpush2.xpose.msra.mxu0 0.0
    %1616 = vmatprep.subr.mxu0 0.0
    %1617 = vmatpush2.xpose.msra.mxu0 0.0
    %1618 = vmatprep.mubr.f32.mxu0 0.0
    %1619 = vmatmul.mubr.f32.gmra.mxu0 %v1550
    %v1620 = vpop.f32.mrf.mxu0
    %v1621 = vadd.f32 0.0, %v1620
    %v1622 = vpop.f32.mrf.mxu0
    %1623 = vdwg.mxu0
    %v1624 = vmul.f32 %v1544, 0.25
    %v1625 = vmul.f32 %v1621, 0.25
    %v1626 = vadd.f32 %v1624, %v395
    %v1627 = vadd.f32 %v1625, %v399
    %v1628 = vsel %vm404, %v1626, -inf
    %1629 = vmax.xlane.f32.xlu0 %v1628
    %v1630 = vpop.xlane.xlu0 %1629
    %v1631 = vsel %vm404, %v1627, -inf
    %1632 = vmax.xlane.f32.xlu0 %v1631
    %v1633 = vpop.xlane.xlu0 %1632
    %v1634 = vsub.f32 %v1626, %v1630
    %v1635 = vsub.f32 %v1627, %v1633
    %v1636 = vmul.f32 %v1634, 1.442695
    %v1637 = vpow.pop %v1636
    %v1638 = vmul.f32 %v1635, 1.442695
    %v1639 = vpow.pop %v1638
    %v1640 = vsel %vm404, %v1637, 0.0
    %1641 = vadd.xlane.f32.xlu0 %v1640
    %v1642 = vpop.xlane.xlu0 %1641
    %v1643 = vsel %vm404, %v1639, 0.0
    %1644 = vadd.xlane.f32.xlu0 %v1643
    %v1645 = vpop.xlane.xlu0 %1644
    %v1646 = vrcp.pop %v1642
    %v1647 = vrcp.pop %v1645
    %v1648 = vmul.f32 %v1637, %v1646
    %v1649 = vmul.f32 %v1639, %v1647
    %1650 = vrot.lane.b32.xlu0 %v1462, 64
    %v1651 = vpop.permute.xlu0 %1650
    %v1654 = vsel %vm404, %v1648, 0
    %1656 = vmatprep.subr.mxu0 0.0
    %1657 = vmatpush1.msra.mxu0 0.0
    %1658 = vmatprep.subr.mxu0 0.0
    %1659 = vmatpush1.msra.mxu0 0.0
    %1660 = vmatprep.subr.mxu0 0.0
    %1661 = vmatpush1.msra.mxu0 0.0
    %1662 = vmatprep.subr.mxu0 0.0
    %1663 = vmatpush1.msra.mxu0 0.0
    %1664 = vmatprep.subr.mxu0 0.0
    %1665 = vmatpush1.msra.mxu0 0.0
    %1666 = vmatprep.subr.mxu0 0.0
    %1667 = vmatpush1.msra.mxu0 0.0
    %1668 = vmatprep.subr.mxu0 0.0
    %1669 = vmatpush1.msra.mxu0 0.0
    %1670 = vmatprep.subr.mxu0 0.0
    %1671 = vmatpush1.msra.mxu0 0.0
    %1672 = vmatprep.subr.mxu0 0.0
    %1673 = vmatpush1.msra.mxu0 0.0
    %1674 = vmatprep.subr.mxu0 0.0
    %1675 = vmatpush1.msra.mxu0 0.0
    %1676 = vmatprep.subr.mxu0 0.0
    %1677 = vmatpush1.msra.mxu0 0.0
    %1678 = vmatprep.subr.mxu0 0.0
    %1679 = vmatpush1.msra.mxu0 0.0
    %1680 = vmatprep.subr.mxu0 0.0
    %1681 = vmatpush1.msra.mxu0 0.0
    %1682 = vmatprep.subr.mxu0 0.0
    %1683 = vmatpush1.msra.mxu0 0.0
    %1684 = vmatprep.subr.mxu0 0.0
    %1685 = vmatpush1.msra.mxu0 0.0
    %1686 = vmatprep.subr.mxu0 0.0
    %1687 = vmatpush1.msra.mxu0 %v1651
    %1688 = vmatprep.subr.mxu0 0.0
    %1689 = vmatpush2.msra.mxu0 0.0
    %1690 = vmatprep.subr.mxu0 0.0
    %1691 = vmatpush2.msra.mxu0 0.0
    %1692 = vmatprep.subr.mxu0 0.0
    %1693 = vmatpush2.msra.mxu0 0.0
    %1694 = vmatprep.subr.mxu0 0.0
    %1695 = vmatpush2.msra.mxu0 0.0
    %1696 = vmatprep.subr.mxu0 0.0
    %1697 = vmatpush2.msra.mxu0 0.0
    %1698 = vmatprep.subr.mxu0 0.0
    %1699 = vmatpush2.msra.mxu0 0.0
    %1700 = vmatprep.subr.mxu0 0.0
    %1701 = vmatpush2.msra.mxu0 0.0
    %1702 = vmatprep.subr.mxu0 0.0
    %1703 = vmatpush2.msra.mxu0 0.0
    %1704 = vmatprep.subr.mxu0 0.0
    %1705 = vmatpush2.msra.mxu0 0.0
    %1706 = vmatprep.subr.mxu0 0.0
    %1707 = vmatpush2.msra.mxu0 0.0
    %1708 = vmatprep.subr.mxu0 0.0
    %1709 = vmatpush2.msra.mxu0 0.0
    %1710 = vmatprep.subr.mxu0 0.0
    %1711 = vmatpush2.msra.mxu0 0.0
    %1712 = vmatprep.subr.mxu0 0.0
    %1713 = vmatpush2.msra.mxu0 0.0
    %1714 = vmatprep.subr.mxu0 0.0
    %1715 = vmatpush2.msra.mxu0 0.0
    %1716 = vmatprep.subr.mxu0 0.0
    %1717 = vmatpush2.msra.mxu0 0.0
    %1718 = vmatprep.subr.mxu0 0.0
    %1719 = vmatpush2.msra.mxu0 0.0
    %1720 = vmatprep.mubr.f32.mxu0 0.0
    %1721 = vmatmul.mubr.f32.gmra.mxu0 %v1654
    %v1722 = vpop.f32.mrf.mxu0
    %v1723 = vadd.f32 0.0, %v1722
    %v1724 = vpop.f32.mrf.mxu0
    %1725 = vdwg.mxu0
    %1726 = vrot.lane.b32.xlu0 %v1467, 64
    %v1727 = vpop.permute.xlu0 %1726
    %v1730 = vsel %vm404, %v1649, 0
    %1732 = vmatprep.subr.mxu0 0.0
    %1733 = vmatpush1.msra.mxu0 0.0
    %1734 = vmatprep.subr.mxu0 0.0
    %1735 = vmatpush1.msra.mxu0 0.0
    %1736 = vmatprep.subr.mxu0 0.0
    %1737 = vmatpush1.msra.mxu0 0.0
    %1738 = vmatprep.subr.mxu0 0.0
    %1739 = vmatpush1.msra.mxu0 0.0
    %1740 = vmatprep.subr.mxu0 0.0
    %1741 = vmatpush1.msra.mxu0 0.0
    %1742 = vmatprep.subr.mxu0 0.0
    %1743 = vmatpush1.msra.mxu0 0.0
    %1744 = vmatprep.subr.mxu0 0.0
    %1745 = vmatpush1.msra.mxu0 0.0
    %1746 = vmatprep.subr.mxu0 0.0
    %1747 = vmatpush1.msra.mxu0 0.0
    %1748 = vmatprep.subr.mxu0 0.0
    %1749 = vmatpush1.msra.mxu0 0.0
    %1750 = vmatprep.subr.mxu0 0.0
    %1751 = vmatpush1.msra.mxu0 0.0
    %1752 = vmatprep.subr.mxu0 0.0
    %1753 = vmatpush1.msra.mxu0 0.0
    %1754 = vmatprep.subr.mxu0 0.0
    %1755 = vmatpush1.msra.mxu0 0.0
    %1756 = vmatprep.subr.mxu0 0.0
    %1757 = vmatpush1.msra.mxu0 0.0
    %1758 = vmatprep.subr.mxu0 0.0
    %1759 = vmatpush1.msra.mxu0 0.0
    %1760 = vmatprep.subr.mxu0 0.0
    %1761 = vmatpush1.msra.mxu0 0.0
    %1762 = vmatprep.subr.mxu0 0.0
    %1763 = vmatpush1.msra.mxu0 %v1727
    %1764 = vmatprep.subr.mxu0 0.0
    %1765 = vmatpush2.msra.mxu0 0.0
    %1766 = vmatprep.subr.mxu0 0.0
    %1767 = vmatpush2.msra.mxu0 0.0
    %1768 = vmatprep.subr.mxu0 0.0
    %1769 = vmatpush2.msra.mxu0 0.0
    %1770 = vmatprep.subr.mxu0 0.0
    %1771 = vmatpush2.msra.mxu0 0.0
    %1772 = vmatprep.subr.mxu0 0.0
    %1773 = vmatpush2.msra.mxu0 0.0
    %1774 = vmatprep.subr.mxu0 0.0
    %1775 = vmatpush2.msra.mxu0 0.0
    %1776 = vmatprep.subr.mxu0 0.0
    %1777 = vmatpush2.msra.mxu0 0.0
    %1778 = vmatprep.subr.mxu0 0.0
    %1779 = vmatpush2.msra.mxu0 0.0
    %1780 = vmatprep.subr.mxu0 0.0
    %1781 = vmatpush2.msra.mxu0 0.0
    %1782 = vmatprep.subr.mxu0 0.0
    %1783 = vmatpush2.msra.mxu0 0.0
    %1784 = vmatprep.subr.mxu0 0.0
    %1785 = vmatpush2.msra.mxu0 0.0
    %1786 = vmatprep.subr.mxu0 0.0
    %1787 = vmatpush2.msra.mxu0 0.0
    %1788 = vmatprep.subr.mxu0 0.0
    %1789 = vmatpush2.msra.mxu0 0.0
    %1790 = vmatprep.subr.mxu0 0.0
    %1791 = vmatpush2.msra.mxu0 0.0
    %1792 = vmatprep.subr.mxu0 0.0
    %1793 = vmatpush2.msra.mxu0 0.0
    %1794 = vmatprep.subr.mxu0 0.0
    %1795 = vmatpush2.msra.mxu0 0.0
    %1796 = vmatprep.mubr.f32.mxu0 0.0
    %1797 = vmatmul.mubr.f32.gmra.mxu0 %v1730
    %v1798 = vpop.f32.mrf.mxu0
    %v1799 = vadd.f32 0.0, %v1798
    %v1800 = vpop.f32.mrf.mxu0
    %1801 = vdwg.mxu0
    %1802 = vrot.lane.b32.xlu0 %v1462, 112
    %v1803 = vpop.permute.xlu0 %1802
    %1804 = vrot.lane.b32.xlu0 %v1462, 80
    %v1805 = vpop.permute.xlu0 %1804
    %v1806 = vsel %vm238, %v1803, 0
    %v1808 = vsel %vm238, %v1805, 0
    %1810 = vmatprep.subr.mxu0 0.0
    %1811 = vmatpush1.xpose.msra.mxu0 0.0
    %1812 = vmatprep.subr.mxu0 0.0
    %1813 = vmatpush1.xpose.msra.mxu0 0.0
    %1814 = vmatprep.subr.mxu0 0.0
    %1815 = vmatpush1.xpose.msra.mxu0 0.0
    %1816 = vmatprep.subr.mxu0 0.0
    %1817 = vmatpush1.xpose.msra.mxu0 0.0
    %1818 = vmatprep.subr.mxu0 0.0
    %1819 = vmatpush1.xpose.msra.mxu0 0.0
    %1820 = vmatprep.subr.mxu0 0.0
    %1821 = vmatpush1.xpose.msra.mxu0 0.0
    %1822 = vmatprep.subr.mxu0 0.0
    %1823 = vmatpush1.xpose.msra.mxu0 0.0
    %1824 = vmatprep.subr.mxu0 0.0
    %1825 = vmatpush1.xpose.msra.mxu0 0.0
    %1826 = vmatprep.subr.mxu0 0.0
    %1827 = vmatpush1.xpose.msra.mxu0 0.0
    %1828 = vmatprep.subr.mxu0 0.0
    %1829 = vmatpush1.xpose.msra.mxu0 0.0
    %1830 = vmatprep.subr.mxu0 0.0
    %1831 = vmatpush1.xpose.msra.mxu0 0.0
    %1832 = vmatprep.subr.mxu0 0.0
    %1833 = vmatpush1.xpose.msra.mxu0 0.0
    %1834 = vmatprep.subr.mxu0 0.0
    %1835 = vmatpush1.xpose.msra.mxu0 0.0
    %1836 = vmatprep.subr.mxu0 0.0
    %1837 = vmatpush1.xpose.msra.mxu0 0.0
    %1838 = vmatprep.subr.mxu0 0.0
    %1839 = vmatpush1.xpose.msra.mxu0 0.0
    %1840 = vmatprep.subr.mxu0 0.0
    %1841 = vmatpush1.xpose.msra.mxu0 %v1808
    %1842 = vmatprep.subr.mxu0 0.0
    %1843 = vmatpush2.xpose.msra.mxu0 0.0
    %1844 = vmatprep.subr.mxu0 0.0
    %1845 = vmatpush2.xpose.msra.mxu0 0.0
    %1846 = vmatprep.subr.mxu0 0.0
    %1847 = vmatpush2.xpose.msra.mxu0 0.0
    %1848 = vmatprep.subr.mxu0 0.0
    %1849 = vmatpush2.xpose.msra.mxu0 0.0
    %1850 = vmatprep.subr.mxu0 0.0
    %1851 = vmatpush2.xpose.msra.mxu0 0.0
    %1852 = vmatprep.subr.mxu0 0.0
    %1853 = vmatpush2.xpose.msra.mxu0 0.0
    %1854 = vmatprep.subr.mxu0 0.0
    %1855 = vmatpush2.xpose.msra.mxu0 0.0
    %1856 = vmatprep.subr.mxu0 0.0
    %1857 = vmatpush2.xpose.msra.mxu0 0.0
    %1858 = vmatprep.subr.mxu0 0.0
    %1859 = vmatpush2.xpose.msra.mxu0 0.0
    %1860 = vmatprep.subr.mxu0 0.0
    %1861 = vmatpush2.xpose.msra.mxu0 0.0
    %1862 = vmatprep.subr.mxu0 0.0
    %1863 = vmatpush2.xpose.msra.mxu0 0.0
    %1864 = vmatprep.subr.mxu0 0.0
    %1865 = vmatpush2.xpose.msra.mxu0 0.0
    %1866 = vmatprep.subr.mxu0 0.0
    %1867 = vmatpush2.xpose.msra.mxu0 0.0
    %1868 = vmatprep.subr.mxu0 0.0
    %1869 = vmatpush2.xpose.msra.mxu0 0.0
    %1870 = vmatprep.subr.mxu0 0.0
    %1871 = vmatpush2.xpose.msra.mxu0 0.0
    %1872 = vmatprep.subr.mxu0 0.0
    %1873 = vmatpush2.xpose.msra.mxu0 0.0
    %1874 = vmatprep.mubr.f32.mxu0 0.0
    %1875 = vmatmul.mubr.f32.gmra.mxu0 %v1806
    %v1876 = vpop.f32.mrf.mxu0
    %v1877 = vadd.f32 0.0, %v1876
    %v1878 = vpop.f32.mrf.mxu0
    %1879 = vdwg.mxu0
    %1880 = vrot.lane.b32.xlu0 %v1467, 112
    %v1881 = vpop.permute.xlu0 %1880
    %1882 = vrot.lane.b32.xlu0 %v1467, 80
    %v1883 = vpop.permute.xlu0 %1882
    %v1884 = vsel %vm238, %v1881, 0
    %v1886 = vsel %vm238, %v1883, 0
    %1888 = vmatprep.subr.mxu0 0.0
    %1889 = vmatpush1.xpose.msra.mxu0 0.0
    %1890 = vmatprep.subr.mxu0 0.0
    %1891 = vmatpush1.xpose.msra.mxu0 0.0
    %1892 = vmatprep.subr.mxu0 0.0
    %1893 = vmatpush1.xpose.msra.mxu0 0.0
    %1894 = vmatprep.subr.mxu0 0.0
    %1895 = vmatpush1.xpose.msra.mxu0 0.0
    %1896 = vmatprep.subr.mxu0 0.0
    %1897 = vmatpush1.xpose.msra.mxu0 0.0
    %1898 = vmatprep.subr.mxu0 0.0
    %1899 = vmatpush1.xpose.msra.mxu0 0.0
    %1900 = vmatprep.subr.mxu0 0.0
    %1901 = vmatpush1.xpose.msra.mxu0 0.0
    %1902 = vmatprep.subr.mxu0 0.0
    %1903 = vmatpush1.xpose.msra.mxu0 0.0
    %1904 = vmatprep.subr.mxu0 0.0
    %1905 = vmatpush1.xpose.msra.mxu0 0.0
    %1906 = vmatprep.subr.mxu0 0.0
    %1907 = vmatpush1.xpose.msra.mxu0 0.0
    %1908 = vmatprep.subr.mxu0 0.0
    %1909 = vmatpush1.xpose.msra.mxu0 0.0
    %1910 = vmatprep.subr.mxu0 0.0
    %1911 = vmatpush1.xpose.msra.mxu0 0.0
    %1912 = vmatprep.subr.mxu0 0.0
    %1913 = vmatpush1.xpose.msra.mxu0 0.0
    %1914 = vmatprep.subr.mxu0 0.0
    %1915 = vmatpush1.xpose.msra.mxu0 0.0
    %1916 = vmatprep.subr.mxu0 0.0
    %1917 = vmatpush1.xpose.msra.mxu0 0.0
    %1918 = vmatprep.subr.mxu0 0.0
    %1919 = vmatpush1.xpose.msra.mxu0 %v1886
    %1920 = vmatprep.subr.mxu0 0.0
    %1921 = vmatpush2.xpose.msra.mxu0 0.0
    %1922 = vmatprep.subr.mxu0 0.0
    %1923 = vmatpush2.xpose.msra.mxu0 0.0
    %1924 = vmatprep.subr.mxu0 0.0
    %1925 = vmatpush2.xpose.msra.mxu0 0.0
    %1926 = vmatprep.subr.mxu0 0.0
    %1927 = vmatpush2.xpose.msra.mxu0 0.0
    %1928 = vmatprep.subr.mxu0 0.0
    %1929 = vmatpush2.xpose.msra.mxu0 0.0
    %1930 = vmatprep.subr.mxu0 0.0
    %1931 = vmatpush2.xpose.msra.mxu0 0.0
    %1932 = vmatprep.subr.mxu0 0.0
    %1933 = vmatpush2.xpose.msra.mxu0 0.0
    %1934 = vmatprep.subr.mxu0 0.0
    %1935 = vmatpush2.xpose.msra.mxu0 0.0
    %1936 = vmatprep.subr.mxu0 0.0
    %1937 = vmatpush2.xpose.msra.mxu0 0.0
    %1938 = vmatprep.subr.mxu0 0.0
    %1939 = vmatpush2.xpose.msra.mxu0 0.0
    %1940 = vmatprep.subr.mxu0 0.0
    %1941 = vmatpush2.xpose.msra.mxu0 0.0
    %1942 = vmatprep.subr.mxu0 0.0
    %1943 = vmatpush2.xpose.msra.mxu0 0.0
    %1944 = vmatprep.subr.mxu0 0.0
    %1945 = vmatpush2.xpose.msra.mxu0 0.0
    %1946 = vmatprep.subr.mxu0 0.0
    %1947 = vmatpush2.xpose.msra.mxu0 0.0
    %1948 = vmatprep.subr.mxu0 0.0
    %1949 = vmatpush2.xpose.msra.mxu0 0.0
    %1950 = vmatprep.subr.mxu0 0.0
    %1951 = vmatpush2.xpose.msra.mxu0 0.0
    %1952 = vmatprep.mubr.f32.mxu0 0.0
    %1953 = vmatmul.mubr.f32.gmra.mxu0 %v1884
    %v1954 = vpop.f32.mrf.mxu0
    %v1955 = vadd.f32 0.0, %v1954
    %v1956 = vpop.f32.mrf.mxu0
    %1957 = vdwg.mxu0
    %v1958 = vmul.f32 %v1877, 0.25
    %v1959 = vmul.f32 %v1955, 0.25
    %v1960 = vadd.f32 %v1958, %v395
    %v1961 = vadd.f32 %v1959, %v399
    %v1962 = vsel %vm404, %v1960, -inf
    %1963 = vmax.xlane.f32.xlu0 %v1962
    %v1964 = vpop.xlane.xlu0 %1963
    %v1965 = vsel %vm404, %v1961, -inf
    %1966 = vmax.xlane.f32.xlu0 %v1965
    %v1967 = vpop.xlane.xlu0 %1966
    %v1968 = vsub.f32 %v1960, %v1964
    %v1969 = vsub.f32 %v1961, %v1967
    %v1970 = vmul.f32 %v1968, 1.442695
    %v1971 = vpow.pop %v1970
    %v1972 = vmul.f32 %v1969, 1.442695
    %v1973 = vpow.pop %v1972
    %v1974 = vsel %vm404, %v1971, 0.0
    %1975 = vadd.xlane.f32.xlu0 %v1974
    %v1976 = vpop.xlane.xlu0 %1975
    %v1977 = vsel %vm404, %v1973, 0.0
    %1978 = vadd.xlane.f32.xlu0 %v1977
    %v1979 = vpop.xlane.xlu0 %1978
    %v1980 = vrcp.pop %v1976
    %v1981 = vrcp.pop %v1979
    %v1982 = vmul.f32 %v1971, %v1980
    %v1983 = vmul.f32 %v1973, %v1981
    %1984 = vrot.lane.b32.xlu0 %v1462, 48
    %v1985 = vpop.permute.xlu0 %1984
    %v1988 = vsel %vm404, %v1982, 0
    %1990 = vmatprep.subr.mxu0 0.0
    %1991 = vmatpush1.msra.mxu0 0.0
    %1992 = vmatprep.subr.mxu0 0.0
    %1993 = vmatpush1.msra.mxu0 0.0
    %1994 = vmatprep.subr.mxu0 0.0
    %1995 = vmatpush1.msra.mxu0 0.0
    %1996 = vmatprep.subr.mxu0 0.0
    %1997 = vmatpush1.msra.mxu0 0.0
    %1998 = vmatprep.subr.mxu0 0.0
    %1999 = vmatpush1.msra.mxu0 0.0
    %2000 = vmatprep.subr.mxu0 0.0
    %2001 = vmatpush1.msra.mxu0 0.0
    %2002 = vmatprep.subr.mxu0 0.0
    %2003 = vmatpush1.msra.mxu0 0.0
    %2004 = vmatprep.subr.mxu0 0.0
    %2005 = vmatpush1.msra.mxu0 0.0
    %2006 = vmatprep.subr.mxu0 0.0
    %2007 = vmatpush1.msra.mxu0 0.0
    %2008 = vmatprep.subr.mxu0 0.0
    %2009 = vmatpush1.msra.mxu0 0.0
    %2010 = vmatprep.subr.mxu0 0.0
    %2011 = vmatpush1.msra.mxu0 0.0
    %2012 = vmatprep.subr.mxu0 0.0
    %2013 = vmatpush1.msra.mxu0 0.0
    %2014 = vmatprep.subr.mxu0 0.0
    %2015 = vmatpush1.msra.mxu0 0.0
    %2016 = vmatprep.subr.mxu0 0.0
    %2017 = vmatpush1.msra.mxu0 0.0
    %2018 = vmatprep.subr.mxu0 0.0
    %2019 = vmatpush1.msra.mxu0 0.0
    %2020 = vmatprep.subr.mxu0 0.0
    %2021 = vmatpush1.msra.mxu0 %v1985
    %2022 = vmatprep.subr.mxu0 0.0
    %2023 = vmatpush2.msra.mxu0 0.0
    %2024 = vmatprep.subr.mxu0 0.0
    %2025 = vmatpush2.msra.mxu0 0.0
    %2026 = vmatprep.subr.mxu0 0.0
    %2027 = vmatpush2.msra.mxu0 0.0
    %2028 = vmatprep.subr.mxu0 0.0
    %2029 = vmatpush2.msra.mxu0 0.0
    %2030 = vmatprep.subr.mxu0 0.0
    %2031 = vmatpush2.msra.mxu0 0.0
    %2032 = vmatprep.subr.mxu0 0.0
    %2033 = vmatpush2.msra.mxu0 0.0
    %2034 = vmatprep.subr.mxu0 0.0
    %2035 = vmatpush2.msra.mxu0 0.0
    %2036 = vmatprep.subr.mxu0 0.0
    %2037 = vmatpush2.msra.mxu0 0.0
    %2038 = vmatprep.subr.mxu0 0.0
    %2039 = vmatpush2.msra.mxu0 0.0
    %2040 = vmatprep.subr.mxu0 0.0
    %2041 = vmatpush2.msra.mxu0 0.0
    %2042 = vmatprep.subr.mxu0 0.0
    %2043 = vmatpush2.msra.mxu0 0.0
    %2044 = vmatprep.subr.mxu0 0.0
    %2045 = vmatpush2.msra.mxu0 0.0
    %2046 = vmatprep.subr.mxu0 0.0
    %2047 = vmatpush2.msra.mxu0 0.0
    %2048 = vmatprep.subr.mxu0 0.0
    %2049 = vmatpush2.msra.mxu0 0.0
    %2050 = vmatprep.subr.mxu0 0.0
    %2051 = vmatpush2.msra.mxu0 0.0
    %2052 = vmatprep.subr.mxu0 0.0
    %2053 = vmatpush2.msra.mxu0 0.0
    %2054 = vmatprep.mubr.f32.mxu0 0.0
    %2055 = vmatmul.mubr.f32.gmra.mxu0 %v1988
    %v2056 = vpop.f32.mrf.mxu0
    %v2057 = vadd.f32 0.0, %v2056
    %v2058 = vpop.f32.mrf.mxu0
    %2059 = vdwg.mxu0
    %2060 = vrot.lane.b32.xlu0 %v1467, 48
    %v2061 = vpop.permute.xlu0 %2060
    %v2064 = vsel %vm404, %v1983, 0
    %2066 = vmatprep.subr.mxu0 0.0
    %2067 = vmatpush1.msra.mxu0 0.0
    %2068 = vmatprep.subr.mxu0 0.0
    %2069 = vmatpush1.msra.mxu0 0.0
    %2070 = vmatprep.subr.mxu0 0.0
    %2071 = vmatpush1.msra.mxu0 0.0
    %2072 = vmatprep.subr.mxu0 0.0
    %2073 = vmatpush1.msra.mxu0 0.0
    %2074 = vmatprep.subr.mxu0 0.0
    %2075 = vmatpush1.msra.mxu0 0.0
    %2076 = vmatprep.subr.mxu0 0.0
    %2077 = vmatpush1.msra.mxu0 0.0
    %2078 = vmatprep.subr.mxu0 0.0
    %2079 = vmatpush1.msra.mxu0 0.0
    %2080 = vmatprep.subr.mxu0 0.0
    %2081 = vmatpush1.msra.mxu0 0.0
    %2082 = vmatprep.subr.mxu0 0.0
    %2083 = vmatpush1.msra.mxu0 0.0
    %2084 = vmatprep.subr.mxu0 0.0
    %2085 = vmatpush1.msra.mxu0 0.0
    %2086 = vmatprep.subr.mxu0 0.0
    %2087 = vmatpush1.msra.mxu0 0.0
    %2088 = vmatprep.subr.mxu0 0.0
    %2089 = vmatpush1.msra.mxu0 0.0
    %2090 = vmatprep.subr.mxu0 0.0
    %2091 = vmatpush1.msra.mxu0 0.0
    %2092 = vmatprep.subr.mxu0 0.0
    %2093 = vmatpush1.msra.mxu0 0.0
    %2094 = vmatprep.subr.mxu0 0.0
    %2095 = vmatpush1.msra.mxu0 0.0
    %2096 = vmatprep.subr.mxu0 0.0
    %2097 = vmatpush1.msra.mxu0 %v2061
    %2098 = vmatprep.subr.mxu0 0.0
    %2099 = vmatpush2.msra.mxu0 0.0
    %2100 = vmatprep.subr.mxu0 0.0
    %2101 = vmatpush2.msra.mxu0 0.0
    %2102 = vmatprep.subr.mxu0 0.0
    %2103 = vmatpush2.msra.mxu0 0.0
    %2104 = vmatprep.subr.mxu0 0.0
    %2105 = vmatpush2.msra.mxu0 0.0
    %2106 = vmatprep.subr.mxu0 0.0
    %2107 = vmatpush2.msra.mxu0 0.0
    %2108 = vmatprep.subr.mxu0 0.0
    %2109 = vmatpush2.msra.mxu0 0.0
    %2110 = vmatprep.subr.mxu0 0.0
    %2111 = vmatpush2.msra.mxu0 0.0
    %2112 = vmatprep.subr.mxu0 0.0
    %2113 = vmatpush2.msra.mxu0 0.0
    %2114 = vmatprep.subr.mxu0 0.0
    %2115 = vmatpush2.msra.mxu0 0.0
    %2116 = vmatprep.subr.mxu0 0.0
    %2117 = vmatpush2.msra.mxu0 0.0
    %2118 = vmatprep.subr.mxu0 0.0
    %2119 = vmatpush2.msra.mxu0 0.0
    %2120 = vmatprep.subr.mxu0 0.0
    %2121 = vmatpush2.msra.mxu0 0.0
    %2122 = vmatprep.subr.mxu0 0.0
    %2123 = vmatpush2.msra.mxu0 0.0
    %2124 = vmatprep.subr.mxu0 0.0
    %2125 = vmatpush2.msra.mxu0 0.0
    %2126 = vmatprep.subr.mxu0 0.0
    %2127 = vmatpush2.msra.mxu0 0.0
    %2128 = vmatprep.subr.mxu0 0.0
    %2129 = vmatpush2.msra.mxu0 0.0
    %2130 = vmatprep.mubr.f32.mxu0 0.0
    %2131 = vmatmul.mubr.f32.gmra.mxu0 %v2064
    %v2132 = vpop.f32.mrf.mxu0
    %v2133 = vadd.f32 0.0, %v2132
    %v2134 = vpop.f32.mrf.mxu0
    %2135 = vdwg.mxu0
    %v2137 = vsel %vm238, %v2057, 0
    %v2140 = vsel %vm238, %v2133, 0
    %2142 = vmatprep.subr.mxu0 0.0
    %2143 = vmatpush1.msra.mxu0 0.0
    %2144 = vmatprep.subr.mxu0 0.0
    %2145 = vmatpush1.msra.mxu0 0.0
    %2146 = vmatprep.subr.mxu0 0.0
    %2147 = vmatpush1.msra.mxu0 0.0
    %2148 = vmatprep.subr.mxu0 0.0
    %2149 = vmatpush1.msra.mxu0 0.0
    %2150 = vmatprep.subr.mxu0 0.0
    %2151 = vmatpush1.msra.mxu0 0.0
    %2152 = vmatprep.subr.mxu0 0.0
    %2153 = vmatpush1.msra.mxu0 0.0
    %2154 = vmatprep.subr.mxu0 0.0
    %2155 = vmatpush1.msra.mxu0 0.0
    %2156 = vmatprep.subr.mxu0 0.0
    %2157 = vmatpush1.msra.mxu0 0.0
    %2158 = vmatprep.subr.mxu0 0.0
    %2159 = vmatpush1.msra.mxu0 0.0
    %2160 = vmatprep.subr.mxu0 0.0
    %2161 = vmatpush1.msra.mxu0 0.0
    %2162 = vmatprep.subr.mxu0 0.0
    %2163 = vmatpush1.msra.mxu0 0.0
    %2164 = vmatprep.subr.mxu0 0.0
    %2165 = vmatpush1.msra.mxu0 0.0
    %2166 = vmatprep.subr.mxu0 0.0
    %2167 = vmatpush1.msra.mxu0 0.0
    %2168 = vmatprep.subr.mxu0 0.0
    %2169 = vmatpush1.msra.mxu0 0.0
    %2170 = vmatprep.subr.mxu0 0.0
    %2171 = vmatpush1.msra.mxu0 %v1356
    %2172 = vmatprep.subr.mxu0 0.0
    %2173 = vmatpush1.msra.mxu0 %v1355
    %2174 = vmatprep.subr.mxu0 0.0
    %2175 = vmatpush2.msra.mxu0 0.0
    %2176 = vmatprep.subr.mxu0 0.0
    %2177 = vmatpush2.msra.mxu0 0.0
    %2178 = vmatprep.subr.mxu0 0.0
    %2179 = vmatpush2.msra.mxu0 0.0
    %2180 = vmatprep.subr.mxu0 0.0
    %2181 = vmatpush2.msra.mxu0 0.0
    %2182 = vmatprep.subr.mxu0 0.0
    %2183 = vmatpush2.msra.mxu0 0.0
    %2184 = vmatprep.subr.mxu0 0.0
    %2185 = vmatpush2.msra.mxu0 0.0
    %2186 = vmatprep.subr.mxu0 0.0
    %2187 = vmatpush2.msra.mxu0 0.0
    %2188 = vmatprep.subr.mxu0 0.0
    %2189 = vmatpush2.msra.mxu0 0.0
    %2190 = vmatprep.subr.mxu0 0.0
    %2191 = vmatpush2.msra.mxu0 0.0
    %2192 = vmatprep.subr.mxu0 0.0
    %2193 = vmatpush2.msra.mxu0 0.0
    %2194 = vmatprep.subr.mxu0 0.0
    %2195 = vmatpush2.msra.mxu0 0.0
    %2196 = vmatprep.subr.mxu0 0.0
    %2197 = vmatpush2.msra.mxu0 0.0
    %2198 = vmatprep.subr.mxu0 0.0
    %2199 = vmatpush2.msra.mxu0 0.0
    %2200 = vmatprep.subr.mxu0 0.0
    %2201 = vmatpush2.msra.mxu0 0.0
    %2202 = vmatprep.subr.mxu0 0.0
    %2203 = vmatpush2.msra.mxu0 0.0
    %2204 = vmatprep.subr.mxu0 0.0
    %2205 = vmatpush2.msra.mxu0 0.0
    %2206 = vmatprep.mubr.f32.mxu0 0.0
    %2207 = vmatmul.mubr.f32.gmra.mxu0 %v2137
    %v2208 = vpop.f32.mrf.mxu0
    %v2209 = vadd.f32 0.0, %v2208
    %v2210 = vpop.f32.mrf.mxu0
    %2211 = vmatprep.mubr.f32.mxu0 0.0
    %2212 = vmatmul.mubr.f32.gmra.mxu0 %v2140
    %v2213 = vpop.f32.mrf.mxu0
    %v2214 = vadd.f32 0.0, %v2213
    %v2215 = vpop.f32.mrf.mxu0
    %2216 = vdwg.mxu0
    %v2218 = vsel %vm238, %v1723, 0
    %v2221 = vsel %vm238, %v1799, 0
    %2223 = vmatprep.subr.mxu0 0.0
    %2224 = vmatpush1.msra.mxu0 0.0
    %2225 = vmatprep.subr.mxu0 0.0
    %2226 = vmatpush1.msra.mxu0 0.0
    %2227 = vmatprep.subr.mxu0 0.0
    %2228 = vmatpush1.msra.mxu0 0.0
    %2229 = vmatprep.subr.mxu0 0.0
    %2230 = vmatpush1.msra.mxu0 0.0
    %2231 = vmatprep.subr.mxu0 0.0
    %2232 = vmatpush1.msra.mxu0 0.0
    %2233 = vmatprep.subr.mxu0 0.0
    %2234 = vmatpush1.msra.mxu0 0.0
    %2235 = vmatprep.subr.mxu0 0.0
    %2236 = vmatpush1.msra.mxu0 0.0
    %2237 = vmatprep.subr.mxu0 0.0
    %2238 = vmatpush1.msra.mxu0 0.0
    %2239 = vmatprep.subr.mxu0 0.0
    %2240 = vmatpush1.msra.mxu0 0.0
    %2241 = vmatprep.subr.mxu0 0.0
    %2242 = vmatpush1.msra.mxu0 0.0
    %2243 = vmatprep.subr.mxu0 0.0
    %2244 = vmatpush1.msra.mxu0 0.0
    %2245 = vmatprep.subr.mxu0 0.0
    %2246 = vmatpush1.msra.mxu0 0.0
    %2247 = vmatprep.subr.mxu0 0.0
    %2248 = vmatpush1.msra.mxu0 0.0
    %2249 = vmatprep.subr.mxu0 0.0
    %2250 = vmatpush1.msra.mxu0 0.0
    %2251 = vmatprep.subr.mxu0 0.0
    %2252 = vmatpush1.msra.mxu0 %v1354
    %2253 = vmatprep.subr.mxu0 0.0
    %2254 = vmatpush1.msra.mxu0 %v1353
    %2255 = vmatprep.subr.mxu0 0.0
    %2256 = vmatpush2.msra.mxu0 0.0
    %2257 = vmatprep.subr.mxu0 0.0
    %2258 = vmatpush2.msra.mxu0 0.0
    %2259 = vmatprep.subr.mxu0 0.0
    %2260 = vmatpush2.msra.mxu0 0.0
    %2261 = vmatprep.subr.mxu0 0.0
    %2262 = vmatpush2.msra.mxu0 0.0
    %2263 = vmatprep.subr.mxu0 0.0
    %2264 = vmatpush2.msra.mxu0 0.0
    %2265 = vmatprep.subr.mxu0 0.0
    %2266 = vmatpush2.msra.mxu0 0.0
    %2267 = vmatprep.subr.mxu0 0.0
    %2268 = vmatpush2.msra.mxu0 0.0
    %2269 = vmatprep.subr.mxu0 0.0
    %2270 = vmatpush2.msra.mxu0 0.0
    %2271 = vmatprep.subr.mxu0 0.0
    %2272 = vmatpush2.msra.mxu0 0.0
    %2273 = vmatprep.subr.mxu0 0.0
    %2274 = vmatpush2.msra.mxu0 0.0
    %2275 = vmatprep.subr.mxu0 0.0
    %2276 = vmatpush2.msra.mxu0 0.0
    %2277 = vmatprep.subr.mxu0 0.0
    %2278 = vmatpush2.msra.mxu0 0.0
    %2279 = vmatprep.subr.mxu0 0.0
    %2280 = vmatpush2.msra.mxu0 0.0
    %2281 = vmatprep.subr.mxu0 0.0
    %2282 = vmatpush2.msra.mxu0 0.0
    %2283 = vmatprep.subr.mxu0 0.0
    %2284 = vmatpush2.msra.mxu0 0.0
    %2285 = vmatprep.subr.mxu0 0.0
    %2286 = vmatpush2.msra.mxu0 0.0
    %2287 = vmatprep.mubr.f32.mxu0 0.0
    %2288 = vmatmul.mubr.f32.gmra.mxu0 %v2218
    %v2289 = vpop.f32.mrf.mxu0
    %v2290 = vadd.f32 %v2209, %v2289
    %v2291 = vpop.f32.mrf.mxu0
    %2292 = vmatprep.mubr.f32.mxu0 0.0
    %2293 = vmatmul.mubr.f32.gmra.mxu0 %v2221
    %v2294 = vpop.f32.mrf.mxu0
    %v2295 = vadd.f32 %v2214, %v2294
    %v2296 = vpop.f32.mrf.mxu0
    %2297 = vdwg.mxu0
    %v2298 = vlaneseq
    %v2299 = vshrl.u32 %v2298, 7
    %v2300 = vsub.s32 0, %v2299
    %v2301 = vrot.slane %v1382, %v2300
    %v2302 = vadd.f32 %v2290, %v2301
    %v2303 = vadd.f32 %v2295, %v2301
    %v2304 = vadd.f32 %v1343, %v2302
    %v2305 = vadd.f32 %v1344, %v2303
    %v2306 = vsel %vm51, %v2304, 0.0
    %2307 = vadd.xlane.f32.xlu0 %v2306
    %v2308 = vpop.xlane.xlu0 %2307
    %v2309 = vsel %vm51, %v2305, 0.0
    %2310 = vadd.xlane.f32.xlu0 %v2309
    %v2311 = vpop.xlane.xlu0 %2310
    %v2312 = vmul.f32 %v2308, %v58
    %v2313 = vmul.f32 %v2311, %v58
    %v2314 = vsub.f32 %v2304, %v2312
    %v2315 = vsub.f32 %v2305, %v2313
    %v2316 = vmul.f32 %v2314, %v2314
    %v2317 = vmul.f32 %v2315, %v2315
    %v2318 = vsel %vm51, %v2316, 0.0
    %2319 = vadd.xlane.f32.xlu0 %v2318
    %v2320 = vpop.xlane.xlu0 %2319
    %v2321 = vsel %vm51, %v2317, 0.0
    %2322 = vadd.xlane.f32.xlu0 %v2321
    %v2323 = vpop.xlane.xlu0 %2322
    %v2324 = vmul.f32 %v2320, %v58
    %v2325 = vmul.f32 %v2323, %v58
    %v2326 = vadd.f32 %v2324, 1e-12
    %v2327 = vadd.f32 %v2325, 1e-12
    %v2328 = vrsqrt.pop %v2326
    %v2329 = vrsqrt.pop %v2327
    %v2330 = vmul.f32 %v2314, %v2328
    %v2331 = vmul.f32 %v2315, %v2329
    %v2332 = vlaneseq
    %v2333 = vshrl.u32 %v2332, 7
    %v2334 = vsub.s32 1, %v2333
    %v2335 = vrot.slane %v1382, %v2334
    %v2336 = vmul.f32 %v2330, %v2335
    %v2337 = vmul.f32 %v2331, %v2335
    %v2338 = vlaneseq
    %v2339 = vshrl.u32 %v2338, 7
    %v2340 = vsub.s32 2, %v2339
    %v2341 = vrot.slane %v1382, %v2340
    %v2342 = vadd.f32 %v2336, %v2341
    %v2343 = vadd.f32 %v2337, %v2341
    %v2345 = vlaneseq
    %v2346 = vshrl.u32 %v2345, 7
    %v2347 = vsub.s32 0, %v2346
    %v2348 = vrot.slane %v1363, %v2347
    %v2351 = vsel %vm51, %v2342, 0
    %v2354 = vsel %vm51, %v2343, 0
    %2356 = vmatprep.subr.mxu0 0.0
    %2357 = vmatpush1.msra.mxu0 0.0
    %2358 = vmatprep.subr.mxu0 0.0
    %2359 = vmatpush1.msra.mxu0 0.0
    %2360 = vmatprep.subr.mxu0 0.0
    %2361 = vmatpush1.msra.mxu0 0.0
    %2362 = vmatprep.subr.mxu0 0.0
    %2363 = vmatpush1.msra.mxu0 0.0
    %2364 = vmatprep.subr.mxu0 0.0
    %2365 = vmatpush1.msra.mxu0 0.0
    %2366 = vmatprep.subr.mxu0 0.0
    %2367 = vmatpush1.msra.mxu0 0.0
    %2368 = vmatprep.subr.mxu0 0.0
    %2369 = vmatpush1.msra.mxu0 0.0
    %2370 = vmatprep.subr.mxu0 0.0
    %2371 = vmatpush1.msra.mxu0 0.0
    %2372 = vmatprep.subr.mxu0 0.0
    %2373 = vmatpush1.msra.mxu0 0.0
    %2374 = vmatprep.subr.mxu0 0.0
    %2375 = vmatpush1.msra.mxu0 0.0
    %2376 = vmatprep.subr.mxu0 0.0
    %2377 = vmatpush1.msra.mxu0 0.0
    %2378 = vmatprep.subr.mxu0 0.0
    %2379 = vmatpush1.msra.mxu0 0.0
    %2380 = vmatprep.subr.mxu0 0.0
    %2381 = vmatpush1.msra.mxu0 %v1361
    %2382 = vmatprep.subr.mxu0 0.0
    %2383 = vmatpush1.msra.mxu0 %v1360
    %2384 = vmatprep.subr.mxu0 0.0
    %2385 = vmatpush1.msra.mxu0 %v1359
    %2386 = vmatprep.subr.mxu0 0.0
    %2387 = vmatpush1.msra.mxu0 %v1358
    %2388 = vmatprep.subr.mxu0 0.0
    %2389 = vmatpush2.msra.mxu0 0.0
    %2390 = vmatprep.subr.mxu0 0.0
    %2391 = vmatpush2.msra.mxu0 0.0
    %2392 = vmatprep.subr.mxu0 0.0
    %2393 = vmatpush2.msra.mxu0 0.0
    %2394 = vmatprep.subr.mxu0 0.0
    %2395 = vmatpush2.msra.mxu0 0.0
    %2396 = vmatprep.subr.mxu0 0.0
    %2397 = vmatpush2.msra.mxu0 0.0
    %2398 = vmatprep.subr.mxu0 0.0
    %2399 = vmatpush2.msra.mxu0 0.0
    %2400 = vmatprep.subr.mxu0 0.0
    %2401 = vmatpush2.msra.mxu0 0.0
    %2402 = vmatprep.subr.mxu0 0.0
    %2403 = vmatpush2.msra.mxu0 0.0
    %2404 = vmatprep.subr.mxu0 0.0
    %2405 = vmatpush2.msra.mxu0 0.0
    %2406 = vmatprep.subr.mxu0 0.0
    %2407 = vmatpush2.msra.mxu0 0.0
    %2408 = vmatprep.subr.mxu0 0.0
    %2409 = vmatpush2.msra.mxu0 0.0
    %2410 = vmatprep.subr.mxu0 0.0
    %2411 = vmatpush2.msra.mxu0 0.0
    %2412 = vmatprep.subr.mxu0 0.0
    %2413 = vmatpush2.msra.mxu0 0.0
    %2414 = vmatprep.subr.mxu0 0.0
    %2415 = vmatpush2.msra.mxu0 0.0
    %2416 = vmatprep.subr.mxu0 0.0
    %2417 = vmatpush2.msra.mxu0 0.0
    %2418 = vmatprep.subr.mxu0 0.0
    %2419 = vmatpush2.msra.mxu0 0.0
    %2420 = vmatprep.mubr.f32.mxu0 0.0
    %2421 = vmatmul.mubr.f32.gmra.mxu0 %v2351
    %v2422 = vpop.f32.mrf.mxu0
    %v2423 = vadd.f32 %v2348, %v2422
    %v2424 = vpop.f32.mrf.mxu0
    %2425 = vmatprep.mubr.f32.mxu0 0.0
    %2426 = vmatmul.mubr.f32.gmra.mxu0 %v2354
    %v2427 = vpop.f32.mrf.mxu0
    %v2428 = vadd.f32 %v2348, %v2427
    %v2429 = vpop.f32.mrf.mxu0
    %2430 = vdwg.mxu0
    %v2431 = vmul.f32 %v2423, 0.5
    %v2432 = vmul.f32 %v2428, 0.5
    %v2433 = vmul.f32 %v2423, 0.044715
    %v2434 = vmul.f32 %v2428, 0.044715
    %v2435 = vmul.f32 %v2433, %v2423
    %v2436 = vmul.f32 %v2434, %v2428
    %v2437 = vmul.f32 %v2435, %v2423
    %v2438 = vmul.f32 %v2436, %v2428
    %v2439 = vadd.f32 %v2423, %v2437
    %v2440 = vadd.f32 %v2428, %v2438
    %v2441 = vmul.f32 %v2439, 0.7978846
    %v2442 = vmul.f32 %v2440, 0.7978846
    %v2443 = vtanh.pop %v2441
    %v2444 = vtanh.pop %v2442
    %v2445 = vadd.f32 %v2443, 1.0
    %v2446 = vadd.f32 %v2444, 1.0
    %v2447 = vmul.f32 %v2431, %v2445
    %v2448 = vmul.f32 %v2432, %v2446
    %v2449 = vlaneseq
    %v2450 = vshrl.u32 %v2449, 7
    %v2451 = vsub.s32 3, %v2450
    %v2452 = vrot.slane %v1382, %v2451
    %2453 = vmatprep.subr.mxu0 0.0
    %2454 = vmatpush1.msra.mxu0 %v1380
    %2455 = vmatprep.subr.mxu0 0.0
    %2456 = vmatpush1.msra.mxu0 %v1379
    %2457 = vmatprep.subr.mxu0 0.0
    %2458 = vmatpush1.msra.mxu0 %v1378
    %2459 = vmatprep.subr.mxu0 0.0
    %2460 = vmatpush1.msra.mxu0 %v1377
    %2461 = vmatprep.subr.mxu0 0.0
    %2462 = vmatpush1.msra.mxu0 %v1376
    %2463 = vmatprep.subr.mxu0 0.0
    %2464 = vmatpush1.msra.mxu0 %v1375
    %2465 = vmatprep.subr.mxu0 0.0
    %2466 = vmatpush1.msra.mxu0 %v1374
    %2467 = vmatprep.subr.mxu0 0.0
    %2468 = vmatpush1.msra.mxu0 %v1373
    %2469 = vmatprep.subr.mxu0 0.0
    %2470 = vmatpush1.msra.mxu0 %v1372
    %2471 = vmatprep.subr.mxu0 0.0
    %2472 = vmatpush1.msra.mxu0 %v1371
    %2473 = vmatprep.subr.mxu0 0.0
    %2474 = vmatpush1.msra.mxu0 %v1370
    %2475 = vmatprep.subr.mxu0 0.0
    %2476 = vmatpush1.msra.mxu0 %v1369
    %2477 = vmatprep.subr.mxu0 0.0
    %2478 = vmatpush1.msra.mxu0 %v1368
    %2479 = vmatprep.subr.mxu0 0.0
    %2480 = vmatpush1.msra.mxu0 %v1367
    %2481 = vmatprep.subr.mxu0 0.0
    %2482 = vmatpush1.msra.mxu0 %v1366
    %2483 = vmatprep.subr.mxu0 0.0
    %2484 = vmatpush1.msra.mxu0 %v1365
    %2485 = vmatprep.subr.mxu0 0.0
    %2486 = vmatpush2.msra.mxu0 0.0
    %2487 = vmatprep.subr.mxu0 0.0
    %2488 = vmatpush2.msra.mxu0 0.0
    %2489 = vmatprep.subr.mxu0 0.0
    %2490 = vmatpush2.msra.mxu0 0.0
    %2491 = vmatprep.subr.mxu0 0.0
    %2492 = vmatpush2.msra.mxu0 0.0
    %2493 = vmatprep.subr.mxu0 0.0
    %2494 = vmatpush2.msra.mxu0 0.0
    %2495 = vmatprep.subr.mxu0 0.0
    %2496 = vmatpush2.msra.mxu0 0.0
    %2497 = vmatprep.subr.mxu0 0.0
    %2498 = vmatpush2.msra.mxu0 0.0
    %2499 = vmatprep.subr.mxu0 0.0
    %2500 = vmatpush2.msra.mxu0 0.0
    %2501 = vmatprep.subr.mxu0 0.0
    %2502 = vmatpush2.msra.mxu0 0.0
    %2503 = vmatprep.subr.mxu0 0.0
    %2504 = vmatpush2.msra.mxu0 0.0
    %2505 = vmatprep.subr.mxu0 0.0
    %2506 = vmatpush2.msra.mxu0 0.0
    %2507 = vmatprep.subr.mxu0 0.0
    %2508 = vmatpush2.msra.mxu0 0.0
    %2509 = vmatprep.subr.mxu0 0.0
    %2510 = vmatpush2.msra.mxu0 0.0
    %2511 = vmatprep.subr.mxu0 0.0
    %2512 = vmatpush2.msra.mxu0 0.0
    %2513 = vmatprep.subr.mxu0 0.0
    %2514 = vmatpush2.msra.mxu0 0.0
    %2515 = vmatprep.subr.mxu0 0.0
    %2516 = vmatpush2.msra.mxu0 0.0
    %2517 = vmatprep.mubr.f32.mxu0 0.0
    %2518 = vmatmul.mubr.f32.gmra.mxu0 %v2447
    %v2519 = vpop.f32.mrf.mxu0
    %v2520 = vadd.f32 %v2452, %v2519
    %v2521 = vpop.f32.mrf.mxu0
    %2522 = vmatprep.mubr.f32.mxu0 0.0
    %2523 = vmatmul.mubr.f32.gmra.mxu0 %v2448
    %v2524 = vpop.f32.mrf.mxu0
    %v2525 = vadd.f32 %v2452, %v2524
    %v2526 = vpop.f32.mrf.mxu0
    %2527 = vdwg.mxu0
    %v2528 = vadd.f32 %v2342, %v2520
    %v2529 = vadd.f32 %v2343, %v2525
    %v2530 = vsel %vm51, %v2528, 0.0
    %2531 = vadd.xlane.f32.xlu0 %v2530
    %v2532 = vpop.xlane.xlu0 %2531
    %v2533 = vsel %vm51, %v2529, 0.0
    %2534 = vadd.xlane.f32.xlu0 %v2533
    %v2535 = vpop.xlane.xlu0 %2534
    %v2536 = vmul.f32 %v2532, %v58
    %v2537 = vmul.f32 %v2535, %v58
    %v2538 = vsub.f32 %v2528, %v2536
    %v2539 = vsub.f32 %v2529, %v2537
    %v2540 = vmul.f32 %v2538, %v2538
    %v2541 = vmul.f32 %v2539, %v2539
    %v2542 = vsel %vm51, %v2540, 0.0
    %2543 = vadd.xlane.f32.xlu0 %v2542
    %v2544 = vpop.xlane.xlu0 %2543
    %v2545 = vsel %vm51, %v2541, 0.0
    %2546 = vadd.xlane.f32.xlu0 %v2545
    %v2547 = vpop.xlane.xlu0 %2546
    %v2548 = vmul.f32 %v2544, %v58
    %v2549 = vmul.f32 %v2547, %v58
    %v2550 = vadd.f32 %v2548, 1e-12
    %v2551 = vadd.f32 %v2549, 1e-12
    %v2552 = vrsqrt.pop %v2550
    %v2553 = vrsqrt.pop %v2551
    %v2554 = vmul.f32 %v2538, %v2552
    %v2555 = vmul.f32 %v2539, %v2553
    %v2556 = vlaneseq
    %v2557 = vshrl.u32 %v2556, 7
    %v2558 = vsub.s32 4, %v2557
    %v2559 = vrot.slane %v1382, %v2558
    %v2560 = vmul.f32 %v2554, %v2559
    %v2561 = vmul.f32 %v2555, %v2559
    %v2562 = vlaneseq
    %v2563 = vshrl.u32 %v2562, 7
    %v2564 = vsub.s32 5, %v2563
    %v2565 = vrot.slane %v1382, %v2564
    %v2566 = vadd.f32 %v2560, %v2565
    %v2567 = vadd.f32 %v2561, %v2565
    %v2568 = vld [vmem:[%s10] sm:$0xff]
    %v2569 = vld [vmem:[%s10 + $0x8] sm:$0xff]
    %v2570 = vld [vmem:[%s10 + $0x10] sm:$0xff]
    %v2571 = vld [vmem:[%s10 + $0x18] sm:$0xff]
    %v2572 = vld [vmem:[%s11] sm:$0x1]
    %v2574 = vlaneseq
    %v2575 = vshrl.u32 %v2574, 7
    %v2576 = vsub.s32 0, %v2575
    %v2577 = vrot.slane %v2572, %v2576
    %v2581 = vrot.slane %v2567, 7
    %vm2582 = vcmask 1041409
    %v2583 = vsel %vm2582, %v2581, %v2566
    %v2584 = vsel %vm51, %v2583, 0
    %2586 = vmatprep.subr.mxu0 0.0
    %2587 = vmatpush1.msra.mxu0 0.0
    %2588 = vmatprep.subr.mxu0 0.0
    %2589 = vmatpush1.msra.mxu0 0.0
    %2590 = vmatprep.subr.mxu0 0.0
    %2591 = vmatpush1.msra.mxu0 0.0
    %2592 = vmatprep.subr.mxu0 0.0
    %2593 = vmatpush1.msra.mxu0 0.0
    %2594 = vmatprep.subr.mxu0 0.0
    %2595 = vmatpush1.msra.mxu0 0.0
    %2596 = vmatprep.subr.mxu0 0.0
    %2597 = vmatpush1.msra.mxu0 0.0
    %2598 = vmatprep.subr.mxu0 0.0
    %2599 = vmatpush1.msra.mxu0 0.0
    %2600 = vmatprep.subr.mxu0 0.0
    %2601 = vmatpush1.msra.mxu0 0.0
    %2602 = vmatprep.subr.mxu0 0.0
    %2603 = vmatpush1.msra.mxu0 0.0
    %2604 = vmatprep.subr.mxu0 0.0
    %2605 = vmatpush1.msra.mxu0 0.0
    %2606 = vmatprep.subr.mxu0 0.0
    %2607 = vmatpush1.msra.mxu0 0.0
    %2608 = vmatprep.subr.mxu0 0.0
    %2609 = vmatpush1.msra.mxu0 0.0
    %2610 = vmatprep.subr.mxu0 0.0
    %2611 = vmatpush1.msra.mxu0 %v2571
    %2612 = vmatprep.subr.mxu0 0.0
    %2613 = vmatpush1.msra.mxu0 %v2570
    %2614 = vmatprep.subr.mxu0 0.0
    %2615 = vmatpush1.msra.mxu0 %v2569
    %2616 = vmatprep.subr.mxu0 0.0
    %2617 = vmatpush1.msra.mxu0 %v2568
    %2618 = vmatprep.subr.mxu0 0.0
    %2619 = vmatpush2.msra.mxu0 0.0
    %2620 = vmatprep.subr.mxu0 0.0
    %2621 = vmatpush2.msra.mxu0 0.0
    %2622 = vmatprep.subr.mxu0 0.0
    %2623 = vmatpush2.msra.mxu0 0.0
    %2624 = vmatprep.subr.mxu0 0.0
    %2625 = vmatpush2.msra.mxu0 0.0
    %2626 = vmatprep.subr.mxu0 0.0
    %2627 = vmatpush2.msra.mxu0 0.0
    %2628 = vmatprep.subr.mxu0 0.0
    %2629 = vmatpush2.msra.mxu0 0.0
    %2630 = vmatprep.subr.mxu0 0.0
    %2631 = vmatpush2.msra.mxu0 0.0
    %2632 = vmatprep.subr.mxu0 0.0
    %2633 = vmatpush2.msra.mxu0 0.0
    %2634 = vmatprep.subr.mxu0 0.0
    %2635 = vmatpush2.msra.mxu0 0.0
    %2636 = vmatprep.subr.mxu0 0.0
    %2637 = vmatpush2.msra.mxu0 0.0
    %2638 = vmatprep.subr.mxu0 0.0
    %2639 = vmatpush2.msra.mxu0 0.0
    %2640 = vmatprep.subr.mxu0 0.0
    %2641 = vmatpush2.msra.mxu0 0.0
    %2642 = vmatprep.subr.mxu0 0.0
    %2643 = vmatpush2.msra.mxu0 0.0
    %2644 = vmatprep.subr.mxu0 0.0
    %2645 = vmatpush2.msra.mxu0 0.0
    %2646 = vmatprep.subr.mxu0 0.0
    %2647 = vmatpush2.msra.mxu0 0.0
    %2648 = vmatprep.subr.mxu0 0.0
    %2649 = vmatpush2.msra.mxu0 0.0
    %2650 = vmatprep.mubr.f32.mxu0 0.0
    %2651 = vmatmul.mubr.f32.gmra.mxu0 %v2584
    %v2652 = vpop.f32.mrf.mxu0
    %v2653 = vadd.f32 %v2577, %v2652
    %v2654 = vpop.f32.mrf.mxu0
    %2655 = vdwg.mxu0
    %v2656 = vxor.u32 %v2653, 2147483648
    %v2657 = vmul.f32 %v2656, 1.442695
    %v2658 = vpow.pop %v2657
    %v2659 = vadd.f32 %v2658, 1.0
    %v2660 = vrcp.pop %v2659
    %v2661 = vmul.f32 1.0, %v2660
    %v2662 = vtanh.pop %v2653
    %2664 = vrot.lane.b32.xlu0 %v2662, 96
    %v2665 = vpop.permute.xlu0 %2664
    %v2667 = vmul.f32 %v2661, %v2665
    %v2668 = vtanh.pop %v2667
    %2670 = vrot.lane.b32.xlu0 %v2668, 48
    %v2671 = vpop.permute.xlu0 %2670
    %v2673 = vmul.f32 %v2661, %v2671
    %v2674 = vld [vmem:[%s12] sm:$0xff]
    %v2675 = vld [vmem:[%s12 + $0x8] sm:$0xff]
    %v2676 = vld [vmem:[%s12 + $0x10] sm:$0xff]
    %v2677 = vld [vmem:[%s12 + $0x18] sm:$0xff]
    %2679 = vrot.lane.b32.xlu0 %v2673, 16
    %v2680 = vpop.permute.xlu0 %2679
    %v2681 = vsel %vm238, %v2680, 0
    %2683 = vmatprep.subr.mxu0 0.0
    %2684 = vmatpush1.msra.mxu0 0.0
    %2685 = vmatprep.subr.mxu0 0.0
    %2686 = vmatpush1.msra.mxu0 0.0
    %2687 = vmatprep.subr.mxu0 0.0
    %2688 = vmatpush1.msra.mxu0 0.0
    %2689 = vmatprep.subr.mxu0 0.0
    %2690 = vmatpush1.msra.mxu0 0.0
    %2691 = vmatprep.subr.mxu0 0.0
    %2692 = vmatpush1.msra.mxu0 0.0
    %2693 = vmatprep.subr.mxu0 0.0
    %2694 = vmatpush1.msra.mxu0 0.0
    %2695 = vmatprep.subr.mxu0 0.0
    %2696 = vmatpush1.msra.mxu0 0.0
    %2697 = vmatprep.subr.mxu0 0.0
    %2698 = vmatpush1.msra.mxu0 0.0
    %2699 = vmatprep.subr.mxu0 0.0
    %2700 = vmatpush1.msra.mxu0 0.0
    %2701 = vmatprep.subr.mxu0 0.0
    %2702 = vmatpush1.msra.mxu0 0.0
    %2703 = vmatprep.subr.mxu0 0.0
    %2704 = vmatpush1.msra.mxu0 0.0
    %2705 = vmatprep.subr.mxu0 0.0
    %2706 = vmatpush1.msra.mxu0 0.0
    %2707 = vmatprep.subr.mxu0 0.0
    %2708 = vmatpush1.msra.mxu0 0.0
    %2709 = vmatprep.subr.mxu0 0.0
    %2710 = vmatpush1.msra.mxu0 0.0
    %2711 = vmatprep.subr.mxu0 0.0
    %2712 = vmatpush1.msra.mxu0 %v2677
    %2713 = vmatprep.subr.mxu0 0.0
    %2714 = vmatpush1.msra.mxu0 %v2676
    %2715 = vmatprep.subr.mxu0 0.0
    %2716 = vmatpush2.msra.mxu0 0.0
    %2717 = vmatprep.subr.mxu0 0.0
    %2718 = vmatpush2.msra.mxu0 0.0
    %2719 = vmatprep.subr.mxu0 0.0
    %2720 = vmatpush2.msra.mxu0 0.0
    %2721 = vmatprep.subr.mxu0 0.0
    %2722 = vmatpush2.msra.mxu0 0.0
    %2723 = vmatprep.subr.mxu0 0.0
    %2724 = vmatpush2.msra.mxu0 0.0
    %2725 = vmatprep.subr.mxu0 0.0
    %2726 = vmatpush2.msra.mxu0 0.0
    %2727 = vmatprep.subr.mxu0 0.0
    %2728 = vmatpush2.msra.mxu0 0.0
    %2729 = vmatprep.subr.mxu0 0.0
    %2730 = vmatpush2.msra.mxu0 0.0
    %2731 = vmatprep.subr.mxu0 0.0
    %2732 = vmatpush2.msra.mxu0 0.0
    %2733 = vmatprep.subr.mxu0 0.0
    %2734 = vmatpush2.msra.mxu0 0.0
    %2735 = vmatprep.subr.mxu0 0.0
    %2736 = vmatpush2.msra.mxu0 0.0
    %2737 = vmatprep.subr.mxu0 0.0
    %2738 = vmatpush2.msra.mxu0 0.0
    %2739 = vmatprep.subr.mxu0 0.0
    %2740 = vmatpush2.msra.mxu0 0.0
    %2741 = vmatprep.subr.mxu0 0.0
    %2742 = vmatpush2.msra.mxu0 0.0
    %2743 = vmatprep.subr.mxu0 0.0
    %2744 = vmatpush2.msra.mxu0 0.0
    %2745 = vmatprep.subr.mxu0 0.0
    %2746 = vmatpush2.msra.mxu0 0.0
    %2747 = vmatprep.mubr.f32.mxu0 0.0
    %2748 = vmatmul.mubr.f32.gmra.mxu0 %v2681
    %v2749 = vpop.f32.mrf.mxu0
    %v2750 = vadd.f32 0.0, %v2749
    %v2751 = vpop.f32.mrf.mxu0
    %2752 = vdwg.mxu0
    %2753 = vrot.lane.b32.xlu0 %v2673, 80
    %v2754 = vpop.permute.xlu0 %2753
    %v2755 = vsel %vm238, %v2754, 0
    %2757 = vmatprep.subr.mxu0 0.0
    %2758 = vmatpush1.msra.mxu0 0.0
    %2759 = vmatprep.subr.mxu0 0.0
    %2760 = vmatpush1.msra.mxu0 0.0
    %2761 = vmatprep.subr.mxu0 0.0
    %2762 = vmatpush1.msra.mxu0 0.0
    %2763 = vmatprep.subr.mxu0 0.0
    %2764 = vmatpush1.msra.mxu0 0.0
    %2765 = vmatprep.subr.mxu0 0.0
    %2766 = vmatpush1.msra.mxu0 0.0
    %2767 = vmatprep.subr.mxu0 0.0
    %2768 = vmatpush1.msra.mxu0 0.0
    %2769 = vmatprep.subr.mxu0 0.0
    %2770 = vmatpush1.msra.mxu0 0.0
    %2771 = vmatprep.subr.mxu0 0.0
    %2772 = vmatpush1.msra.mxu0 0.0
    %2773 = vmatprep.subr.mxu0 0.0
    %2774 = vmatpush1.msra.mxu0 0.0
    %2775 = vmatprep.subr.mxu0 0.0
    %2776 = vmatpush1.msra.mxu0 0.0
    %2777 = vmatprep.subr.mxu0 0.0
    %2778 = vmatpush1.msra.mxu0 0.0
    %2779 = vmatprep.subr.mxu0 0.0
    %2780 = vmatpush1.msra.mxu0 0.0
    %2781 = vmatprep.subr.mxu0 0.0
    %2782 = vmatpush1.msra.mxu0 0.0
    %2783 = vmatprep.subr.mxu0 0.0
    %2784 = vmatpush1.msra.mxu0 0.0
    %2785 = vmatprep.subr.mxu0 0.0
    %2786 = vmatpush1.msra.mxu0 %v2675
    %2787 = vmatprep.subr.mxu0 0.0
    %2788 = vmatpush1.msra.mxu0 %v2674
    %2789 = vmatprep.subr.mxu0 0.0
    %2790 = vmatpush2.msra.mxu0 0.0
    %2791 = vmatprep.subr.mxu0 0.0
    %2792 = vmatpush2.msra.mxu0 0.0
    %2793 = vmatprep.subr.mxu0 0.0
    %2794 = vmatpush2.msra.mxu0 0.0
    %2795 = vmatprep.subr.mxu0 0.0
    %2796 = vmatpush2.msra.mxu0 0.0
    %2797 = vmatprep.subr.mxu0 0.0
    %2798 = vmatpush2.msra.mxu0 0.0
    %2799 = vmatprep.subr.mxu0 0.0
    %2800 = vmatpush2.msra.mxu0 0.0
    %2801 = vmatprep.subr.mxu0 0.0
    %2802 = vmatpush2.msra.mxu0 0.0
    %2803 = vmatprep.subr.mxu0 0.0
    %2804 = vmatpush2.msra.mxu0 0.0
    %2805 = vmatprep.subr.mxu0 0.0
    %2806 = vmatpush2.msra.mxu0 0.0
    %2807 = vmatprep.subr.mxu0 0.0
    %2808 = vmatpush2.msra.mxu0 0.0
    %2809 = vmatprep.subr.mxu0 0.0
    %2810 = vmatpush2.msra.mxu0 0.0
    %2811 = vmatprep.subr.mxu0 0.0
    %2812 = vmatpush2.msra.mxu0 0.0
    %2813 = vmatprep.subr.mxu0 0.0
    %2814 = vmatpush2.msra.mxu0 0.0
    %2815 = vmatprep.subr.mxu0 0.0
    %2816 = vmatpush2.msra.mxu0 0.0
    %2817 = vmatprep.subr.mxu0 0.0
    %2818 = vmatpush2.msra.mxu0 0.0
    %2819 = vmatprep.subr.mxu0 0.0
    %2820 = vmatpush2.msra.mxu0 0.0
    %2821 = vmatprep.mubr.f32.mxu0 0.0
    %2822 = vmatmul.mubr.f32.gmra.mxu0 %v2755
    %v2823 = vpop.f32.mrf.mxu0
    %v2824 = vadd.f32 %v2750, %v2823
    %v2825 = vpop.f32.mrf.mxu0
    %2826 = vdwg.mxu0
    %v2827 = vld [vmem:[%s13] sm:$0x1]
    %v2829 = vlaneseq
    %v2830 = vshrl.u32 %v2829, 7
    %v2831 = vsub.s32 0, %v2830
    %v2832 = vrot.slane %v2827, %v2831
    %v2834 = vadd.f32 %v2824, %v2832
    %2835 = vst [vmem:[#allocation2] sm:$0x3] %v2834
    // Predicated region
    $region58: #{tpu_custom_call.1} parent=1 // pred_check
      _
    $region59: #{tpu_custom_call.1} parent=1 // pred_check_branch
      %2837 = sbr.rel (0) target = $region61
    $region60: #{tpu_custom_call.1} parent=1 // pred_region
      %s2839 = ssub.s32 32, 32
      %2840 = vsyncadd [#allocation3], %s2839
      %s2842 = sshll.u32 [#allocation2], 4
      %s2843 = int_to_ptr.vmem [resolvable:$true] %s2842
      %2845 = dma.vmem_to_hbm [thread:$0]  %s2843, 32, %s14, [#allocation3]
    $region61: #{tpu_custom_call.1} parent=1 // pred_fallthru
      _
    // Predicated region
    $region62: #{tpu_custom_call.1} parent=1 // pred_check
      _
    $region63: #{tpu_custom_call.1} parent=1 // pred_check_branch
      %2847 = sbr.rel (0) target = $region65
    $region64: #{tpu_custom_call.1} parent=1 // pred_region
      %2848 = dma.done [#allocation3], 32
    $region65: #{tpu_custom_call.1} parent=1 // pred_fallthru
      _
    %2849 = vsyncpa [#allocation3], 1

</llo_original>
